<compile_context>
chip_gen: v7x
topology: tpu7x:2x2x1
jax: 0.10.0
libtpu: 0.0.40
codegen_flags: <defaults>
</compile_context>

<pallas_src>
import functools

import jax
import jax.numpy as jnp
from jax.experimental import pallas as pl
from jax.experimental.pallas import tpu as pltpu


def decoder_lstm_block_kernel(x_ref, lens_ref, wx_ref, whh_ref, b_ref,
                              wout_ref, bout_ref, o_ref,
                              h_sc, c_sc, hs_sc,
                              *, hidden_dim, time_block, mxu_dtype):
    """One grid step == one (batch block, time block). Carry (h, c) in VMEM."""
    H = hidden_dim
    TB = time_block
    NB = h_sc.shape[0]
    tb = pl.program_id(1)

    # Fresh recurrence at the start of every batch block (time is the inner,
    # "arbitrary" grid axis; batch blocks are independent -> "parallel").
    @pl.when(tb == 0)
    def _():
        h_sc[...] = jnp.zeros_like(h_sc)
        c_sc[...] = jnp.zeros_like(c_sc)

    # ---- Phase 1: input projection for the whole time block ---------------
    # One MXU-shaped matmul (NB*TB, D) @ (D, 4H), off the serial path; bias is
    # added once per block (not once per step).
    x_blk = x_ref[...]                                           # (NB, TB, D)
    D = x_blk.shape[-1]
    gx = jnp.dot(x_blk.reshape(NB * TB, D), wx_ref[...],
                 preferred_element_type=jnp.float32)
    gx = (gx + b_ref[...]).reshape(NB, TB, 4 * H)                # (NB, TB, 4H) f32

    # ---- Phase 2: recurrence, fully unrolled over the time block ----------
    # Only the fused 4H-wide h @ W_hh^T matmul sits on the serial dependency
    # chain. TB is small and static, so all slices below are static.
    whh = whh_ref[...]                                           # (H, 4H)
    h = h_sc[...]                                                # (NB, H) f32
    c = c_sc[...]                                                # (NB, H) f32
    for t in range(TB):
        g = gx[:, t, :] + jnp.dot(h.astype(mxu_dtype), whh,
                                  preferred_element_type=jnp.float32)  # (NB, 4H)
        i_g = jax.nn.sigmoid(g[:, 0 * H:1 * H])                  # PyTorch gate order
        f_g = jax.nn.sigmoid(g[:, 1 * H:2 * H])
        g_g = jnp.tanh(g[:, 2 * H:3 * H])
        o_g = jax.nn.sigmoid(g[:, 3 * H:4 * H])
        c = f_g * c + i_g * g_g
        h = o_g * jnp.tanh(c)
        hs_sc[:, t:t + 1, :] = h[:, None, :]                     # save block outputs
    h_sc[...] = h
    c_sc[...] = c

    # ---- Phase 3: length mask + vocab projection + log_softmax ------------
    # pad_packed_sequence semantics (zero output for t >= length), then one
    # lane-dense (NB*TB, H) @ (H, V) matmul and a batched log_softmax.
    t0 = tb * TB
    tpos = jax.lax.broadcasted_iota(jnp.int32, (NB, TB, H), 1) + t0
    valid = tpos < lens_ref[...][:, :, None]                     # (NB, TB, H) bool
    hs = jnp.where(valid, hs_sc[...], 0.0)                       # (NB, TB, H) f32

    V = bout_ref.shape[-1]
    logits = (jnp.dot(hs.reshape(NB * TB, H).astype(mxu_dtype), wout_ref[...],
                      preferred_element_type=jnp.float32)
              + bout_ref[...])                                   # (NB*TB, V) f32
    m = jnp.max(logits, axis=-1, keepdims=True)
    s = logits - m
    lp = s - jnp.log(jnp.sum(jnp.exp(s), axis=-1, keepdims=True))
    o_ref[...] = lp.reshape(NB, TB, V).astype(o_ref.dtype)


def _round_up(x, m):
    return ((x + m - 1) // m) * m


def decoder_v1_forward(params, x1, x2, x2_lens, *,
                       time_block=8, batch_block=8, mxu_dtype=jnp.float32):
    """
    params: dict with 'emb' (V,E), 'w_ih' (4H,D), 'w_hh' (4H,H), 'b_ih' (4H,),
            'b_hh' (4H,), 'w_out' (V,H), 'b_out' (V,)
    x1: (N, I) float32   -- encoder image representation
    x2: (N, T) int32     -- current program token ids
    x2_lens: (N,) int32  -- program lengths
    returns: (N, T, V) float32 log-probs (batch-first, like PyTorch)
    mxu_dtype: pass jnp.bfloat16 on v6e/v7x for bf16 MXU feeds (f32 accumulation,
               f32 carries / nonlinearities are kept regardless -> v5e safe).
    """
    N, T = x2.shape
    I = x1.shape[1]
    V, E = params["emb"].shape
    H = params["w_hh"].shape[1]
    D = I + E

    # Sublane-friendly block sizes (multiples of 8 for f32).
    NB = _round_up(max(batch_block, 8), 8)
    TB = _round_up(max(time_block, 8), 8)
    N_pad = _round_up(N, NB)
    T_pad = _round_up(T, TB)

    # ---- plain-JAX glue: pad, embedding gather, broadcast + concat (kept
    #      batch-first; no transposes -> no extra HBM round trips).
    # TODO(synk): nn.Embedding gather stays outside the kernel; a blocked
    #             Pallas gather is not worthwhile at these vocab/embed sizes.
    if N_pad != N:
        x1 = jnp.pad(x1, ((0, N_pad - N), (0, 0)))
        x2 = jnp.pad(x2, ((0, N_pad - N), (0, 0)))
        x2_lens = jnp.pad(x2_lens, (0, N_pad - N))
    if T_pad != T:
        x2 = jnp.pad(x2, ((0, 0), (0, T_pad - T)))

    emb = params["emb"][x2]                                       # (N_pad, T_pad, E)
    x1e = jnp.broadcast_to(x1[:, None, :], (N_pad, T_pad, I))
    x_cat = jnp.concatenate([x1e, emb], axis=2).astype(mxu_dtype)  # (N_pad, T_pad, D)
    lens2d = x2_lens.astype(jnp.int32).reshape(N_pad, 1)

    # Pre-transposed weights, MXU operands in mxu_dtype, biases stay f32
    # (added to the f32 accumulators).
    w_ih_t = params["w_ih"].T.astype(mxu_dtype)                   # (D, 4H)
    w_hh_t = params["w_hh"].T.astype(mxu_dtype)                   # (H, 4H)
    b_comb = (params["b_ih"] + params["b_hh"]).reshape(1, 4 * H).astype(jnp.float32)
    w_out_t = params["w_out"].T.astype(mxu_dtype)                 # (H, V)
    b_out = params["b_out"].reshape(1, V).astype(jnp.float32)

    kernel = functools.partial(decoder_lstm_block_kernel, hidden_dim=H,
                               time_block=TB, mxu_dtype=mxu_dtype)

    # NOTE (v7x, large vocab): W_out^T is kept resident here; for H,V large
    # enough to stress 64 MiB VMEM, tile V with an extra grid axis and/or use
    # pipeline_mode=pl.Buffered(1) on the constant-index weight specs.
    out = pl.pallas_call(
        kernel,
        out_shape=jax.ShapeDtypeStruct((N_pad, T_pad, V), jnp.float32),
        grid_spec=pltpu.PrefetchScalarGridSpec(
            num_scalar_prefetch=0,
            grid=(N_pad // NB, T_pad // TB),       # batch blocks x time blocks
            in_specs=[
                pl.BlockSpec((NB, TB, D), lambda nb, tb: (nb, tb, 0)),   # x_cat
                pl.BlockSpec((NB, 1), lambda nb, tb: (nb, 0)),           # lengths
                pl.BlockSpec((D, 4 * H), lambda nb, tb: (0, 0)),         # W_ih^T
                pl.BlockSpec((H, 4 * H), lambda nb, tb: (0, 0)),         # W_hh^T
                pl.BlockSpec((1, 4 * H), lambda nb, tb: (0, 0)),         # b_ih+b_hh
                pl.BlockSpec((H, V), lambda nb, tb: (0, 0)),             # W_out^T
                pl.BlockSpec((1, V), lambda nb, tb: (0, 0)),             # b_out
            ],
            out_specs=pl.BlockSpec((NB, TB, V), lambda nb, tb: (nb, tb, 0)),
            scratch_shapes=[
                pltpu.VMEM((NB, H), jnp.float32),       # h carry
                pltpu.VMEM((NB, H), jnp.float32),       # c carry
                pltpu.VMEM((NB, TB, H), jnp.float32),   # h sequence of the block
            ],
        ),
        compiler_params=pltpu.CompilerParams(
            dimension_semantics=("parallel", "arbitrary")),
    )(x_cat, lens2d, w_ih_t, w_hh_t, b_comb, w_out_t, b_out)

    return out[:N, :T]


def decoder_v1_reference(params, x1, x2, x2_lens):
    """Pure-JAX reference of the PyTorch forward (for correctness checks)."""
    P = jax.lax.Precision.HIGHEST
    N, T = x2.shape
    H = params["w_hh"].shape[1]
    emb = params["emb"][x2]
    x1e = jnp.broadcast_to(x1[:, None, :], (N, T, x1.shape[1]))
    x_cat = jnp.concatenate([x1e, emb], axis=2)
    w_ih, w_hh = params["w_ih"], params["w_hh"]
    b = params["b_ih"] + params["b_hh"]

    def step(carry, x_t):
        h, c = carry
        g = (jnp.dot(x_t, w_ih.T, precision=P)
             + jnp.dot(h, w_hh.T, precision=P) + b)
        i = jax.nn.sigmoid(g[:, :H])
        f = jax.nn.sigmoid(g[:, H:2 * H])
        gg = jnp.tanh(g[:, 2 * H:3 * H])
        o = jax.nn.sigmoid(g[:, 3 * H:])
        c = f * c + i * gg
        h = o * jnp.tanh(c)
        return (h, c), h

    h0 = jnp.zeros((N, H), jnp.float32)
    (_, _), hs = jax.lax.scan(step, (h0, h0), jnp.transpose(x_cat, (1, 0, 2)))
    hs = jnp.transpose(hs, (1, 0, 2))                          # (N, T, H)
    mask = (jnp.arange(T)[None, :] < x2_lens[:, None])[:, :, None]
    hs = jnp.where(mask, hs, 0.0)
    logits = jnp.dot(hs, params["w_out"].T, precision=P) + params["b_out"]
    return jax.nn.log_softmax(logits, axis=-1)


def init_params(key, vocab_size, img_repr_size, embedding_dim, hidden_dim,
                padding_idx=0):
    D = img_repr_size + embedding_dim
    ks = jax.random.split(key, 7)
    scale = 0.1
    emb = scale * jax.random.normal(ks[0], (vocab_size, embedding_dim), jnp.float32)
    emb = emb.at[padding_idx].set(0.0)            # nn.Embedding padding_idx
    params = {
        "emb": emb,
        "w_ih": scale * jax.random.normal(ks[1], (4 * hidden_dim, D), jnp.float32),
        "w_hh": scale * jax.random.normal(ks[2], (4 * hidden_dim, hidden_dim), jnp.float32),
        "b_ih": scale * jax.random.normal(ks[3], (4 * hidden_dim,), jnp.float32),
        "b_hh": scale * jax.random.normal(ks[4], (4 * hidden_dim,), jnp.float32),
        "w_out": scale * jax.random.normal(ks[5], (vocab_size, hidden_dim), jnp.float32),
        "b_out": scale * jax.random.normal(ks[6], (vocab_size,), jnp.float32),
    }
    return params


if __name__ == "__main__":
    # Small, forward-consistent shapes
    N = 2            # batch
    T = 8            # sequence length
    IMG_REPR = 16    # img_repr_size
    EMB = 16         # dsl_embedding_dim
    HID = 32         # dsl_hidden_dim
    VOCAB = 16       # len(dsl_vocab)

    key = jax.random.PRNGKey(0)
    k_p, k_x1, k_x2 = jax.random.split(key, 3)

    params = init_params(k_p, VOCAB, IMG_REPR, EMB, HID, padding_idx=0)

    x1 = jax.random.normal(k_x1, (N, IMG_REPR), jnp.float32)
    x2 = jax.random.randint(k_x2, (N, T), 0, VOCAB, dtype=jnp.int32)
    x2_lens = jnp.array([T, 5], dtype=jnp.int32)

    out = decoder_v1_forward(params, x1, x2, x2_lens)
    out = jax.block_until_ready(out)

    assert out.shape == (N, T, VOCAB)
    # rows are valid log-probs
    assert bool(jnp.allclose(jnp.sum(jnp.exp(out), axis=-1), 1.0, atol=1e-4))
    # padding behaviour: rows past the length equal log_softmax(b_out)
    pad_row = jax.nn.log_softmax(params["b_out"])
    assert bool(jnp.allclose(out[1, 5:], jnp.broadcast_to(pad_row, (T - 5, VOCAB)),
                             atol=1e-2))
    # full check against a pure-JAX reference of the PyTorch forward
    ref = decoder_v1_reference(params, x1, x2, x2_lens)
    assert bool(jnp.allclose(out, ref, atol=1e-2, rtol=1e-2))

    print("KERNEL_OK")
</pallas_src>

<mosaic_0001>
module attributes {stable_mosaic.version = 11 : i64} {
  func.func @decoder_lstm_block_kernel(%arg0: i32, %arg1: i32, %arg2: memref<8x8x32xf32, #tpu.memory_space<vmem>>, %arg3: memref<8x1xi32, #tpu.memory_space<vmem>>, %arg4: memref<32x128xf32, #tpu.memory_space<vmem>>, %arg5: memref<32x128xf32, #tpu.memory_space<vmem>>, %arg6: memref<1x128xf32, #tpu.memory_space<vmem>>, %arg7: memref<32x16xf32, #tpu.memory_space<vmem>>, %arg8: memref<1x16xf32, #tpu.memory_space<vmem>>, %arg9: memref<8x8x16xf32, #tpu.memory_space<vmem>>, %arg10: memref<8x32xf32, #tpu.memory_space<vmem>>, %arg11: memref<8x32xf32, #tpu.memory_space<vmem>>, %arg12: memref<8x8x32xf32, #tpu.memory_space<vmem>>) attributes {dimension_semantics = [#tpu.dimension_semantics<parallel>, #tpu.dimension_semantics<arbitrary>], iteration_bounds = array<i64: 1, 1>, scalar_prefetch = 0 : i64, scratch_operands = 3 : i64, tpu.core_type = #tpu.core_type<tc>, window_params = [{transform_indices = @transform_0, window_bounds = array<i64: 8, 8, 32>}, {transform_indices = @transform_1, window_bounds = array<i64: 8, 1>}, {pipeline_mode = #tpu.pipeline_mode<synchronous>, transform_indices = @transform_2, window_bounds = array<i64: 32, 128>}, {pipeline_mode = #tpu.pipeline_mode<synchronous>, transform_indices = @transform_3, window_bounds = array<i64: 32, 128>}, {pipeline_mode = #tpu.pipeline_mode<synchronous>, transform_indices = @transform_4, window_bounds = array<i64: 1, 128>}, {pipeline_mode = #tpu.pipeline_mode<synchronous>, transform_indices = @transform_5, window_bounds = array<i64: 32, 16>}, {pipeline_mode = #tpu.pipeline_mode<synchronous>, transform_indices = @transform_6, window_bounds = array<i64: 1, 16>}, {transform_indices = @transform_7, window_bounds = array<i64: 8, 8, 16>}]} {
    %c0_i32 = arith.constant 0 : i32
    %0 = arith.cmpi eq, %arg1, %c0_i32 : i32
    %1 = arith.extui %0 : i1 to i32
    %c0_i32_0 = arith.constant 0 : i32
    %2 = arith.cmpi ne, %1, %c0_i32_0 : i32
    scf.if %2 {
      %cst_82 = arith.constant 0.000000e+00 : f32
      %293 = vector.broadcast %cst_82 : f32 to vector<8x32xf32>
      %c0_83 = arith.constant 0 : index
      %c0_84 = arith.constant 0 : index
      %294 = vector.load %arg10[%c0_83, %c0_84] : memref<8x32xf32, #tpu.memory_space<vmem>>, vector<8x32xf32>
      tpu.vector_store %arg10[%c0_83, %c0_84], %293 {strides = array<i32>} : memref<8x32xf32, #tpu.memory_space<vmem>>, vector<8x32xf32>,
      %cst_85 = arith.constant 0.000000e+00 : f32
      %295 = vector.broadcast %cst_85 : f32 to vector<8x32xf32>
      %c0_86 = arith.constant 0 : index
      %c0_87 = arith.constant 0 : index
      %296 = vector.load %arg11[%c0_86, %c0_87] : memref<8x32xf32, #tpu.memory_space<vmem>>, vector<8x32xf32>
      tpu.vector_store %arg11[%c0_86, %c0_87], %295 {strides = array<i32>} : memref<8x32xf32, #tpu.memory_space<vmem>>, vector<8x32xf32>,
    } else {
    }
    %c0 = arith.constant 0 : index
    %c0_1 = arith.constant 0 : index
    %c0_2 = arith.constant 0 : index
    %3 = vector.load %arg2[%c0, %c0_1, %c0_2] : memref<8x8x32xf32, #tpu.memory_space<vmem>>, vector<8x8x32xf32>
    %4 = vector.shape_cast %3 : vector<8x8x32xf32> to vector<64x32xf32>
    %c0_3 = arith.constant 0 : index
    %c0_4 = arith.constant 0 : index
    %5 = vector.load %arg4[%c0_3, %c0_4] : memref<32x128xf32, #tpu.memory_space<vmem>>, vector<32x128xf32>
    %cst = arith.constant dense<0.000000e+00> : vector<64x128xf32>
    %6 = tpu.matmul %4, %5, %cst {dimension_numbers = #tpu.dot_dimension_numbers<[1], [0], [0], [1], [0, 0, 1, 1], [], []>} : vector<64x32xf32>, vector<32x128xf32>, vector<64x128xf32> -> vector<64x128xf32>
    %c0_5 = arith.constant 0 : index
    %c0_6 = arith.constant 0 : index
    %7 = vector.load %arg6[%c0_5, %c0_6] : memref<1x128xf32, #tpu.memory_space<vmem>>, vector<1x128xf32>
    %8 = vector.broadcast %7 : vector<1x128xf32> to vector<64x128xf32>
    %9 = arith.addf %6, %8 : vector<64x128xf32>
    %10 = vector.shape_cast %9 : vector<64x128xf32> to vector<8x8x128xf32>
    %c0_7 = arith.constant 0 : index
    %c0_8 = arith.constant 0 : index
    %11 = vector.load %arg5[%c0_7, %c0_8] : memref<32x128xf32, #tpu.memory_space<vmem>>, vector<32x128xf32>
    %c0_9 = arith.constant 0 : index
    %c0_10 = arith.constant 0 : index
    %12 = vector.load %arg10[%c0_9, %c0_10] : memref<8x32xf32, #tpu.memory_space<vmem>>, vector<8x32xf32>
    %c0_11 = arith.constant 0 : index
    %c0_12 = arith.constant 0 : index
    %13 = vector.load %arg11[%c0_11, %c0_12] : memref<8x32xf32, #tpu.memory_space<vmem>>, vector<8x32xf32>
    %14 = vector.extract_strided_slice %10 {offsets = [0, 0, 0], sizes = [8, 1, 128], strides = [1, 1, 1]} : vector<8x8x128xf32> to vector<8x1x128xf32>
    %15 = vector.shape_cast %14 : vector<8x1x128xf32> to vector<8x128xf32>
    %cst_13 = arith.constant dense<0.000000e+00> : vector<8x128xf32>
    %16 = tpu.matmul %12, %11, %cst_13 {dimension_numbers = #tpu.dot_dimension_numbers<[1], [0], [0], [1], [0, 0, 1, 1], [], []>} : vector<8x32xf32>, vector<32x128xf32>, vector<8x128xf32> -> vector<8x128xf32>
    %17 = arith.addf %15, %16 : vector<8x128xf32>
    %18 = vector.extract_strided_slice %17 {offsets = [0, 0], sizes = [8, 32], strides = [1, 1]} : vector<8x128xf32> to vector<8x32xf32>
    %19 = arith.negf %18 : vector<8x32xf32>
    %20 = math.exp %19 : vector<8x32xf32>
    %cst_14 = arith.constant 1.000000e+00 : f32
    %21 = vector.broadcast %cst_14 : f32 to vector<8x32xf32>
    %22 = arith.addf %21, %20 : vector<8x32xf32>
    %23 = arith.divf %21, %22 : vector<8x32xf32>
    %24 = vector.extract_strided_slice %17 {offsets = [0, 32], sizes = [8, 32], strides = [1, 1]} : vector<8x128xf32> to vector<8x32xf32>
    %25 = arith.negf %24 : vector<8x32xf32>
    %26 = math.exp %25 : vector<8x32xf32>
    %cst_15 = arith.constant 1.000000e+00 : f32
    %27 = vector.broadcast %cst_15 : f32 to vector<8x32xf32>
    %28 = arith.addf %27, %26 : vector<8x32xf32>
    %29 = arith.divf %27, %28 : vector<8x32xf32>
    %30 = vector.extract_strided_slice %17 {offsets = [0, 64], sizes = [8, 32], strides = [1, 1]} : vector<8x128xf32> to vector<8x32xf32>
    %31 = math.tanh %30 : vector<8x32xf32>
    %32 = vector.extract_strided_slice %17 {offsets = [0, 96], sizes = [8, 32], strides = [1, 1]} : vector<8x128xf32> to vector<8x32xf32>
    %33 = arith.negf %32 : vector<8x32xf32>
    %34 = math.exp %33 : vector<8x32xf32>
    %cst_16 = arith.constant 1.000000e+00 : f32
    %35 = vector.broadcast %cst_16 : f32 to vector<8x32xf32>
    %36 = arith.addf %35, %34 : vector<8x32xf32>
    %37 = arith.divf %35, %36 : vector<8x32xf32>
    %38 = arith.mulf %29, %13 : vector<8x32xf32>
    %39 = arith.mulf %23, %31 : vector<8x32xf32>
    %40 = arith.addf %38, %39 : vector<8x32xf32>
    %41 = math.tanh %40 : vector<8x32xf32>
    %42 = arith.mulf %37, %41 : vector<8x32xf32>
    %43 = vector.shape_cast %42 : vector<8x32xf32> to vector<8x1x32xf32>
    %c0_17 = arith.constant 0 : index
    %c0_18 = arith.constant 0 : index
    %c0_19 = arith.constant 0 : index
    %44 = vector.load %arg12[%c0_17, %c0_18, %c0_19] : memref<8x8x32xf32, #tpu.memory_space<vmem>>, vector<8x1x32xf32>
    tpu.vector_store %arg12[%c0_17, %c0_18, %c0_19], %43 {strides = array<i32>} : memref<8x8x32xf32, #tpu.memory_space<vmem>>, vector<8x1x32xf32>,
    %45 = vector.extract_strided_slice %10 {offsets = [0, 1, 0], sizes = [8, 1, 128], strides = [1, 1, 1]} : vector<8x8x128xf32> to vector<8x1x128xf32>
    %46 = vector.shape_cast %45 : vector<8x1x128xf32> to vector<8x128xf32>
    %cst_20 = arith.constant dense<0.000000e+00> : vector<8x128xf32>
    %47 = tpu.matmul %42, %11, %cst_20 {dimension_numbers = #tpu.dot_dimension_numbers<[1], [0], [0], [1], [0, 0, 1, 1], [], []>} : vector<8x32xf32>, vector<32x128xf32>, vector<8x128xf32> -> vector<8x128xf32>
    %48 = arith.addf %46, %47 : vector<8x128xf32>
    %49 = vector.extract_strided_slice %48 {offsets = [0, 0], sizes = [8, 32], strides = [1, 1]} : vector<8x128xf32> to vector<8x32xf32>
    %50 = arith.negf %49 : vector<8x32xf32>
    %51 = math.exp %50 : vector<8x32xf32>
    %cst_21 = arith.constant 1.000000e+00 : f32
    %52 = vector.broadcast %cst_21 : f32 to vector<8x32xf32>
    %53 = arith.addf %52, %51 : vector<8x32xf32>
    %54 = arith.divf %52, %53 : vector<8x32xf32>
    %55 = vector.extract_strided_slice %48 {offsets = [0, 32], sizes = [8, 32], strides = [1, 1]} : vector<8x128xf32> to vector<8x32xf32>
    %56 = arith.negf %55 : vector<8x32xf32>
    %57 = math.exp %56 : vector<8x32xf32>
    %cst_22 = arith.constant 1.000000e+00 : f32
    %58 = vector.broadcast %cst_22 : f32 to vector<8x32xf32>
    %59 = arith.addf %58, %57 : vector<8x32xf32>
    %60 = arith.divf %58, %59 : vector<8x32xf32>
    %61 = vector.extract_strided_slice %48 {offsets = [0, 64], sizes = [8, 32], strides = [1, 1]} : vector<8x128xf32> to vector<8x32xf32>
    %62 = math.tanh %61 : vector<8x32xf32>
    %63 = vector.extract_strided_slice %48 {offsets = [0, 96], sizes = [8, 32], strides = [1, 1]} : vector<8x128xf32> to vector<8x32xf32>
    %64 = arith.negf %63 : vector<8x32xf32>
    %65 = math.exp %64 : vector<8x32xf32>
    %cst_23 = arith.constant 1.000000e+00 : f32
    %66 = vector.broadcast %cst_23 : f32 to vector<8x32xf32>
    %67 = arith.addf %66, %65 : vector<8x32xf32>
    %68 = arith.divf %66, %67 : vector<8x32xf32>
    %69 = arith.mulf %60, %40 : vector<8x32xf32>
    %70 = arith.mulf %54, %62 : vector<8x32xf32>
    %71 = arith.addf %69, %70 : vector<8x32xf32>
    %72 = math.tanh %71 : vector<8x32xf32>
    %73 = arith.mulf %68, %72 : vector<8x32xf32>
    %74 = vector.shape_cast %73 : vector<8x32xf32> to vector<8x1x32xf32>
    %c0_24 = arith.constant 0 : index
    %c1 = arith.constant 1 : index
    %c0_25 = arith.constant 0 : index
    %75 = vector.load %arg12[%c0_24, %c1, %c0_25] : memref<8x8x32xf32, #tpu.memory_space<vmem>>, vector<8x1x32xf32>
    tpu.vector_store %arg12[%c0_24, %c1, %c0_25], %74 {strides = array<i32>} : memref<8x8x32xf32, #tpu.memory_space<vmem>>, vector<8x1x32xf32>,
    %76 = vector.extract_strided_slice %10 {offsets = [0, 2, 0], sizes = [8, 1, 128], strides = [1, 1, 1]} : vector<8x8x128xf32> to vector<8x1x128xf32>
    %77 = vector.shape_cast %76 : vector<8x1x128xf32> to vector<8x128xf32>
    %cst_26 = arith.constant dense<0.000000e+00> : vector<8x128xf32>
    %78 = tpu.matmul %73, %11, %cst_26 {dimension_numbers = #tpu.dot_dimension_numbers<[1], [0], [0], [1], [0, 0, 1, 1], [], []>} : vector<8x32xf32>, vector<32x128xf32>, vector<8x128xf32> -> vector<8x128xf32>
    %79 = arith.addf %77, %78 : vector<8x128xf32>
    %80 = vector.extract_strided_slice %79 {offsets = [0, 0], sizes = [8, 32], strides = [1, 1]} : vector<8x128xf32> to vector<8x32xf32>
    %81 = arith.negf %80 : vector<8x32xf32>
    %82 = math.exp %81 : vector<8x32xf32>
    %cst_27 = arith.constant 1.000000e+00 : f32
    %83 = vector.broadcast %cst_27 : f32 to vector<8x32xf32>
    %84 = arith.addf %83, %82 : vector<8x32xf32>
    %85 = arith.divf %83, %84 : vector<8x32xf32>
    %86 = vector.extract_strided_slice %79 {offsets = [0, 32], sizes = [8, 32], strides = [1, 1]} : vector<8x128xf32> to vector<8x32xf32>
    %87 = arith.negf %86 : vector<8x32xf32>
    %88 = math.exp %87 : vector<8x32xf32>
    %cst_28 = arith.constant 1.000000e+00 : f32
    %89 = vector.broadcast %cst_28 : f32 to vector<8x32xf32>
    %90 = arith.addf %89, %88 : vector<8x32xf32>
    %91 = arith.divf %89, %90 : vector<8x32xf32>
    %92 = vector.extract_strided_slice %79 {offsets = [0, 64], sizes = [8, 32], strides = [1, 1]} : vector<8x128xf32> to vector<8x32xf32>
    %93 = math.tanh %92 : vector<8x32xf32>
    %94 = vector.extract_strided_slice %79 {offsets = [0, 96], sizes = [8, 32], strides = [1, 1]} : vector<8x128xf32> to vector<8x32xf32>
    %95 = arith.negf %94 : vector<8x32xf32>
    %96 = math.exp %95 : vector<8x32xf32>
    %cst_29 = arith.constant 1.000000e+00 : f32
    %97 = vector.broadcast %cst_29 : f32 to vector<8x32xf32>
    %98 = arith.addf %97, %96 : vector<8x32xf32>
    %99 = arith.divf %97, %98 : vector<8x32xf32>
    %100 = arith.mulf %91, %71 : vector<8x32xf32>
    %101 = arith.mulf %85, %93 : vector<8x32xf32>
    %102 = arith.addf %100, %101 : vector<8x32xf32>
    %103 = math.tanh %102 : vector<8x32xf32>
    %104 = arith.mulf %99, %103 : vector<8x32xf32>
    %105 = vector.shape_cast %104 : vector<8x32xf32> to vector<8x1x32xf32>
    %c0_30 = arith.constant 0 : index
    %c2 = arith.constant 2 : index
    %c0_31 = arith.constant 0 : index
    %106 = vector.load %arg12[%c0_30, %c2, %c0_31] : memref<8x8x32xf32, #tpu.memory_space<vmem>>, vector<8x1x32xf32>
    tpu.vector_store %arg12[%c0_30, %c2, %c0_31], %105 {strides = array<i32>} : memref<8x8x32xf32, #tpu.memory_space<vmem>>, vector<8x1x32xf32>,
    %107 = vector.extract_strided_slice %10 {offsets = [0, 3, 0], sizes = [8, 1, 128], strides = [1, 1, 1]} : vector<8x8x128xf32> to vector<8x1x128xf32>
    %108 = vector.shape_cast %107 : vector<8x1x128xf32> to vector<8x128xf32>
    %cst_32 = arith.constant dense<0.000000e+00> : vector<8x128xf32>
    %109 = tpu.matmul %104, %11, %cst_32 {dimension_numbers = #tpu.dot_dimension_numbers<[1], [0], [0], [1], [0, 0, 1, 1], [], []>} : vector<8x32xf32>, vector<32x128xf32>, vector<8x128xf32> -> vector<8x128xf32>
    %110 = arith.addf %108, %109 : vector<8x128xf32>
    %111 = vector.extract_strided_slice %110 {offsets = [0, 0], sizes = [8, 32], strides = [1, 1]} : vector<8x128xf32> to vector<8x32xf32>
    %112 = arith.negf %111 : vector<8x32xf32>
    %113 = math.exp %112 : vector<8x32xf32>
    %cst_33 = arith.constant 1.000000e+00 : f32
    %114 = vector.broadcast %cst_33 : f32 to vector<8x32xf32>
    %115 = arith.addf %114, %113 : vector<8x32xf32>
    %116 = arith.divf %114, %115 : vector<8x32xf32>
    %117 = vector.extract_strided_slice %110 {offsets = [0, 32], sizes = [8, 32], strides = [1, 1]} : vector<8x128xf32> to vector<8x32xf32>
    %118 = arith.negf %117 : vector<8x32xf32>
    %119 = math.exp %118 : vector<8x32xf32>
    %cst_34 = arith.constant 1.000000e+00 : f32
    %120 = vector.broadcast %cst_34 : f32 to vector<8x32xf32>
    %121 = arith.addf %120, %119 : vector<8x32xf32>
    %122 = arith.divf %120, %121 : vector<8x32xf32>
    %123 = vector.extract_strided_slice %110 {offsets = [0, 64], sizes = [8, 32], strides = [1, 1]} : vector<8x128xf32> to vector<8x32xf32>
    %124 = math.tanh %123 : vector<8x32xf32>
    %125 = vector.extract_strided_slice %110 {offsets = [0, 96], sizes = [8, 32], strides = [1, 1]} : vector<8x128xf32> to vector<8x32xf32>
    %126 = arith.negf %125 : vector<8x32xf32>
    %127 = math.exp %126 : vector<8x32xf32>
    %cst_35 = arith.constant 1.000000e+00 : f32
    %128 = vector.broadcast %cst_35 : f32 to vector<8x32xf32>
    %129 = arith.addf %128, %127 : vector<8x32xf32>
    %130 = arith.divf %128, %129 : vector<8x32xf32>
    %131 = arith.mulf %122, %102 : vector<8x32xf32>
    %132 = arith.mulf %116, %124 : vector<8x32xf32>
    %133 = arith.addf %131, %132 : vector<8x32xf32>
    %134 = math.tanh %133 : vector<8x32xf32>
    %135 = arith.mulf %130, %134 : vector<8x32xf32>
    %136 = vector.shape_cast %135 : vector<8x32xf32> to vector<8x1x32xf32>
    %c0_36 = arith.constant 0 : index
    %c3 = arith.constant 3 : index
    %c0_37 = arith.constant 0 : index
    %137 = vector.load %arg12[%c0_36, %c3, %c0_37] : memref<8x8x32xf32, #tpu.memory_space<vmem>>, vector<8x1x32xf32>
    tpu.vector_store %arg12[%c0_36, %c3, %c0_37], %136 {strides = array<i32>} : memref<8x8x32xf32, #tpu.memory_space<vmem>>, vector<8x1x32xf32>,
    %138 = vector.extract_strided_slice %10 {offsets = [0, 4, 0], sizes = [8, 1, 128], strides = [1, 1, 1]} : vector<8x8x128xf32> to vector<8x1x128xf32>
    %139 = vector.shape_cast %138 : vector<8x1x128xf32> to vector<8x128xf32>
    %cst_38 = arith.constant dense<0.000000e+00> : vector<8x128xf32>
    %140 = tpu.matmul %135, %11, %cst_38 {dimension_numbers = #tpu.dot_dimension_numbers<[1], [0], [0], [1], [0, 0, 1, 1], [], []>} : vector<8x32xf32>, vector<32x128xf32>, vector<8x128xf32> -> vector<8x128xf32>
    %141 = arith.addf %139, %140 : vector<8x128xf32>
    %142 = vector.extract_strided_slice %141 {offsets = [0, 0], sizes = [8, 32], strides = [1, 1]} : vector<8x128xf32> to vector<8x32xf32>
    %143 = arith.negf %142 : vector<8x32xf32>
    %144 = math.exp %143 : vector<8x32xf32>
    %cst_39 = arith.constant 1.000000e+00 : f32
    %145 = vector.broadcast %cst_39 : f32 to vector<8x32xf32>
    %146 = arith.addf %145, %144 : vector<8x32xf32>
    %147 = arith.divf %145, %146 : vector<8x32xf32>
    %148 = vector.extract_strided_slice %141 {offsets = [0, 32], sizes = [8, 32], strides = [1, 1]} : vector<8x128xf32> to vector<8x32xf32>
    %149 = arith.negf %148 : vector<8x32xf32>
    %150 = math.exp %149 : vector<8x32xf32>
    %cst_40 = arith.constant 1.000000e+00 : f32
    %151 = vector.broadcast %cst_40 : f32 to vector<8x32xf32>
    %152 = arith.addf %151, %150 : vector<8x32xf32>
    %153 = arith.divf %151, %152 : vector<8x32xf32>
    %154 = vector.extract_strided_slice %141 {offsets = [0, 64], sizes = [8, 32], strides = [1, 1]} : vector<8x128xf32> to vector<8x32xf32>
    %155 = math.tanh %154 : vector<8x32xf32>
    %156 = vector.extract_strided_slice %141 {offsets = [0, 96], sizes = [8, 32], strides = [1, 1]} : vector<8x128xf32> to vector<8x32xf32>
    %157 = arith.negf %156 : vector<8x32xf32>
    %158 = math.exp %157 : vector<8x32xf32>
    %cst_41 = arith.constant 1.000000e+00 : f32
    %159 = vector.broadcast %cst_41 : f32 to vector<8x32xf32>
    %160 = arith.addf %159, %158 : vector<8x32xf32>
    %161 = arith.divf %159, %160 : vector<8x32xf32>
    %162 = arith.mulf %153, %133 : vector<8x32xf32>
    %163 = arith.mulf %147, %155 : vector<8x32xf32>
    %164 = arith.addf %162, %163 : vector<8x32xf32>
    %165 = math.tanh %164 : vector<8x32xf32>
    %166 = arith.mulf %161, %165 : vector<8x32xf32>
    %167 = vector.shape_cast %166 : vector<8x32xf32> to vector<8x1x32xf32>
    %c0_42 = arith.constant 0 : index
    %c4 = arith.constant 4 : index
    %c0_43 = arith.constant 0 : index
    %168 = vector.load %arg12[%c0_42, %c4, %c0_43] : memref<8x8x32xf32, #tpu.memory_space<vmem>>, vector<8x1x32xf32>
    tpu.vector_store %arg12[%c0_42, %c4, %c0_43], %167 {strides = array<i32>} : memref<8x8x32xf32, #tpu.memory_space<vmem>>, vector<8x1x32xf32>,
    %169 = vector.extract_strided_slice %10 {offsets = [0, 5, 0], sizes = [8, 1, 128], strides = [1, 1, 1]} : vector<8x8x128xf32> to vector<8x1x128xf32>
    %170 = vector.shape_cast %169 : vector<8x1x128xf32> to vector<8x128xf32>
    %cst_44 = arith.constant dense<0.000000e+00> : vector<8x128xf32>
    %171 = tpu.matmul %166, %11, %cst_44 {dimension_numbers = #tpu.dot_dimension_numbers<[1], [0], [0], [1], [0, 0, 1, 1], [], []>} : vector<8x32xf32>, vector<32x128xf32>, vector<8x128xf32> -> vector<8x128xf32>
    %172 = arith.addf %170, %171 : vector<8x128xf32>
    %173 = vector.extract_strided_slice %172 {offsets = [0, 0], sizes = [8, 32], strides = [1, 1]} : vector<8x128xf32> to vector<8x32xf32>
    %174 = arith.negf %173 : vector<8x32xf32>
    %175 = math.exp %174 : vector<8x32xf32>
    %cst_45 = arith.constant 1.000000e+00 : f32
    %176 = vector.broadcast %cst_45 : f32 to vector<8x32xf32>
    %177 = arith.addf %176, %175 : vector<8x32xf32>
    %178 = arith.divf %176, %177 : vector<8x32xf32>
    %179 = vector.extract_strided_slice %172 {offsets = [0, 32], sizes = [8, 32], strides = [1, 1]} : vector<8x128xf32> to vector<8x32xf32>
    %180 = arith.negf %179 : vector<8x32xf32>
    %181 = math.exp %180 : vector<8x32xf32>
    %cst_46 = arith.constant 1.000000e+00 : f32
    %182 = vector.broadcast %cst_46 : f32 to vector<8x32xf32>
    %183 = arith.addf %182, %181 : vector<8x32xf32>
    %184 = arith.divf %182, %183 : vector<8x32xf32>
    %185 = vector.extract_strided_slice %172 {offsets = [0, 64], sizes = [8, 32], strides = [1, 1]} : vector<8x128xf32> to vector<8x32xf32>
    %186 = math.tanh %185 : vector<8x32xf32>
    %187 = vector.extract_strided_slice %172 {offsets = [0, 96], sizes = [8, 32], strides = [1, 1]} : vector<8x128xf32> to vector<8x32xf32>
    %188 = arith.negf %187 : vector<8x32xf32>
    %189 = math.exp %188 : vector<8x32xf32>
    %cst_47 = arith.constant 1.000000e+00 : f32
    %190 = vector.broadcast %cst_47 : f32 to vector<8x32xf32>
    %191 = arith.addf %190, %189 : vector<8x32xf32>
    %192 = arith.divf %190, %191 : vector<8x32xf32>
    %193 = arith.mulf %184, %164 : vector<8x32xf32>
    %194 = arith.mulf %178, %186 : vector<8x32xf32>
    %195 = arith.addf %193, %194 : vector<8x32xf32>
    %196 = math.tanh %195 : vector<8x32xf32>
    %197 = arith.mulf %192, %196 : vector<8x32xf32>
    %198 = vector.shape_cast %197 : vector<8x32xf32> to vector<8x1x32xf32>
    %c0_48 = arith.constant 0 : index
    %c5 = arith.constant 5 : index
    %c0_49 = arith.constant 0 : index
    %199 = vector.load %arg12[%c0_48, %c5, %c0_49] : memref<8x8x32xf32, #tpu.memory_space<vmem>>, vector<8x1x32xf32>
    tpu.vector_store %arg12[%c0_48, %c5, %c0_49], %198 {strides = array<i32>} : memref<8x8x32xf32, #tpu.memory_space<vmem>>, vector<8x1x32xf32>,
    %200 = vector.extract_strided_slice %10 {offsets = [0, 6, 0], sizes = [8, 1, 128], strides = [1, 1, 1]} : vector<8x8x128xf32> to vector<8x1x128xf32>
    %201 = vector.shape_cast %200 : vector<8x1x128xf32> to vector<8x128xf32>
    %cst_50 = arith.constant dense<0.000000e+00> : vector<8x128xf32>
    %202 = tpu.matmul %197, %11, %cst_50 {dimension_numbers = #tpu.dot_dimension_numbers<[1], [0], [0], [1], [0, 0, 1, 1], [], []>} : vector<8x32xf32>, vector<32x128xf32>, vector<8x128xf32> -> vector<8x128xf32>
    %203 = arith.addf %201, %202 : vector<8x128xf32>
    %204 = vector.extract_strided_slice %203 {offsets = [0, 0], sizes = [8, 32], strides = [1, 1]} : vector<8x128xf32> to vector<8x32xf32>
    %205 = arith.negf %204 : vector<8x32xf32>
    %206 = math.exp %205 : vector<8x32xf32>
    %cst_51 = arith.constant 1.000000e+00 : f32
    %207 = vector.broadcast %cst_51 : f32 to vector<8x32xf32>
    %208 = arith.addf %207, %206 : vector<8x32xf32>
    %209 = arith.divf %207, %208 : vector<8x32xf32>
    %210 = vector.extract_strided_slice %203 {offsets = [0, 32], sizes = [8, 32], strides = [1, 1]} : vector<8x128xf32> to vector<8x32xf32>
    %211 = arith.negf %210 : vector<8x32xf32>
    %212 = math.exp %211 : vector<8x32xf32>
    %cst_52 = arith.constant 1.000000e+00 : f32
    %213 = vector.broadcast %cst_52 : f32 to vector<8x32xf32>
    %214 = arith.addf %213, %212 : vector<8x32xf32>
    %215 = arith.divf %213, %214 : vector<8x32xf32>
    %216 = vector.extract_strided_slice %203 {offsets = [0, 64], sizes = [8, 32], strides = [1, 1]} : vector<8x128xf32> to vector<8x32xf32>
    %217 = math.tanh %216 : vector<8x32xf32>
    %218 = vector.extract_strided_slice %203 {offsets = [0, 96], sizes = [8, 32], strides = [1, 1]} : vector<8x128xf32> to vector<8x32xf32>
    %219 = arith.negf %218 : vector<8x32xf32>
    %220 = math.exp %219 : vector<8x32xf32>
    %cst_53 = arith.constant 1.000000e+00 : f32
    %221 = vector.broadcast %cst_53 : f32 to vector<8x32xf32>
    %222 = arith.addf %221, %220 : vector<8x32xf32>
    %223 = arith.divf %221, %222 : vector<8x32xf32>
    %224 = arith.mulf %215, %195 : vector<8x32xf32>
    %225 = arith.mulf %209, %217 : vector<8x32xf32>
    %226 = arith.addf %224, %225 : vector<8x32xf32>
    %227 = math.tanh %226 : vector<8x32xf32>
    %228 = arith.mulf %223, %227 : vector<8x32xf32>
    %229 = vector.shape_cast %228 : vector<8x32xf32> to vector<8x1x32xf32>
    %c0_54 = arith.constant 0 : index
    %c6 = arith.constant 6 : index
    %c0_55 = arith.constant 0 : index
    %230 = vector.load %arg12[%c0_54, %c6, %c0_55] : memref<8x8x32xf32, #tpu.memory_space<vmem>>, vector<8x1x32xf32>
    tpu.vector_store %arg12[%c0_54, %c6, %c0_55], %229 {strides = array<i32>} : memref<8x8x32xf32, #tpu.memory_space<vmem>>, vector<8x1x32xf32>,
    %231 = vector.extract_strided_slice %10 {offsets = [0, 7, 0], sizes = [8, 1, 128], strides = [1, 1, 1]} : vector<8x8x128xf32> to vector<8x1x128xf32>
    %232 = vector.shape_cast %231 : vector<8x1x128xf32> to vector<8x128xf32>
    %cst_56 = arith.constant dense<0.000000e+00> : vector<8x128xf32>
    %233 = tpu.matmul %228, %11, %cst_56 {dimension_numbers = #tpu.dot_dimension_numbers<[1], [0], [0], [1], [0, 0, 1, 1], [], []>} : vector<8x32xf32>, vector<32x128xf32>, vector<8x128xf32> -> vector<8x128xf32>
    %234 = arith.addf %232, %233 : vector<8x128xf32>
    %235 = vector.extract_strided_slice %234 {offsets = [0, 0], sizes = [8, 32], strides = [1, 1]} : vector<8x128xf32> to vector<8x32xf32>
    %236 = arith.negf %235 : vector<8x32xf32>
    %237 = math.exp %236 : vector<8x32xf32>
    %cst_57 = arith.constant 1.000000e+00 : f32
    %238 = vector.broadcast %cst_57 : f32 to vector<8x32xf32>
    %239 = arith.addf %238, %237 : vector<8x32xf32>
    %240 = arith.divf %238, %239 : vector<8x32xf32>
    %241 = vector.extract_strided_slice %234 {offsets = [0, 32], sizes = [8, 32], strides = [1, 1]} : vector<8x128xf32> to vector<8x32xf32>
    %242 = arith.negf %241 : vector<8x32xf32>
    %243 = math.exp %242 : vector<8x32xf32>
    %cst_58 = arith.constant 1.000000e+00 : f32
    %244 = vector.broadcast %cst_58 : f32 to vector<8x32xf32>
    %245 = arith.addf %244, %243 : vector<8x32xf32>
    %246 = arith.divf %244, %245 : vector<8x32xf32>
    %247 = vector.extract_strided_slice %234 {offsets = [0, 64], sizes = [8, 32], strides = [1, 1]} : vector<8x128xf32> to vector<8x32xf32>
    %248 = math.tanh %247 : vector<8x32xf32>
    %249 = vector.extract_strided_slice %234 {offsets = [0, 96], sizes = [8, 32], strides = [1, 1]} : vector<8x128xf32> to vector<8x32xf32>
    %250 = arith.negf %249 : vector<8x32xf32>
    %251 = math.exp %250 : vector<8x32xf32>
    %cst_59 = arith.constant 1.000000e+00 : f32
    %252 = vector.broadcast %cst_59 : f32 to vector<8x32xf32>
    %253 = arith.addf %252, %251 : vector<8x32xf32>
    %254 = arith.divf %252, %253 : vector<8x32xf32>
    %255 = arith.mulf %246, %226 : vector<8x32xf32>
    %256 = arith.mulf %240, %248 : vector<8x32xf32>
    %257 = arith.addf %255, %256 : vector<8x32xf32>
    %258 = math.tanh %257 : vector<8x32xf32>
    %259 = arith.mulf %254, %258 : vector<8x32xf32>
    %260 = vector.shape_cast %259 : vector<8x32xf32> to vector<8x1x32xf32>
    %c0_60 = arith.constant 0 : index
    %c7 = arith.constant 7 : index
    %c0_61 = arith.constant 0 : index
    %261 = vector.load %arg12[%c0_60, %c7, %c0_61] : memref<8x8x32xf32, #tpu.memory_space<vmem>>, vector<8x1x32xf32>
    tpu.vector_store %arg12[%c0_60, %c7, %c0_61], %260 {strides = array<i32>} : memref<8x8x32xf32, #tpu.memory_space<vmem>>, vector<8x1x32xf32>,
    %c0_62 = arith.constant 0 : index
    %c0_63 = arith.constant 0 : index
    %262 = vector.load %arg10[%c0_62, %c0_63] : memref<8x32xf32, #tpu.memory_space<vmem>>, vector<8x32xf32>
    tpu.vector_store %arg10[%c0_62, %c0_63], %259 {strides = array<i32>} : memref<8x32xf32, #tpu.memory_space<vmem>>, vector<8x32xf32>,
    %c0_64 = arith.constant 0 : index
    %c0_65 = arith.constant 0 : index
    %263 = vector.load %arg11[%c0_64, %c0_65] : memref<8x32xf32, #tpu.memory_space<vmem>>, vector<8x32xf32>
    tpu.vector_store %arg11[%c0_64, %c0_65], %257 {strides = array<i32>} : memref<8x32xf32, #tpu.memory_space<vmem>>, vector<8x32xf32>,
    %c8_i32 = arith.constant 8 : i32
    %264 = arith.muli %arg1, %c8_i32 : i32
    %265 = tpu.iota {dimensions = array<i32: 1>} : vector<8x8x32xi32>
    %266 = vector.broadcast %264 : i32 to vector<8x8x32xi32>
    %267 = arith.addi %265, %266 : vector<8x8x32xi32>
    %c0_66 = arith.constant 0 : index
    %c0_67 = arith.constant 0 : index
    %268 = vector.load %arg3[%c0_66, %c0_67] : memref<8x1xi32, #tpu.memory_space<vmem>>, vector<8x1xi32>
    %269 = vector.shape_cast %268 : vector<8x1xi32> to vector<8x1x1xi32>
    %270 = vector.broadcast %269 : vector<8x1x1xi32> to vector<8x8x32xi32>
    %271 = arith.cmpi slt, %267, %270 : vector<8x8x32xi32>
    %c0_68 = arith.constant 0 : index
    %c0_69 = arith.constant 0 : index
    %c0_70 = arith.constant 0 : index
    %272 = vector.load %arg12[%c0_68, %c0_69, %c0_70] : memref<8x8x32xf32, #tpu.memory_space<vmem>>, vector<8x8x32xf32>
    %cst_71 = arith.constant 0.000000e+00 : f32
    %273 = vector.broadcast %cst_71 : f32 to vector<8x8x32xf32>
    %274 = arith.select %271, %272, %273 : vector<8x8x32xi1>, vector<8x8x32xf32>
    %275 = vector.shape_cast %274 : vector<8x8x32xf32> to vector<64x32xf32>
    %c0_72 = arith.constant 0 : index
    %c0_73 = arith.constant 0 : index
    %276 = vector.load %arg7[%c0_72, %c0_73] : memref<32x16xf32, #tpu.memory_space<vmem>>, vector<32x16xf32>
    %cst_74 = arith.constant dense<0.000000e+00> : vector<64x16xf32>
    %277 = tpu.matmul %275, %276, %cst_74 {dimension_numbers = #tpu.dot_dimension_numbers<[1], [0], [0], [1], [0, 0, 1, 1], [], []>} : vector<64x32xf32>, vector<32x16xf32>, vector<64x16xf32> -> vector<64x16xf32>
    %c0_75 = arith.constant 0 : index
    %c0_76 = arith.constant 0 : index
    %278 = vector.load %arg8[%c0_75, %c0_76] : memref<1x16xf32, #tpu.memory_space<vmem>>, vector<1x16xf32>
    %279 = vector.broadcast %278 : vector<1x16xf32> to vector<64x16xf32>
    %280 = arith.addf %277, %279 : vector<64x16xf32>
    %cst_77 = arith.constant dense<0xFF800000> : vector<64xf32>
    %281 = vector.multi_reduction <maximumf>, %280, %cst_77 [1] : vector<64x16xf32> to vector<64xf32>
    %282 = vector.shape_cast %281 : vector<64xf32> to vector<64x1xf32>
    %283 = vector.broadcast %282 : vector<64x1xf32> to vector<64x16xf32>
    %284 = arith.subf %280, %283 : vector<64x16xf32>
    %285 = math.exp %284 : vector<64x16xf32>
    %cst_78 = arith.constant dense<0.000000e+00> : vector<64xf32>
    %286 = vector.multi_reduction <add>, %285, %cst_78 [1] : vector<64x16xf32> to vector<64xf32>
    %287 = vector.shape_cast %286 : vector<64xf32> to vector<64x1xf32>
    %288 = math.log %287 : vector<64x1xf32>
    %289 = vector.broadcast %288 : vector<64x1xf32> to vector<64x16xf32>
    %290 = arith.subf %284, %289 : vector<64x16xf32>
    %291 = vector.shape_cast %290 : vector<64x16xf32> to vector<8x8x16xf32>
    %c0_79 = arith.constant 0 : index
    %c0_80 = arith.constant 0 : index
    %c0_81 = arith.constant 0 : index
    %292 = vector.load %arg9[%c0_79, %c0_80, %c0_81] : memref<8x8x16xf32, #tpu.memory_space<vmem>>, vector<8x8x16xf32>
    tpu.vector_store %arg9[%c0_79, %c0_80, %c0_81], %291 {strides = array<i32>} : memref<8x8x16xf32, #tpu.memory_space<vmem>>, vector<8x8x16xf32>,
    return
  }
  func.func @transform_0(%arg0: i32, %arg1: i32) -> (i32, i32, i32) {
    %c0_i32 = arith.constant 0 : i32
    %c0_i32_0 = arith.constant 0 : i32
    return %arg0, %arg1, %c0_i32 : i32, i32, i32
  }
  func.func @transform_1(%arg0: i32, %arg1: i32) -> (i32, i32) {
    %c0_i32 = arith.constant 0 : i32
    %c0_i32_0 = arith.constant 0 : i32
    return %arg0, %c0_i32 : i32, i32
  }
  func.func @transform_2(%arg0: i32, %arg1: i32) -> (i32, i32) {
    %c0_i32 = arith.constant 0 : i32
    %c0_i32_0 = arith.constant 0 : i32
    %c0_i32_1 = arith.constant 0 : i32
    return %c0_i32, %c0_i32_0 : i32, i32
  }
  func.func @transform_3(%arg0: i32, %arg1: i32) -> (i32, i32) {
    %c0_i32 = arith.constant 0 : i32
    %c0_i32_0 = arith.constant 0 : i32
    %c0_i32_1 = arith.constant 0 : i32
    return %c0_i32, %c0_i32_0 : i32, i32
  }
  func.func @transform_4(%arg0: i32, %arg1: i32) -> (i32, i32) {
    %c0_i32 = arith.constant 0 : i32
    %c0_i32_0 = arith.constant 0 : i32
    %c0_i32_1 = arith.constant 0 : i32
    return %c0_i32, %c0_i32_0 : i32, i32
  }
  func.func @transform_5(%arg0: i32, %arg1: i32) -> (i32, i32) {
    %c0_i32 = arith.constant 0 : i32
    %c0_i32_0 = arith.constant 0 : i32
    %c0_i32_1 = arith.constant 0 : i32
    return %c0_i32, %c0_i32_0 : i32, i32
  }
  func.func @transform_6(%arg0: i32, %arg1: i32) -> (i32, i32) {
    %c0_i32 = arith.constant 0 : i32
    %c0_i32_0 = arith.constant 0 : i32
    %c0_i32_1 = arith.constant 0 : i32
    return %c0_i32, %c0_i32_0 : i32, i32
  }
  func.func @transform_7(%arg0: i32, %arg1: i32) -> (i32, i32, i32) {
    %c0_i32 = arith.constant 0 : i32
    %c0_i32_0 = arith.constant 0 : i32
    return %arg0, %arg1, %c0_i32 : i32, i32, i32
  }
}

</mosaic_0001>

<llo_original>
// kernel: tpu_custom_call.1
$region0: #{tpu_custom_call.1}
  #allocation0 [shape = 'u32[]', space=smem, size = 0x4, offset = 0x4, fixed_abs, tag = 'smem constant byte address 0x4 - core index']
  #allocation1 [shape = 'u32[144,128]{1,0:T(1,128)}', space=vmem, size = 0x12000, scoped, tag = 'internal scratch']
  #allocation2 [shape = 'f32[8,32]{1,0:T(8,128)}', space=vmem, size = 0x1000, scoped, tag = 'scratch operand']
  #allocation3 [shape = 'f32[8,32]{1,0:T(8,128)}', space=vmem, size = 0x1000, scoped, tag = 'scratch operand']
  #allocation4 [shape = 'f32[8,8,32]{2,1,0:T(8,128)}', space=vmem, size = 0x8000, scoped, tag = 'scratch operand']
  %s0 = inlined_call_operand.hbm [shape: f32[8,8,32], index: 0, kind: input, shape index: {}]
  %s1 = inlined_call_operand.vmem [shape: s32[8,1], index: 1, kind: input, shape index: {}]
  %s2 = inlined_call_operand.vmem [shape: f32[32,128], index: 2, kind: input, shape index: {}]
  %s3 = inlined_call_operand.vmem [shape: f32[32,128], index: 3, kind: input, shape index: {}]
  %s4 = inlined_call_operand.vmem [shape: f32[1,128], index: 4, kind: input, shape index: {}]
  %s5 = inlined_call_operand.vmem [shape: f32[32,16], index: 5, kind: input, shape index: {}]
  %s6 = inlined_call_operand.vmem [shape: f32[1,16], index: 6, kind: input, shape index: {}]
  %s7 = inlined_call_operand.hbm [shape: f32[8,8,16], index: 7, kind: output, shape index: {}]
  %s8 = sld [smem:[#allocation0]]
  $region46: #{tpu_custom_call.1} parent=0
    _
  %s10 = ssub.s32 1, %s8
  %s11 = scalar_select 0, %s10, %s8
  $region1: #{tpu_custom_call.1} parent=0
    #allocation5 [shape = 'u8[32768]{0}', space=vmem, size = 0x8000, scoped, tag = 'input window, operand 0, single buffered']
    #allocation6 [shape = 's32[1]{0}', space=sflag, size = 0x4, scoped, tag = 'scoped memory for tpu_custom_call.1']
    #allocation7 [shape = 's32[1]{0}', space=sflag, size = 0x4, scoped, tag = 'scoped memory for tpu_custom_call.1']
    #allocation8 [shape = 'u8[32768]{0}', space=vmem, size = 0x8000, scoped, tag = 'output window, operand 0, single buffered']
    %12 = vsyncpa [#allocation6], 0
    %13 = vsyncpa [#allocation7], 0
    // Predicated region
    $region2: #{tpu_custom_call.1} parent=1 // pred_check
      _
    $region3: #{tpu_custom_call.1} parent=1 // pred_check_branch
      %15 = sbr.rel (0) target = $region5
    $region4: #{tpu_custom_call.1} parent=1 // pred_region
      %s17 = ssub.s32 1024, 1024
      %18 = vsyncadd [#allocation6], %s17
      %s19 = sshll.u32 [#allocation5], 4
      %s20 = int_to_ptr.vmem [resolvable:$true] %s19
      %25 = dma.hbm_to_vmem [thread:$0]  %s0, 1024, %s20, [#allocation6], 128, 128, 8
    $region5: #{tpu_custom_call.1} parent=1 // pred_fallthru
      _
    // Predicated region
    $region6: #{tpu_custom_call.1} parent=1 // pred_check
      _
    $region7: #{tpu_custom_call.1} parent=1 // pred_check_branch
      %27 = sbr.rel (0) target = $region9
    $region8: #{tpu_custom_call.1} parent=1 // pred_region
      _
    $region9: #{tpu_custom_call.1} parent=1 // pred_fallthru
      _
    // Predicated region
    $region10: #{tpu_custom_call.1} parent=1 // pred_check
      _
    $region11: #{tpu_custom_call.1} parent=1 // pred_check_branch
      %29 = sbr.rel (0) target = $region13
    $region12: #{tpu_custom_call.1} parent=1 // pred_region
      _
    $region13: #{tpu_custom_call.1} parent=1 // pred_fallthru
      _
    // Predicated region
    $region14: #{tpu_custom_call.1} parent=1 // pred_check
      _
    $region15: #{tpu_custom_call.1} parent=1 // pred_check_branch
      %31 = sbr.rel (0) target = $region17
    $region16: #{tpu_custom_call.1} parent=1 // pred_region
      _
    $region17: #{tpu_custom_call.1} parent=1 // pred_fallthru
      _
    // Predicated region
    $region18: #{tpu_custom_call.1} parent=1 // pred_check
      _
    $region19: #{tpu_custom_call.1} parent=1 // pred_check_branch
      %33 = sbr.rel (0) target = $region21
    $region20: #{tpu_custom_call.1} parent=1 // pred_region
      _
    $region21: #{tpu_custom_call.1} parent=1 // pred_fallthru
      _
    // Predicated region
    $region22: #{tpu_custom_call.1} parent=1 // pred_check
      _
    $region23: #{tpu_custom_call.1} parent=1 // pred_check_branch
      %35 = sbr.rel (0) target = $region25
    $region24: #{tpu_custom_call.1} parent=1 // pred_region
      _
    $region25: #{tpu_custom_call.1} parent=1 // pred_fallthru
      _
    // Predicated region
    $region26: #{tpu_custom_call.1} parent=1 // pred_check
      _
    $region27: #{tpu_custom_call.1} parent=1 // pred_check_branch
      %37 = sbr.rel (0) target = $region29
    $region28: #{tpu_custom_call.1} parent=1 // pred_region
      _
    $region29: #{tpu_custom_call.1} parent=1 // pred_fallthru
      _
    // Predicated region
    $region30: #{tpu_custom_call.1} parent=1 // pred_check
      _
    $region31: #{tpu_custom_call.1} parent=1 // pred_check_branch
      %39 = sbr.rel (0) target = $region33
    $region32: #{tpu_custom_call.1} parent=1 // pred_region
      %40 = dma.done [#allocation6], 1024
    $region33: #{tpu_custom_call.1} parent=1 // pred_fallthru
      _
    %p41 = scmp.eq.s32.totalorder 0, 0
    // Predicated region
    $region34: #{tpu_custom_call.1} parent=1 // pred_check
      %p42 = pneg %p41
    $region35: #{tpu_custom_call.1} parent=1 // pred_check_branch
      %44 = sbr.rel (%p42) target = $region37
    $region36: #{tpu_custom_call.1} parent=1 // pred_region
      %vm45 = vcmask 261120
      %46 = vst.msk [vmem:[#allocation2] sm:$0xff] %vm45, 0.0
      %47 = vst.msk [vmem:[#allocation3] sm:$0xff] %vm45, 0.0
    $region37: #{tpu_custom_call.1} parent=1 // pred_fallthru
      _
    %v48 = vld [vmem:[#allocation5] sm:$0xff]
    %v49 = vld [vmem:[#allocation5 + $0x8] sm:$0xff]
    %v50 = vld [vmem:[#allocation5 + $0x10] sm:$0xff]
    %v51 = vld [vmem:[#allocation5 + $0x18] sm:$0xff]
    %v52 = vld [vmem:[#allocation5 + $0x20] sm:$0xff]
    %v53 = vld [vmem:[#allocation5 + $0x28] sm:$0xff]
    %v54 = vld [vmem:[#allocation5 + $0x30] sm:$0xff]
    %v55 = vld [vmem:[#allocation5 + $0x38] sm:$0xff]
    %v56 = vld [vmem:[%s2] sm:$0xff]
    %v57 = vld [vmem:[%s2 + $0x8] sm:$0xff]
    %v58 = vld [vmem:[%s2 + $0x10] sm:$0xff]
    %v59 = vld [vmem:[%s2 + $0x18] sm:$0xff]
    %v60 = vld [vmem:[%s4] sm:$0x1]
    %v62 = vlaneseq
    %v63 = vshrl.u32 %v62, 7
    %v64 = vsub.s32 0, %v63
    %v65 = vrot.slane %v60, %v64
    %vm67 = vcmask 261120
    %v69 = vsel %vm67, %v48, 0
    %v72 = vsel %vm67, %v49, 0
    %v75 = vsel %vm67, %v50, 0
    %v78 = vsel %vm67, %v51, 0
    %v81 = vsel %vm67, %v52, 0
    %v84 = vsel %vm67, %v53, 0
    %v87 = vsel %vm67, %v54, 0
    %v90 = vsel %vm67, %v55, 0
    %92 = vmatprep.subr.mxu0 0.0
    %93 = vmatpush1.msra.mxu0 %v56
    %94 = vmatprep.subr.mxu0 0.0
    %95 = vmatpush1.msra.mxu0 %v57
    %96 = vmatprep.subr.mxu0 0.0
    %97 = vmatpush1.msra.mxu0 %v58
    %98 = vmatprep.subr.mxu0 0.0
    %99 = vmatpush1.msra.mxu0 %v59
    %100 = vmatprep.subr.mxu0 0.0
    %101 = vmatpush1.msra.mxu0 0.0
    %102 = vmatprep.subr.mxu0 0.0
    %103 = vmatpush1.msra.mxu0 0.0
    %104 = vmatprep.subr.mxu0 0.0
    %105 = vmatpush1.msra.mxu0 0.0
    %106 = vmatprep.subr.mxu0 0.0
    %107 = vmatpush1.msra.mxu0 0.0
    %108 = vmatprep.subr.mxu0 0.0
    %109 = vmatpush1.msra.mxu0 0.0
    %110 = vmatprep.subr.mxu0 0.0
    %111 = vmatpush1.msra.mxu0 0.0
    %112 = vmatprep.subr.mxu0 0.0
    %113 = vmatpush1.msra.mxu0 0.0
    %114 = vmatprep.subr.mxu0 0.0
    %115 = vmatpush1.msra.mxu0 0.0
    %116 = vmatprep.subr.mxu0 0.0
    %117 = vmatpush1.msra.mxu0 0.0
    %118 = vmatprep.subr.mxu0 0.0
    %119 = vmatpush1.msra.mxu0 0.0
    %120 = vmatprep.subr.mxu0 0.0
    %121 = vmatpush1.msra.mxu0 0.0
    %122 = vmatprep.subr.mxu0 0.0
    %123 = vmatpush1.msra.mxu0 0.0
    %124 = vmatprep.subr.mxu0 0.0
    %125 = vmatpush1.msra.mxu0 0.0
    %126 = vmatprep.subr.mxu0 0.0
    %127 = vmatpush1.msra.mxu0 0.0
    %128 = vmatprep.subr.mxu0 0.0
    %129 = vmatpush1.msra.mxu0 0.0
    %130 = vmatprep.subr.mxu0 0.0
    %131 = vmatpush1.msra.mxu0 0.0
    %132 = vmatprep.subr.mxu0 0.0
    %133 = vmatpush1.msra.mxu0 0.0
    %134 = vmatprep.subr.mxu0 0.0
    %135 = vmatpush1.msra.mxu0 0.0
    %136 = vmatprep.subr.mxu0 0.0
    %137 = vmatpush1.msra.mxu0 0.0
    %138 = vmatprep.subr.mxu0 0.0
    %139 = vmatpush1.msra.mxu0 0.0
    %140 = vmatprep.subr.mxu0 0.0
    %141 = vmatpush1.msra.mxu0 0.0
    %142 = vmatprep.subr.mxu0 0.0
    %143 = vmatpush1.msra.mxu0 0.0
    %144 = vmatprep.subr.mxu0 0.0
    %145 = vmatpush1.msra.mxu0 0.0
    %146 = vmatprep.subr.mxu0 0.0
    %147 = vmatpush1.msra.mxu0 0.0
    %148 = vmatprep.subr.mxu0 0.0
    %149 = vmatpush1.msra.mxu0 0.0
    %150 = vmatprep.subr.mxu0 0.0
    %151 = vmatpush1.msra.mxu0 0.0
    %152 = vmatprep.subr.mxu0 0.0
    %153 = vmatpush1.msra.mxu0 0.0
    %154 = vmatprep.subr.mxu0 0.0
    %155 = vmatpush1.msra.mxu0 0.0
    %156 = vmatprep.mubr.f32.mxu0 0.0
    %157 = vmatmul.mubr.f32.gmra.mrb[0].mxu0 %v69
    %v158 = vpop.f32.mrb[0].mxu0
    %v159 = vadd.f32 %v65, %v158
    %v160 = vpop.f32.mrb[0].mxu0
    %161 = vmatprep.mubr.f32.mxu0 0.0
    %162 = vmatmul.mubr.f32.gmra.mrb[0].mxu0 %v72
    %v163 = vpop.f32.mrb[0].mxu0
    %v164 = vadd.f32 %v65, %v163
    %v165 = vpop.f32.mrb[0].mxu0
    %166 = vmatprep.mubr.f32.mxu0 0.0
    %167 = vmatmul.mubr.f32.gmra.mrb[0].mxu0 %v75
    %v168 = vpop.f32.mrb[0].mxu0
    %v169 = vadd.f32 %v65, %v168
    %v170 = vpop.f32.mrb[0].mxu0
    %171 = vmatprep.mubr.f32.mxu0 0.0
    %172 = vmatmul.mubr.f32.gmra.mrb[0].mxu0 %v78
    %v173 = vpop.f32.mrb[0].mxu0
    %v174 = vadd.f32 %v65, %v173
    %v175 = vpop.f32.mrb[0].mxu0
    %176 = vmatprep.mubr.f32.mxu0 0.0
    %177 = vmatmul.mubr.f32.gmra.mrb[0].mxu0 %v81
    %v178 = vpop.f32.mrb[0].mxu0
    %v179 = vadd.f32 %v65, %v178
    %v180 = vpop.f32.mrb[0].mxu0
    %181 = vmatprep.mubr.f32.mxu0 0.0
    %182 = vmatmul.mubr.f32.gmra.mrb[0].mxu0 %v84
    %v183 = vpop.f32.mrb[0].mxu0
    %v184 = vadd.f32 %v65, %v183
    %v185 = vpop.f32.mrb[0].mxu0
    %186 = vmatprep.mubr.f32.mxu0 0.0
    %187 = vmatmul.mubr.f32.gmra.mrb[0].mxu0 %v87
    %v188 = vpop.f32.mrb[0].mxu0
    %v189 = vadd.f32 %v65, %v188
    %v190 = vpop.f32.mrb[0].mxu0
    %191 = vmatprep.mubr.f32.mxu0 0.0
    %192 = vmatmul.mubr.f32.gmra.mrb[0].mxu0 %v90
    %v193 = vpop.f32.mrb[0].mxu0
    %v194 = vadd.f32 %v65, %v193
    %v195 = vpop.f32.mrb[0].mxu0
    %196 = vdwg.mxu0
    %v197 = vld [vmem:[%s3] sm:$0xff]
    %v198 = vld [vmem:[%s3 + $0x8] sm:$0xff]
    %v199 = vld [vmem:[%s3 + $0x10] sm:$0xff]
    %v200 = vld [vmem:[%s3 + $0x18] sm:$0xff]
    %v201 = vld [vmem:[#allocation2] sm:$0xff]
    %v202 = vld [vmem:[#allocation3] sm:$0xff]
    %v204 = vsel %vm67, %v201, 0
    %206 = vmatprep.subr.mxu0 0.0
    %207 = vmatpush1.msra.mxu0 %v197
    %208 = vmatprep.subr.mxu0 0.0
    %209 = vmatpush1.msra.mxu0 %v198
    %210 = vmatprep.subr.mxu0 0.0
    %211 = vmatpush1.msra.mxu0 %v199
    %212 = vmatprep.subr.mxu0 0.0
    %213 = vmatpush1.msra.mxu0 %v200
    %214 = vmatprep.subr.mxu0 0.0
    %215 = vmatpush1.msra.mxu0 0.0
    %216 = vmatprep.subr.mxu0 0.0
    %217 = vmatpush1.msra.mxu0 0.0
    %218 = vmatprep.subr.mxu0 0.0
    %219 = vmatpush1.msra.mxu0 0.0
    %220 = vmatprep.subr.mxu0 0.0
    %221 = vmatpush1.msra.mxu0 0.0
    %222 = vmatprep.subr.mxu0 0.0
    %223 = vmatpush1.msra.mxu0 0.0
    %224 = vmatprep.subr.mxu0 0.0
    %225 = vmatpush1.msra.mxu0 0.0
    %226 = vmatprep.subr.mxu0 0.0
    %227 = vmatpush1.msra.mxu0 0.0
    %228 = vmatprep.subr.mxu0 0.0
    %229 = vmatpush1.msra.mxu0 0.0
    %230 = vmatprep.subr.mxu0 0.0
    %231 = vmatpush1.msra.mxu0 0.0
    %232 = vmatprep.subr.mxu0 0.0
    %233 = vmatpush1.msra.mxu0 0.0
    %234 = vmatprep.subr.mxu0 0.0
    %235 = vmatpush1.msra.mxu0 0.0
    %236 = vmatprep.subr.mxu0 0.0
    %237 = vmatpush1.msra.mxu0 0.0
    %238 = vmatprep.subr.mxu0 0.0
    %239 = vmatpush1.msra.mxu0 0.0
    %240 = vmatprep.subr.mxu0 0.0
    %241 = vmatpush1.msra.mxu0 0.0
    %242 = vmatprep.subr.mxu0 0.0
    %243 = vmatpush1.msra.mxu0 0.0
    %244 = vmatprep.subr.mxu0 0.0
    %245 = vmatpush1.msra.mxu0 0.0
    %246 = vmatprep.subr.mxu0 0.0
    %247 = vmatpush1.msra.mxu0 0.0
    %248 = vmatprep.subr.mxu0 0.0
    %249 = vmatpush1.msra.mxu0 0.0
    %250 = vmatprep.subr.mxu0 0.0
    %251 = vmatpush1.msra.mxu0 0.0
    %252 = vmatprep.subr.mxu0 0.0
    %253 = vmatpush1.msra.mxu0 0.0
    %254 = vmatprep.subr.mxu0 0.0
    %255 = vmatpush1.msra.mxu0 0.0
    %256 = vmatprep.subr.mxu0 0.0
    %257 = vmatpush1.msra.mxu0 0.0
    %258 = vmatprep.subr.mxu0 0.0
    %259 = vmatpush1.msra.mxu0 0.0
    %260 = vmatprep.subr.mxu0 0.0
    %261 = vmatpush1.msra.mxu0 0.0
    %262 = vmatprep.subr.mxu0 0.0
    %263 = vmatpush1.msra.mxu0 0.0
    %264 = vmatprep.subr.mxu0 0.0
    %265 = vmatpush1.msra.mxu0 0.0
    %266 = vmatprep.subr.mxu0 0.0
    %267 = vmatpush1.msra.mxu0 0.0
    %268 = vmatprep.subr.mxu0 0.0
    %269 = vmatpush1.msra.mxu0 0.0
    %270 = vmatprep.mubr.f32.mxu0 0.0
    %271 = vmatmul.mubr.f32.gmra.mrb[0].mxu0 %v204
    %v272 = vpop.f32.mrb[0].mxu0
    %v273 = vadd.f32 0.0, %v272
    %v274 = vpop.f32.mrb[0].mxu0
    %275 = vdwg.mxu0
    %v277 = vrot.slane %v273, 1
    %v278 = vrot.slane %v273, 2
    %v279 = vrot.slane %v273, 3
    %v280 = vrot.slane %v273, 4
    %v281 = vrot.slane %v273, 5
    %v282 = vrot.slane %v273, 6
    %v283 = vrot.slane %v273, 7
    %v292 = vadd.f32 %v159, %v273
    %v293 = vadd.f32 %v164, %v277
    %v294 = vadd.f32 %v169, %v278
    %v295 = vadd.f32 %v174, %v279
    %v296 = vadd.f32 %v179, %v280
    %v297 = vadd.f32 %v184, %v281
    %v298 = vadd.f32 %v189, %v282
    %v299 = vadd.f32 %v194, %v283
    %v300 = vxor.u32 %v292, 2147483648
    %v301 = vxor.u32 %v293, 2147483648
    %v302 = vxor.u32 %v294, 2147483648
    %v303 = vxor.u32 %v295, 2147483648
    %v304 = vxor.u32 %v296, 2147483648
    %v305 = vxor.u32 %v297, 2147483648
    %v306 = vxor.u32 %v298, 2147483648
    %v307 = vxor.u32 %v299, 2147483648
    %v308 = vmul.f32 %v300, 1.442695
    %v309 = vpow.pop %v308
    %v310 = vmul.f32 %v301, 1.442695
    %v311 = vpow.pop %v310
    %v312 = vmul.f32 %v302, 1.442695
    %v313 = vpow.pop %v312
    %v314 = vmul.f32 %v303, 1.442695
    %v315 = vpow.pop %v314
    %v316 = vmul.f32 %v304, 1.442695
    %v317 = vpow.pop %v316
    %v318 = vmul.f32 %v305, 1.442695
    %v319 = vpow.pop %v318
    %v320 = vmul.f32 %v306, 1.442695
    %v321 = vpow.pop %v320
    %v322 = vmul.f32 %v307, 1.442695
    %v323 = vpow.pop %v322
    %v324 = vadd.f32 %v309, 1.0
    %v325 = vadd.f32 %v311, 1.0
    %v326 = vadd.f32 %v313, 1.0
    %v327 = vadd.f32 %v315, 1.0
    %v328 = vadd.f32 %v317, 1.0
    %v329 = vadd.f32 %v319, 1.0
    %v330 = vadd.f32 %v321, 1.0
    %v331 = vadd.f32 %v323, 1.0
    %v332 = vrcp.pop %v324
    %v333 = vmul.f32 1.0, %v332
    %v334 = vrcp.pop %v325
    %v335 = vmul.f32 1.0, %v334
    %v336 = vrcp.pop %v326
    %v337 = vmul.f32 1.0, %v336
    %v338 = vrcp.pop %v327
    %v339 = vmul.f32 1.0, %v338
    %v340 = vrcp.pop %v328
    %v341 = vmul.f32 1.0, %v340
    %v342 = vrcp.pop %v329
    %v343 = vmul.f32 1.0, %v342
    %v344 = vrcp.pop %v330
    %v345 = vmul.f32 1.0, %v344
    %v346 = vrcp.pop %v331
    %v347 = vmul.f32 1.0, %v346
    %v348 = vtanh.pop %v292
    %v349 = vtanh.pop %v293
    %v350 = vtanh.pop %v294
    %v351 = vtanh.pop %v295
    %v352 = vtanh.pop %v296
    %v353 = vtanh.pop %v297
    %v354 = vtanh.pop %v298
    %v355 = vtanh.pop %v299
    %v357 = vrot.slane %v202, 1
    %v358 = vrot.slane %v202, 2
    %v359 = vrot.slane %v202, 3
    %v360 = vrot.slane %v202, 4
    %v361 = vrot.slane %v202, 5
    %v362 = vrot.slane %v202, 6
    %v363 = vrot.slane %v202, 7
    %364 = vrot.lane.b32.xlu0 %v202, 32
    %v365 = vpop.permute.xlu0 %364
    %366 = vrot.lane.b32.xlu0 %v357, 32
    %v367 = vpop.permute.xlu0 %366
    %368 = vrot.lane.b32.xlu0 %v358, 32
    %v369 = vpop.permute.xlu0 %368
    %370 = vrot.lane.b32.xlu0 %v359, 32
    %v371 = vpop.permute.xlu0 %370
    %372 = vrot.lane.b32.xlu0 %v360, 32
    %v373 = vpop.permute.xlu0 %372
    %374 = vrot.lane.b32.xlu0 %v361, 32
    %v375 = vpop.permute.xlu0 %374
    %376 = vrot.lane.b32.xlu0 %v362, 32
    %v377 = vpop.permute.xlu0 %376
    %378 = vrot.lane.b32.xlu0 %v363, 32
    %v379 = vpop.permute.xlu0 %378
    %v388 = vmul.f32 %v333, %v365
    %v389 = vmul.f32 %v335, %v367
    %v390 = vmul.f32 %v337, %v369
    %v391 = vmul.f32 %v339, %v371
    %v392 = vmul.f32 %v341, %v373
    %v393 = vmul.f32 %v343, %v375
    %v394 = vmul.f32 %v345, %v377
    %v395 = vmul.f32 %v347, %v379
    %404 = vrot.lane.b32.xlu0 %v348, 64
    %v405 = vpop.permute.xlu0 %404
    %406 = vrot.lane.b32.xlu0 %v349, 64
    %v407 = vpop.permute.xlu0 %406
    %408 = vrot.lane.b32.xlu0 %v350, 64
    %v409 = vpop.permute.xlu0 %408
    %410 = vrot.lane.b32.xlu0 %v351, 64
    %v411 = vpop.permute.xlu0 %410
    %412 = vrot.lane.b32.xlu0 %v352, 64
    %v413 = vpop.permute.xlu0 %412
    %414 = vrot.lane.b32.xlu0 %v353, 64
    %v415 = vpop.permute.xlu0 %414
    %416 = vrot.lane.b32.xlu0 %v354, 64
    %v417 = vpop.permute.xlu0 %416
    %418 = vrot.lane.b32.xlu0 %v355, 64
    %v419 = vpop.permute.xlu0 %418
    %v428 = vmul.f32 %v333, %v405
    %v429 = vmul.f32 %v335, %v407
    %v430 = vmul.f32 %v337, %v409
    %v431 = vmul.f32 %v339, %v411
    %v432 = vmul.f32 %v341, %v413
    %v433 = vmul.f32 %v343, %v415
    %v434 = vmul.f32 %v345, %v417
    %v435 = vmul.f32 %v347, %v419
    %444 = vrot.lane.b32.xlu0 %v428, 32
    %v445 = vpop.permute.xlu0 %444
    %446 = vrot.lane.b32.xlu0 %v429, 32
    %v447 = vpop.permute.xlu0 %446
    %448 = vrot.lane.b32.xlu0 %v430, 32
    %v449 = vpop.permute.xlu0 %448
    %450 = vrot.lane.b32.xlu0 %v431, 32
    %v451 = vpop.permute.xlu0 %450
    %452 = vrot.lane.b32.xlu0 %v432, 32
    %v453 = vpop.permute.xlu0 %452
    %454 = vrot.lane.b32.xlu0 %v433, 32
    %v455 = vpop.permute.xlu0 %454
    %456 = vrot.lane.b32.xlu0 %v434, 32
    %v457 = vpop.permute.xlu0 %456
    %458 = vrot.lane.b32.xlu0 %v435, 32
    %v459 = vpop.permute.xlu0 %458
    %v468 = vadd.f32 %v388, %v445
    %v469 = vadd.f32 %v389, %v447
    %v470 = vadd.f32 %v390, %v449
    %v471 = vadd.f32 %v391, %v451
    %v472 = vadd.f32 %v392, %v453
    %v473 = vadd.f32 %v393, %v455
    %v474 = vadd.f32 %v394, %v457
    %v475 = vadd.f32 %v395, %v459
    %v476 = vtanh.pop %v468
    %v477 = vtanh.pop %v469
    %v478 = vtanh.pop %v470
    %v479 = vtanh.pop %v471
    %v480 = vtanh.pop %v472
    %v481 = vtanh.pop %v473
    %v482 = vtanh.pop %v474
    %v483 = vtanh.pop %v475
    %492 = vrot.lane.b32.xlu0 %v476, 64
    %v493 = vpop.permute.xlu0 %492
    %494 = vrot.lane.b32.xlu0 %v477, 64
    %v495 = vpop.permute.xlu0 %494
    %496 = vrot.lane.b32.xlu0 %v478, 64
    %v497 = vpop.permute.xlu0 %496
    %498 = vrot.lane.b32.xlu0 %v479, 64
    %v499 = vpop.permute.xlu0 %498
    %500 = vrot.lane.b32.xlu0 %v480, 64
    %v501 = vpop.permute.xlu0 %500
    %502 = vrot.lane.b32.xlu0 %v481, 64
    %v503 = vpop.permute.xlu0 %502
    %504 = vrot.lane.b32.xlu0 %v482, 64
    %v505 = vpop.permute.xlu0 %504
    %506 = vrot.lane.b32.xlu0 %v483, 64
    %v507 = vpop.permute.xlu0 %506
    %v516 = vmul.f32 %v333, %v493
    %v517 = vmul.f32 %v335, %v495
    %v518 = vmul.f32 %v337, %v497
    %v519 = vmul.f32 %v339, %v499
    %v520 = vmul.f32 %v341, %v501
    %v521 = vmul.f32 %v343, %v503
    %v522 = vmul.f32 %v345, %v505
    %v523 = vmul.f32 %v347, %v507
    %532 = vrot.lane.b32.xlu0 %v516, 32
    %v533 = vpop.permute.xlu0 %532
    %534 = vrot.lane.b32.xlu0 %v517, 32
    %v535 = vpop.permute.xlu0 %534
    %536 = vrot.lane.b32.xlu0 %v518, 32
    %v537 = vpop.permute.xlu0 %536
    %538 = vrot.lane.b32.xlu0 %v519, 32
    %v539 = vpop.permute.xlu0 %538
    %540 = vrot.lane.b32.xlu0 %v520, 32
    %v541 = vpop.permute.xlu0 %540
    %542 = vrot.lane.b32.xlu0 %v521, 32
    %v543 = vpop.permute.xlu0 %542
    %544 = vrot.lane.b32.xlu0 %v522, 32
    %v545 = vpop.permute.xlu0 %544
    %546 = vrot.lane.b32.xlu0 %v523, 32
    %v547 = vpop.permute.xlu0 %546
    %vm556 = vcmask 253952
    %557 = vst.msk [vmem:[#allocation4] sm:$0x1] %vm556, %v533
    %558 = vst.msk [vmem:[#allocation4 + $0x8] sm:$0x1] %vm556, %v535
    %559 = vst.msk [vmem:[#allocation4 + $0x10] sm:$0x1] %vm556, %v537
    %560 = vst.msk [vmem:[#allocation4 + $0x18] sm:$0x1] %vm556, %v539
    %561 = vst.msk [vmem:[#allocation4 + $0x20] sm:$0x1] %vm556, %v541
    %562 = vst.msk [vmem:[#allocation4 + $0x28] sm:$0x1] %vm556, %v543
    %563 = vst.msk [vmem:[#allocation4 + $0x30] sm:$0x1] %vm556, %v545
    %564 = vst.msk [vmem:[#allocation4 + $0x38] sm:$0x1] %vm556, %v547
    %v565 = vrot.slane %v517, 7
    %vm566 = vcmask 1041409
    %v567 = vsel %vm566, %v565, %v516
    %v568 = vrot.slane %v518, 6
    %vm569 = vcmask 1042434
    %v570 = vsel %vm569, %v568, %v567
    %v571 = vrot.slane %v519, 5
    %vm572 = vcmask 1043459
    %v573 = vsel %vm572, %v571, %v570
    %v574 = vrot.slane %v520, 4
    %vm575 = vcmask 1044484
    %v576 = vsel %vm575, %v574, %v573
    %v577 = vrot.slane %v521, 3
    %vm578 = vcmask 1045509
    %v579 = vsel %vm578, %v577, %v576
    %v580 = vrot.slane %v522, 2
    %vm581 = vcmask 1046534
    %v582 = vsel %vm581, %v580, %v579
    %v583 = vrot.slane %v523, 1
    %vm584 = vcmask 1047559
    %v585 = vsel %vm584, %v583, %v582
    %586 = vrot.lane.b32.xlu0 %v585, 32
    %v587 = vpop.permute.xlu0 %586
    %v588 = vsel %vm67, %v587, 0
    %590 = vmatprep.subr.mxu0 0.0
    %591 = vmatpush1.msra.mxu0 %v197
    %592 = vmatprep.subr.mxu0 0.0
    %593 = vmatpush1.msra.mxu0 %v198
    %594 = vmatprep.subr.mxu0 0.0
    %595 = vmatpush1.msra.mxu0 %v199
    %596 = vmatprep.subr.mxu0 0.0
    %597 = vmatpush1.msra.mxu0 %v200
    %598 = vmatprep.subr.mxu0 0.0
    %599 = vmatpush1.msra.mxu0 0.0
    %600 = vmatprep.subr.mxu0 0.0
    %601 = vmatpush1.msra.mxu0 0.0
    %602 = vmatprep.subr.mxu0 0.0
    %603 = vmatpush1.msra.mxu0 0.0
    %604 = vmatprep.subr.mxu0 0.0
    %605 = vmatpush1.msra.mxu0 0.0
    %606 = vmatprep.subr.mxu0 0.0
    %607 = vmatpush1.msra.mxu0 0.0
    %608 = vmatprep.subr.mxu0 0.0
    %609 = vmatpush1.msra.mxu0 0.0
    %610 = vmatprep.subr.mxu0 0.0
    %611 = vmatpush1.msra.mxu0 0.0
    %612 = vmatprep.subr.mxu0 0.0
    %613 = vmatpush1.msra.mxu0 0.0
    %614 = vmatprep.subr.mxu0 0.0
    %615 = vmatpush1.msra.mxu0 0.0
    %616 = vmatprep.subr.mxu0 0.0
    %617 = vmatpush1.msra.mxu0 0.0
    %618 = vmatprep.subr.mxu0 0.0
    %619 = vmatpush1.msra.mxu0 0.0
    %620 = vmatprep.subr.mxu0 0.0
    %621 = vmatpush1.msra.mxu0 0.0
    %622 = vmatprep.subr.mxu0 0.0
    %623 = vmatpush1.msra.mxu0 0.0
    %624 = vmatprep.subr.mxu0 0.0
    %625 = vmatpush1.msra.mxu0 0.0
    %626 = vmatprep.subr.mxu0 0.0
    %627 = vmatpush1.msra.mxu0 0.0
    %628 = vmatprep.subr.mxu0 0.0
    %629 = vmatpush1.msra.mxu0 0.0
    %630 = vmatprep.subr.mxu0 0.0
    %631 = vmatpush1.msra.mxu0 0.0
    %632 = vmatprep.subr.mxu0 0.0
    %633 = vmatpush1.msra.mxu0 0.0
    %634 = vmatprep.subr.mxu0 0.0
    %635 = vmatpush1.msra.mxu0 0.0
    %636 = vmatprep.subr.mxu0 0.0
    %637 = vmatpush1.msra.mxu0 0.0
    %638 = vmatprep.subr.mxu0 0.0
    %639 = vmatpush1.msra.mxu0 0.0
    %640 = vmatprep.subr.mxu0 0.0
    %641 = vmatpush1.msra.mxu0 0.0
    %642 = vmatprep.subr.mxu0 0.0
    %643 = vmatpush1.msra.mxu0 0.0
    %644 = vmatprep.subr.mxu0 0.0
    %645 = vmatpush1.msra.mxu0 0.0
    %646 = vmatprep.subr.mxu0 0.0
    %647 = vmatpush1.msra.mxu0 0.0
    %648 = vmatprep.subr.mxu0 0.0
    %649 = vmatpush1.msra.mxu0 0.0
    %650 = vmatprep.subr.mxu0 0.0
    %651 = vmatpush1.msra.mxu0 0.0
    %652 = vmatprep.subr.mxu0 0.0
    %653 = vmatpush1.msra.mxu0 0.0
    %654 = vmatprep.mubr.f32.mxu0 0.0
    %655 = vmatmul.mubr.f32.gmra.mrb[0].mxu0 %v588
    %v656 = vpop.f32.mrb[0].mxu0
    %v657 = vadd.f32 0.0, %v656
    %v658 = vpop.f32.mrb[0].mxu0
    %659 = vdwg.mxu0
    %v661 = vrot.slane %v657, 7
    %v662 = vrot.slane %v657, 1
    %v663 = vrot.slane %v657, 2
    %v664 = vrot.slane %v657, 3
    %v665 = vrot.slane %v657, 4
    %v666 = vrot.slane %v657, 5
    %v667 = vrot.slane %v657, 6
    %v676 = vadd.f32 %v159, %v661
    %v677 = vadd.f32 %v164, %v657
    %v678 = vadd.f32 %v169, %v662
    %v679 = vadd.f32 %v174, %v663
    %v680 = vadd.f32 %v179, %v664
    %v681 = vadd.f32 %v184, %v665
    %v682 = vadd.f32 %v189, %v666
    %v683 = vadd.f32 %v194, %v667
    %v684 = vxor.u32 %v676, 2147483648
    %v685 = vxor.u32 %v677, 2147483648
    %v686 = vxor.u32 %v678, 2147483648
    %v687 = vxor.u32 %v679, 2147483648
    %v688 = vxor.u32 %v680, 2147483648
    %v689 = vxor.u32 %v681, 2147483648
    %v690 = vxor.u32 %v682, 2147483648
    %v691 = vxor.u32 %v683, 2147483648
    %v692 = vmul.f32 %v684, 1.442695
    %v693 = vpow.pop %v692
    %v694 = vmul.f32 %v685, 1.442695
    %v695 = vpow.pop %v694
    %v696 = vmul.f32 %v686, 1.442695
    %v697 = vpow.pop %v696
    %v698 = vmul.f32 %v687, 1.442695
    %v699 = vpow.pop %v698
    %v700 = vmul.f32 %v688, 1.442695
    %v701 = vpow.pop %v700
    %v702 = vmul.f32 %v689, 1.442695
    %v703 = vpow.pop %v702
    %v704 = vmul.f32 %v690, 1.442695
    %v705 = vpow.pop %v704
    %v706 = vmul.f32 %v691, 1.442695
    %v707 = vpow.pop %v706
    %v708 = vadd.f32 %v693, 1.0
    %v709 = vadd.f32 %v695, 1.0
    %v710 = vadd.f32 %v697, 1.0
    %v711 = vadd.f32 %v699, 1.0
    %v712 = vadd.f32 %v701, 1.0
    %v713 = vadd.f32 %v703, 1.0
    %v714 = vadd.f32 %v705, 1.0
    %v715 = vadd.f32 %v707, 1.0
    %v716 = vrcp.pop %v708
    %v717 = vmul.f32 1.0, %v716
    %v718 = vrcp.pop %v709
    %v719 = vmul.f32 1.0, %v718
    %v720 = vrcp.pop %v710
    %v721 = vmul.f32 1.0, %v720
    %v722 = vrcp.pop %v711
    %v723 = vmul.f32 1.0, %v722
    %v724 = vrcp.pop %v712
    %v725 = vmul.f32 1.0, %v724
    %v726 = vrcp.pop %v713
    %v727 = vmul.f32 1.0, %v726
    %v728 = vrcp.pop %v714
    %v729 = vmul.f32 1.0, %v728
    %v730 = vrcp.pop %v715
    %v731 = vmul.f32 1.0, %v730
    %v732 = vtanh.pop %v676
    %v733 = vtanh.pop %v677
    %v734 = vtanh.pop %v678
    %v735 = vtanh.pop %v679
    %v736 = vtanh.pop %v680
    %v737 = vtanh.pop %v681
    %v738 = vtanh.pop %v682
    %v739 = vtanh.pop %v683
    %v748 = vrot.slane %v468, 7
    %v749 = vrot.slane %v469, 7
    %v750 = vrot.slane %v470, 7
    %v751 = vrot.slane %v471, 7
    %v752 = vrot.slane %v472, 7
    %v753 = vrot.slane %v473, 7
    %v754 = vrot.slane %v474, 7
    %v755 = vrot.slane %v475, 7
    %v764 = vmul.f32 %v717, %v748
    %v765 = vmul.f32 %v719, %v749
    %v766 = vmul.f32 %v721, %v750
    %v767 = vmul.f32 %v723, %v751
    %v768 = vmul.f32 %v725, %v752
    %v769 = vmul.f32 %v727, %v753
    %v770 = vmul.f32 %v729, %v754
    %v771 = vmul.f32 %v731, %v755
    %780 = vrot.lane.b32.xlu0 %v732, 64
    %v781 = vpop.permute.xlu0 %780
    %782 = vrot.lane.b32.xlu0 %v733, 64
    %v783 = vpop.permute.xlu0 %782
    %784 = vrot.lane.b32.xlu0 %v734, 64
    %v785 = vpop.permute.xlu0 %784
    %786 = vrot.lane.b32.xlu0 %v735, 64
    %v787 = vpop.permute.xlu0 %786
    %788 = vrot.lane.b32.xlu0 %v736, 64
    %v789 = vpop.permute.xlu0 %788
    %790 = vrot.lane.b32.xlu0 %v737, 64
    %v791 = vpop.permute.xlu0 %790
    %792 = vrot.lane.b32.xlu0 %v738, 64
    %v793 = vpop.permute.xlu0 %792
    %794 = vrot.lane.b32.xlu0 %v739, 64
    %v795 = vpop.permute.xlu0 %794
    %v804 = vmul.f32 %v717, %v781
    %v805 = vmul.f32 %v719, %v783
    %v806 = vmul.f32 %v721, %v785
    %v807 = vmul.f32 %v723, %v787
    %v808 = vmul.f32 %v725, %v789
    %v809 = vmul.f32 %v727, %v791
    %v810 = vmul.f32 %v729, %v793
    %v811 = vmul.f32 %v731, %v795
    %820 = vrot.lane.b32.xlu0 %v804, 32
    %v821 = vpop.permute.xlu0 %820
    %822 = vrot.lane.b32.xlu0 %v805, 32
    %v823 = vpop.permute.xlu0 %822
    %824 = vrot.lane.b32.xlu0 %v806, 32
    %v825 = vpop.permute.xlu0 %824
    %826 = vrot.lane.b32.xlu0 %v807, 32
    %v827 = vpop.permute.xlu0 %826
    %828 = vrot.lane.b32.xlu0 %v808, 32
    %v829 = vpop.permute.xlu0 %828
    %830 = vrot.lane.b32.xlu0 %v809, 32
    %v831 = vpop.permute.xlu0 %830
    %832 = vrot.lane.b32.xlu0 %v810, 32
    %v833 = vpop.permute.xlu0 %832
    %834 = vrot.lane.b32.xlu0 %v811, 32
    %v835 = vpop.permute.xlu0 %834
    %v844 = vadd.f32 %v764, %v821
    %v845 = vadd.f32 %v765, %v823
    %v846 = vadd.f32 %v766, %v825
    %v847 = vadd.f32 %v767, %v827
    %v848 = vadd.f32 %v768, %v829
    %v849 = vadd.f32 %v769, %v831
    %v850 = vadd.f32 %v770, %v833
    %v851 = vadd.f32 %v771, %v835
    %v852 = vtanh.pop %v844
    %v853 = vtanh.pop %v845
    %v854 = vtanh.pop %v846
    %v855 = vtanh.pop %v847
    %v856 = vtanh.pop %v848
    %v857 = vtanh.pop %v849
    %v858 = vtanh.pop %v850
    %v859 = vtanh.pop %v851
    %868 = vrot.lane.b32.xlu0 %v852, 64
    %v869 = vpop.permute.xlu0 %868
    %870 = vrot.lane.b32.xlu0 %v853, 64
    %v871 = vpop.permute.xlu0 %870
    %872 = vrot.lane.b32.xlu0 %v854, 64
    %v873 = vpop.permute.xlu0 %872
    %874 = vrot.lane.b32.xlu0 %v855, 64
    %v875 = vpop.permute.xlu0 %874
    %876 = vrot.lane.b32.xlu0 %v856, 64
    %v877 = vpop.permute.xlu0 %876
    %878 = vrot.lane.b32.xlu0 %v857, 64
    %v879 = vpop.permute.xlu0 %878
    %880 = vrot.lane.b32.xlu0 %v858, 64
    %v881 = vpop.permute.xlu0 %880
    %882 = vrot.lane.b32.xlu0 %v859, 64
    %v883 = vpop.permute.xlu0 %882
    %v892 = vmul.f32 %v717, %v869
    %v893 = vmul.f32 %v719, %v871
    %v894 = vmul.f32 %v721, %v873
    %v895 = vmul.f32 %v723, %v875
    %v896 = vmul.f32 %v725, %v877
    %v897 = vmul.f32 %v727, %v879
    %v898 = vmul.f32 %v729, %v881
    %v899 = vmul.f32 %v731, %v883
    %908 = vrot.lane.b32.xlu0 %v892, 32
    %v909 = vpop.permute.xlu0 %908
    %910 = vrot.lane.b32.xlu0 %v893, 32
    %v911 = vpop.permute.xlu0 %910
    %912 = vrot.lane.b32.xlu0 %v894, 32
    %v913 = vpop.permute.xlu0 %912
    %914 = vrot.lane.b32.xlu0 %v895, 32
    %v915 = vpop.permute.xlu0 %914
    %916 = vrot.lane.b32.xlu0 %v896, 32
    %v917 = vpop.permute.xlu0 %916
    %918 = vrot.lane.b32.xlu0 %v897, 32
    %v919 = vpop.permute.xlu0 %918
    %920 = vrot.lane.b32.xlu0 %v898, 32
    %v921 = vpop.permute.xlu0 %920
    %922 = vrot.lane.b32.xlu0 %v899, 32
    %v923 = vpop.permute.xlu0 %922
    %vm932 = vcmask 254977
    %933 = vst.msk [vmem:[#allocation4] sm:$0x2] %vm932, %v909
    %934 = vst.msk [vmem:[#allocation4 + $0x8] sm:$0x2] %vm932, %v911
    %935 = vst.msk [vmem:[#allocation4 + $0x10] sm:$0x2] %vm932, %v913
    %936 = vst.msk [vmem:[#allocation4 + $0x18] sm:$0x2] %vm932, %v915
    %937 = vst.msk [vmem:[#allocation4 + $0x20] sm:$0x2] %vm932, %v917
    %938 = vst.msk [vmem:[#allocation4 + $0x28] sm:$0x2] %vm932, %v919
    %939 = vst.msk [vmem:[#allocation4 + $0x30] sm:$0x2] %vm932, %v921
    %940 = vst.msk [vmem:[#allocation4 + $0x38] sm:$0x2] %vm932, %v923
    %v941 = vrot.slane %v892, 1
    %v942 = vsel %vm566, %v893, %v941
    %v943 = vrot.slane %v894, 7
    %v944 = vsel %vm569, %v943, %v942
    %v945 = vrot.slane %v895, 6
    %v946 = vsel %vm572, %v945, %v944
    %v947 = vrot.slane %v896, 5
    %v948 = vsel %vm575, %v947, %v946
    %v949 = vrot.slane %v897, 4
    %v950 = vsel %vm578, %v949, %v948
    %v951 = vrot.slane %v898, 3
    %v952 = vsel %vm581, %v951, %v950
    %v953 = vrot.slane %v899, 2
    %v954 = vsel %vm584, %v953, %v952
    %955 = vrot.lane.b32.xlu0 %v954, 32
    %v956 = vpop.permute.xlu0 %955
    %v957 = vsel %vm67, %v956, 0
    %959 = vmatprep.subr.mxu0 0.0
    %960 = vmatpush1.msra.mxu0 %v197
    %961 = vmatprep.subr.mxu0 0.0
    %962 = vmatpush1.msra.mxu0 %v198
    %963 = vmatprep.subr.mxu0 0.0
    %964 = vmatpush1.msra.mxu0 %v199
    %965 = vmatprep.subr.mxu0 0.0
    %966 = vmatpush1.msra.mxu0 %v200
    %967 = vmatprep.subr.mxu0 0.0
    %968 = vmatpush1.msra.mxu0 0.0
    %969 = vmatprep.subr.mxu0 0.0
    %970 = vmatpush1.msra.mxu0 0.0
    %971 = vmatprep.subr.mxu0 0.0
    %972 = vmatpush1.msra.mxu0 0.0
    %973 = vmatprep.subr.mxu0 0.0
    %974 = vmatpush1.msra.mxu0 0.0
    %975 = vmatprep.subr.mxu0 0.0
    %976 = vmatpush1.msra.mxu0 0.0
    %977 = vmatprep.subr.mxu0 0.0
    %978 = vmatpush1.msra.mxu0 0.0
    %979 = vmatprep.subr.mxu0 0.0
    %980 = vmatpush1.msra.mxu0 0.0
    %981 = vmatprep.subr.mxu0 0.0
    %982 = vmatpush1.msra.mxu0 0.0
    %983 = vmatprep.subr.mxu0 0.0
    %984 = vmatpush1.msra.mxu0 0.0
    %985 = vmatprep.subr.mxu0 0.0
    %986 = vmatpush1.msra.mxu0 0.0
    %987 = vmatprep.subr.mxu0 0.0
    %988 = vmatpush1.msra.mxu0 0.0
    %989 = vmatprep.subr.mxu0 0.0
    %990 = vmatpush1.msra.mxu0 0.0
    %991 = vmatprep.subr.mxu0 0.0
    %992 = vmatpush1.msra.mxu0 0.0
    %993 = vmatprep.subr.mxu0 0.0
    %994 = vmatpush1.msra.mxu0 0.0
    %995 = vmatprep.subr.mxu0 0.0
    %996 = vmatpush1.msra.mxu0 0.0
    %997 = vmatprep.subr.mxu0 0.0
    %998 = vmatpush1.msra.mxu0 0.0
    %999 = vmatprep.subr.mxu0 0.0
    %1000 = vmatpush1.msra.mxu0 0.0
    %1001 = vmatprep.subr.mxu0 0.0
    %1002 = vmatpush1.msra.mxu0 0.0
    %1003 = vmatprep.subr.mxu0 0.0
    %1004 = vmatpush1.msra.mxu0 0.0
    %1005 = vmatprep.subr.mxu0 0.0
    %1006 = vmatpush1.msra.mxu0 0.0
    %1007 = vmatprep.subr.mxu0 0.0
    %1008 = vmatpush1.msra.mxu0 0.0
    %1009 = vmatprep.subr.mxu0 0.0
    %1010 = vmatpush1.msra.mxu0 0.0
    %1011 = vmatprep.subr.mxu0 0.0
    %1012 = vmatpush1.msra.mxu0 0.0
    %1013 = vmatprep.subr.mxu0 0.0
    %1014 = vmatpush1.msra.mxu0 0.0
    %1015 = vmatprep.subr.mxu0 0.0
    %1016 = vmatpush1.msra.mxu0 0.0
    %1017 = vmatprep.subr.mxu0 0.0
    %1018 = vmatpush1.msra.mxu0 0.0
    %1019 = vmatprep.subr.mxu0 0.0
    %1020 = vmatpush1.msra.mxu0 0.0
    %1021 = vmatprep.subr.mxu0 0.0
    %1022 = vmatpush1.msra.mxu0 0.0
    %1023 = vmatprep.mubr.f32.mxu0 0.0
    %1024 = vmatmul.mubr.f32.gmra.mrb[0].mxu0 %v957
    %v1025 = vpop.f32.mrb[0].mxu0
    %v1026 = vadd.f32 0.0, %v1025
    %v1027 = vpop.f32.mrb[0].mxu0
    %1028 = vdwg.mxu0
    %v1030 = vrot.slane %v1026, 6
    %v1031 = vrot.slane %v1026, 7
    %v1032 = vrot.slane %v1026, 1
    %v1033 = vrot.slane %v1026, 2
    %v1034 = vrot.slane %v1026, 3
    %v1035 = vrot.slane %v1026, 4
    %v1036 = vrot.slane %v1026, 5
    %v1045 = vadd.f32 %v159, %v1030
    %v1046 = vadd.f32 %v164, %v1031
    %v1047 = vadd.f32 %v169, %v1026
    %v1048 = vadd.f32 %v174, %v1032
    %v1049 = vadd.f32 %v179, %v1033
    %v1050 = vadd.f32 %v184, %v1034
    %v1051 = vadd.f32 %v189, %v1035
    %v1052 = vadd.f32 %v194, %v1036
    %v1053 = vxor.u32 %v1045, 2147483648
    %v1054 = vxor.u32 %v1046, 2147483648
    %v1055 = vxor.u32 %v1047, 2147483648
    %v1056 = vxor.u32 %v1048, 2147483648
    %v1057 = vxor.u32 %v1049, 2147483648
    %v1058 = vxor.u32 %v1050, 2147483648
    %v1059 = vxor.u32 %v1051, 2147483648
    %v1060 = vxor.u32 %v1052, 2147483648
    %v1061 = vmul.f32 %v1053, 1.442695
    %v1062 = vpow.pop %v1061
    %v1063 = vmul.f32 %v1054, 1.442695
    %v1064 = vpow.pop %v1063
    %v1065 = vmul.f32 %v1055, 1.442695
    %v1066 = vpow.pop %v1065
    %v1067 = vmul.f32 %v1056, 1.442695
    %v1068 = vpow.pop %v1067
    %v1069 = vmul.f32 %v1057, 1.442695
    %v1070 = vpow.pop %v1069
    %v1071 = vmul.f32 %v1058, 1.442695
    %v1072 = vpow.pop %v1071
    %v1073 = vmul.f32 %v1059, 1.442695
    %v1074 = vpow.pop %v1073
    %v1075 = vmul.f32 %v1060, 1.442695
    %v1076 = vpow.pop %v1075
    %v1077 = vadd.f32 %v1062, 1.0
    %v1078 = vadd.f32 %v1064, 1.0
    %v1079 = vadd.f32 %v1066, 1.0
    %v1080 = vadd.f32 %v1068, 1.0
    %v1081 = vadd.f32 %v1070, 1.0
    %v1082 = vadd.f32 %v1072, 1.0
    %v1083 = vadd.f32 %v1074, 1.0
    %v1084 = vadd.f32 %v1076, 1.0
    %v1085 = vrcp.pop %v1077
    %v1086 = vmul.f32 1.0, %v1085
    %v1087 = vrcp.pop %v1078
    %v1088 = vmul.f32 1.0, %v1087
    %v1089 = vrcp.pop %v1079
    %v1090 = vmul.f32 1.0, %v1089
    %v1091 = vrcp.pop %v1080
    %v1092 = vmul.f32 1.0, %v1091
    %v1093 = vrcp.pop %v1081
    %v1094 = vmul.f32 1.0, %v1093
    %v1095 = vrcp.pop %v1082
    %v1096 = vmul.f32 1.0, %v1095
    %v1097 = vrcp.pop %v1083
    %v1098 = vmul.f32 1.0, %v1097
    %v1099 = vrcp.pop %v1084
    %v1100 = vmul.f32 1.0, %v1099
    %v1101 = vtanh.pop %v1045
    %v1102 = vtanh.pop %v1046
    %v1103 = vtanh.pop %v1047
    %v1104 = vtanh.pop %v1048
    %v1105 = vtanh.pop %v1049
    %v1106 = vtanh.pop %v1050
    %v1107 = vtanh.pop %v1051
    %v1108 = vtanh.pop %v1052
    %v1117 = vrot.slane %v844, 7
    %v1118 = vrot.slane %v845, 7
    %v1119 = vrot.slane %v846, 7
    %v1120 = vrot.slane %v847, 7
    %v1121 = vrot.slane %v848, 7
    %v1122 = vrot.slane %v849, 7
    %v1123 = vrot.slane %v850, 7
    %v1124 = vrot.slane %v851, 7
    %v1133 = vmul.f32 %v1086, %v1117
    %v1134 = vmul.f32 %v1088, %v1118
    %v1135 = vmul.f32 %v1090, %v1119
    %v1136 = vmul.f32 %v1092, %v1120
    %v1137 = vmul.f32 %v1094, %v1121
    %v1138 = vmul.f32 %v1096, %v1122
    %v1139 = vmul.f32 %v1098, %v1123
    %v1140 = vmul.f32 %v1100, %v1124
    %1149 = vrot.lane.b32.xlu0 %v1101, 64
    %v1150 = vpop.permute.xlu0 %1149
    %1151 = vrot.lane.b32.xlu0 %v1102, 64
    %v1152 = vpop.permute.xlu0 %1151
    %1153 = vrot.lane.b32.xlu0 %v1103, 64
    %v1154 = vpop.permute.xlu0 %1153
    %1155 = vrot.lane.b32.xlu0 %v1104, 64
    %v1156 = vpop.permute.xlu0 %1155
    %1157 = vrot.lane.b32.xlu0 %v1105, 64
    %v1158 = vpop.permute.xlu0 %1157
    %1159 = vrot.lane.b32.xlu0 %v1106, 64
    %v1160 = vpop.permute.xlu0 %1159
    %1161 = vrot.lane.b32.xlu0 %v1107, 64
    %v1162 = vpop.permute.xlu0 %1161
    %1163 = vrot.lane.b32.xlu0 %v1108, 64
    %v1164 = vpop.permute.xlu0 %1163
    %v1173 = vmul.f32 %v1086, %v1150
    %v1174 = vmul.f32 %v1088, %v1152
    %v1175 = vmul.f32 %v1090, %v1154
    %v1176 = vmul.f32 %v1092, %v1156
    %v1177 = vmul.f32 %v1094, %v1158
    %v1178 = vmul.f32 %v1096, %v1160
    %v1179 = vmul.f32 %v1098, %v1162
    %v1180 = vmul.f32 %v1100, %v1164
    %1189 = vrot.lane.b32.xlu0 %v1173, 32
    %v1190 = vpop.permute.xlu0 %1189
    %1191 = vrot.lane.b32.xlu0 %v1174, 32
    %v1192 = vpop.permute.xlu0 %1191
    %1193 = vrot.lane.b32.xlu0 %v1175, 32
    %v1194 = vpop.permute.xlu0 %1193
    %1195 = vrot.lane.b32.xlu0 %v1176, 32
    %v1196 = vpop.permute.xlu0 %1195
    %1197 = vrot.lane.b32.xlu0 %v1177, 32
    %v1198 = vpop.permute.xlu0 %1197
    %1199 = vrot.lane.b32.xlu0 %v1178, 32
    %v1200 = vpop.permute.xlu0 %1199
    %1201 = vrot.lane.b32.xlu0 %v1179, 32
    %v1202 = vpop.permute.xlu0 %1201
    %1203 = vrot.lane.b32.xlu0 %v1180, 32
    %v1204 = vpop.permute.xlu0 %1203
    %v1213 = vadd.f32 %v1133, %v1190
    %v1214 = vadd.f32 %v1134, %v1192
    %v1215 = vadd.f32 %v1135, %v1194
    %v1216 = vadd.f32 %v1136, %v1196
    %v1217 = vadd.f32 %v1137, %v1198
    %v1218 = vadd.f32 %v1138, %v1200
    %v1219 = vadd.f32 %v1139, %v1202
    %v1220 = vadd.f32 %v1140, %v1204
    %v1221 = vtanh.pop %v1213
    %v1222 = vtanh.pop %v1214
    %v1223 = vtanh.pop %v1215
    %v1224 = vtanh.pop %v1216
    %v1225 = vtanh.pop %v1217
    %v1226 = vtanh.pop %v1218
    %v1227 = vtanh.pop %v1219
    %v1228 = vtanh.pop %v1220
    %1237 = vrot.lane.b32.xlu0 %v1221, 64
    %v1238 = vpop.permute.xlu0 %1237
    %1239 = vrot.lane.b32.xlu0 %v1222, 64
    %v1240 = vpop.permute.xlu0 %1239
    %1241 = vrot.lane.b32.xlu0 %v1223, 64
    %v1242 = vpop.permute.xlu0 %1241
    %1243 = vrot.lane.b32.xlu0 %v1224, 64
    %v1244 = vpop.permute.xlu0 %1243
    %1245 = vrot.lane.b32.xlu0 %v1225, 64
    %v1246 = vpop.permute.xlu0 %1245
    %1247 = vrot.lane.b32.xlu0 %v1226, 64
    %v1248 = vpop.permute.xlu0 %1247
    %1249 = vrot.lane.b32.xlu0 %v1227, 64
    %v1250 = vpop.permute.xlu0 %1249
    %1251 = vrot.lane.b32.xlu0 %v1228, 64
    %v1252 = vpop.permute.xlu0 %1251
    %v1261 = vmul.f32 %v1086, %v1238
    %v1262 = vmul.f32 %v1088, %v1240
    %v1263 = vmul.f32 %v1090, %v1242
    %v1264 = vmul.f32 %v1092, %v1244
    %v1265 = vmul.f32 %v1094, %v1246
    %v1266 = vmul.f32 %v1096, %v1248
    %v1267 = vmul.f32 %v1098, %v1250
    %v1268 = vmul.f32 %v1100, %v1252
    %1277 = vrot.lane.b32.xlu0 %v1261, 32
    %v1278 = vpop.permute.xlu0 %1277
    %1279 = vrot.lane.b32.xlu0 %v1262, 32
    %v1280 = vpop.permute.xlu0 %1279
    %1281 = vrot.lane.b32.xlu0 %v1263, 32
    %v1282 = vpop.permute.xlu0 %1281
    %1283 = vrot.lane.b32.xlu0 %v1264, 32
    %v1284 = vpop.permute.xlu0 %1283
    %1285 = vrot.lane.b32.xlu0 %v1265, 32
    %v1286 = vpop.permute.xlu0 %1285
    %1287 = vrot.lane.b32.xlu0 %v1266, 32
    %v1288 = vpop.permute.xlu0 %1287
    %1289 = vrot.lane.b32.xlu0 %v1267, 32
    %v1290 = vpop.permute.xlu0 %1289
    %1291 = vrot.lane.b32.xlu0 %v1268, 32
    %v1292 = vpop.permute.xlu0 %1291
    %vm1301 = vcmask 256002
    %1302 = vst.msk [vmem:[#allocation4] sm:$0x4] %vm1301, %v1278
    %1303 = vst.msk [vmem:[#allocation4 + $0x8] sm:$0x4] %vm1301, %v1280
    %1304 = vst.msk [vmem:[#allocation4 + $0x10] sm:$0x4] %vm1301, %v1282
    %1305 = vst.msk [vmem:[#allocation4 + $0x18] sm:$0x4] %vm1301, %v1284
    %1306 = vst.msk [vmem:[#allocation4 + $0x20] sm:$0x4] %vm1301, %v1286
    %1307 = vst.msk [vmem:[#allocation4 + $0x28] sm:$0x4] %vm1301, %v1288
    %1308 = vst.msk [vmem:[#allocation4 + $0x30] sm:$0x4] %vm1301, %v1290
    %1309 = vst.msk [vmem:[#allocation4 + $0x38] sm:$0x4] %vm1301, %v1292
    %v1310 = vrot.slane %v1261, 2
    %v1311 = vrot.slane %v1262, 1
    %v1312 = vsel %vm566, %v1311, %v1310
    %v1313 = vsel %vm569, %v1263, %v1312
    %v1314 = vrot.slane %v1264, 7
    %v1315 = vsel %vm572, %v1314, %v1313
    %v1316 = vrot.slane %v1265, 6
    %v1317 = vsel %vm575, %v1316, %v1315
    %v1318 = vrot.slane %v1266, 5
    %v1319 = vsel %vm578, %v1318, %v1317
    %v1320 = vrot.slane %v1267, 4
    %v1321 = vsel %vm581, %v1320, %v1319
    %v1322 = vrot.slane %v1268, 3
    %v1323 = vsel %vm584, %v1322, %v1321
    %1324 = vrot.lane.b32.xlu0 %v1323, 32
    %v1325 = vpop.permute.xlu0 %1324
    %v1326 = vsel %vm67, %v1325, 0
    %1328 = vmatprep.subr.mxu0 0.0
    %1329 = vmatpush1.msra.mxu0 %v197
    %1330 = vmatprep.subr.mxu0 0.0
    %1331 = vmatpush1.msra.mxu0 %v198
    %1332 = vmatprep.subr.mxu0 0.0
    %1333 = vmatpush1.msra.mxu0 %v199
    %1334 = vmatprep.subr.mxu0 0.0
    %1335 = vmatpush1.msra.mxu0 %v200
    %1336 = vmatprep.subr.mxu0 0.0
    %1337 = vmatpush1.msra.mxu0 0.0
    %1338 = vmatprep.subr.mxu0 0.0
    %1339 = vmatpush1.msra.mxu0 0.0
    %1340 = vmatprep.subr.mxu0 0.0
    %1341 = vmatpush1.msra.mxu0 0.0
    %1342 = vmatprep.subr.mxu0 0.0
    %1343 = vmatpush1.msra.mxu0 0.0
    %1344 = vmatprep.subr.mxu0 0.0
    %1345 = vmatpush1.msra.mxu0 0.0
    %1346 = vmatprep.subr.mxu0 0.0
    %1347 = vmatpush1.msra.mxu0 0.0
    %1348 = vmatprep.subr.mxu0 0.0
    %1349 = vmatpush1.msra.mxu0 0.0
    %1350 = vmatprep.subr.mxu0 0.0
    %1351 = vmatpush1.msra.mxu0 0.0
    %1352 = vmatprep.subr.mxu0 0.0
    %1353 = vmatpush1.msra.mxu0 0.0
    %1354 = vmatprep.subr.mxu0 0.0
    %1355 = vmatpush1.msra.mxu0 0.0
    %1356 = vmatprep.subr.mxu0 0.0
    %1357 = vmatpush1.msra.mxu0 0.0
    %1358 = vmatprep.subr.mxu0 0.0
    %1359 = vmatpush1.msra.mxu0 0.0
    %1360 = vmatprep.subr.mxu0 0.0
    %1361 = vmatpush1.msra.mxu0 0.0
    %1362 = vmatprep.subr.mxu0 0.0
    %1363 = vmatpush1.msra.mxu0 0.0
    %1364 = vmatprep.subr.mxu0 0.0
    %1365 = vmatpush1.msra.mxu0 0.0
    %1366 = vmatprep.subr.mxu0 0.0
    %1367 = vmatpush1.msra.mxu0 0.0
    %1368 = vmatprep.subr.mxu0 0.0
    %1369 = vmatpush1.msra.mxu0 0.0
    %1370 = vmatprep.subr.mxu0 0.0
    %1371 = vmatpush1.msra.mxu0 0.0
    %1372 = vmatprep.subr.mxu0 0.0
    %1373 = vmatpush1.msra.mxu0 0.0
    %1374 = vmatprep.subr.mxu0 0.0
    %1375 = vmatpush1.msra.mxu0 0.0
    %1376 = vmatprep.subr.mxu0 0.0
    %1377 = vmatpush1.msra.mxu0 0.0
    %1378 = vmatprep.subr.mxu0 0.0
    %1379 = vmatpush1.msra.mxu0 0.0
    %1380 = vmatprep.subr.mxu0 0.0
    %1381 = vmatpush1.msra.mxu0 0.0
    %1382 = vmatprep.subr.mxu0 0.0
    %1383 = vmatpush1.msra.mxu0 0.0
    %1384 = vmatprep.subr.mxu0 0.0
    %1385 = vmatpush1.msra.mxu0 0.0
    %1386 = vmatprep.subr.mxu0 0.0
    %1387 = vmatpush1.msra.mxu0 0.0
    %1388 = vmatprep.subr.mxu0 0.0
    %1389 = vmatpush1.msra.mxu0 0.0
    %1390 = vmatprep.subr.mxu0 0.0
    %1391 = vmatpush1.msra.mxu0 0.0
    %1392 = vmatprep.mubr.f32.mxu0 0.0
    %1393 = vmatmul.mubr.f32.gmra.mrb[0].mxu0 %v1326
    %v1394 = vpop.f32.mrb[0].mxu0
    %v1395 = vadd.f32 0.0, %v1394
    %v1396 = vpop.f32.mrb[0].mxu0
    %1397 = vdwg.mxu0
    %v1399 = vrot.slane %v1395, 5
    %v1400 = vrot.slane %v1395, 6
    %v1401 = vrot.slane %v1395, 7
    %v1402 = vrot.slane %v1395, 1
    %v1403 = vrot.slane %v1395, 2
    %v1404 = vrot.slane %v1395, 3
    %v1405 = vrot.slane %v1395, 4
    %v1414 = vadd.f32 %v159, %v1399
    %v1415 = vadd.f32 %v164, %v1400
    %v1416 = vadd.f32 %v169, %v1401
    %v1417 = vadd.f32 %v174, %v1395
    %v1418 = vadd.f32 %v179, %v1402
    %v1419 = vadd.f32 %v184, %v1403
    %v1420 = vadd.f32 %v189, %v1404
    %v1421 = vadd.f32 %v194, %v1405
    %v1422 = vxor.u32 %v1414, 2147483648
    %v1423 = vxor.u32 %v1415, 2147483648
    %v1424 = vxor.u32 %v1416, 2147483648
    %v1425 = vxor.u32 %v1417, 2147483648
    %v1426 = vxor.u32 %v1418, 2147483648
    %v1427 = vxor.u32 %v1419, 2147483648
    %v1428 = vxor.u32 %v1420, 2147483648
    %v1429 = vxor.u32 %v1421, 2147483648
    %v1430 = vmul.f32 %v1422, 1.442695
    %v1431 = vpow.pop %v1430
    %v1432 = vmul.f32 %v1423, 1.442695
    %v1433 = vpow.pop %v1432
    %v1434 = vmul.f32 %v1424, 1.442695
    %v1435 = vpow.pop %v1434
    %v1436 = vmul.f32 %v1425, 1.442695
    %v1437 = vpow.pop %v1436
    %v1438 = vmul.f32 %v1426, 1.442695
    %v1439 = vpow.pop %v1438
    %v1440 = vmul.f32 %v1427, 1.442695
    %v1441 = vpow.pop %v1440
    %v1442 = vmul.f32 %v1428, 1.442695
    %v1443 = vpow.pop %v1442
    %v1444 = vmul.f32 %v1429, 1.442695
    %v1445 = vpow.pop %v1444
    %v1446 = vadd.f32 %v1431, 1.0
    %v1447 = vadd.f32 %v1433, 1.0
    %v1448 = vadd.f32 %v1435, 1.0
    %v1449 = vadd.f32 %v1437, 1.0
    %v1450 = vadd.f32 %v1439, 1.0
    %v1451 = vadd.f32 %v1441, 1.0
    %v1452 = vadd.f32 %v1443, 1.0
    %v1453 = vadd.f32 %v1445, 1.0
    %v1454 = vrcp.pop %v1446
    %v1455 = vmul.f32 1.0, %v1454
    %v1456 = vrcp.pop %v1447
    %v1457 = vmul.f32 1.0, %v1456
    %v1458 = vrcp.pop %v1448
    %v1459 = vmul.f32 1.0, %v1458
    %v1460 = vrcp.pop %v1449
    %v1461 = vmul.f32 1.0, %v1460
    %v1462 = vrcp.pop %v1450
    %v1463 = vmul.f32 1.0, %v1462
    %v1464 = vrcp.pop %v1451
    %v1465 = vmul.f32 1.0, %v1464
    %v1466 = vrcp.pop %v1452
    %v1467 = vmul.f32 1.0, %v1466
    %v1468 = vrcp.pop %v1453
    %v1469 = vmul.f32 1.0, %v1468
    %v1470 = vtanh.pop %v1414
    %v1471 = vtanh.pop %v1415
    %v1472 = vtanh.pop %v1416
    %v1473 = vtanh.pop %v1417
    %v1474 = vtanh.pop %v1418
    %v1475 = vtanh.pop %v1419
    %v1476 = vtanh.pop %v1420
    %v1477 = vtanh.pop %v1421
    %v1486 = vrot.slane %v1213, 7
    %v1487 = vrot.slane %v1214, 7
    %v1488 = vrot.slane %v1215, 7
    %v1489 = vrot.slane %v1216, 7
    %v1490 = vrot.slane %v1217, 7
    %v1491 = vrot.slane %v1218, 7
    %v1492 = vrot.slane %v1219, 7
    %v1493 = vrot.slane %v1220, 7
    %v1502 = vmul.f32 %v1455, %v1486
    %v1503 = vmul.f32 %v1457, %v1487
    %v1504 = vmul.f32 %v1459, %v1488
    %v1505 = vmul.f32 %v1461, %v1489
    %v1506 = vmul.f32 %v1463, %v1490
    %v1507 = vmul.f32 %v1465, %v1491
    %v1508 = vmul.f32 %v1467, %v1492
    %v1509 = vmul.f32 %v1469, %v1493
    %1518 = vrot.lane.b32.xlu0 %v1470, 64
    %v1519 = vpop.permute.xlu0 %1518
    %1520 = vrot.lane.b32.xlu0 %v1471, 64
    %v1521 = vpop.permute.xlu0 %1520
    %1522 = vrot.lane.b32.xlu0 %v1472, 64
    %v1523 = vpop.permute.xlu0 %1522
    %1524 = vrot.lane.b32.xlu0 %v1473, 64
    %v1525 = vpop.permute.xlu0 %1524
    %1526 = vrot.lane.b32.xlu0 %v1474, 64
    %v1527 = vpop.permute.xlu0 %1526
    %1528 = vrot.lane.b32.xlu0 %v1475, 64
    %v1529 = vpop.permute.xlu0 %1528
    %1530 = vrot.lane.b32.xlu0 %v1476, 64
    %v1531 = vpop.permute.xlu0 %1530
    %1532 = vrot.lane.b32.xlu0 %v1477, 64
    %v1533 = vpop.permute.xlu0 %1532
    %v1542 = vmul.f32 %v1455, %v1519
    %v1543 = vmul.f32 %v1457, %v1521
    %v1544 = vmul.f32 %v1459, %v1523
    %v1545 = vmul.f32 %v1461, %v1525
    %v1546 = vmul.f32 %v1463, %v1527
    %v1547 = vmul.f32 %v1465, %v1529
    %v1548 = vmul.f32 %v1467, %v1531
    %v1549 = vmul.f32 %v1469, %v1533
    %1558 = vrot.lane.b32.xlu0 %v1542, 32
    %v1559 = vpop.permute.xlu0 %1558
    %1560 = vrot.lane.b32.xlu0 %v1543, 32
    %v1561 = vpop.permute.xlu0 %1560
    %1562 = vrot.lane.b32.xlu0 %v1544, 32
    %v1563 = vpop.permute.xlu0 %1562
    %1564 = vrot.lane.b32.xlu0 %v1545, 32
    %v1565 = vpop.permute.xlu0 %1564
    %1566 = vrot.lane.b32.xlu0 %v1546, 32
    %v1567 = vpop.permute.xlu0 %1566
    %1568 = vrot.lane.b32.xlu0 %v1547, 32
    %v1569 = vpop.permute.xlu0 %1568
    %1570 = vrot.lane.b32.xlu0 %v1548, 32
    %v1571 = vpop.permute.xlu0 %1570
    %1572 = vrot.lane.b32.xlu0 %v1549, 32
    %v1573 = vpop.permute.xlu0 %1572
    %v1582 = vadd.f32 %v1502, %v1559
    %v1583 = vadd.f32 %v1503, %v1561
    %v1584 = vadd.f32 %v1504, %v1563
    %v1585 = vadd.f32 %v1505, %v1565
    %v1586 = vadd.f32 %v1506, %v1567
    %v1587 = vadd.f32 %v1507, %v1569
    %v1588 = vadd.f32 %v1508, %v1571
    %v1589 = vadd.f32 %v1509, %v1573
    %v1590 = vtanh.pop %v1582
    %v1591 = vtanh.pop %v1583
    %v1592 = vtanh.pop %v1584
    %v1593 = vtanh.pop %v1585
    %v1594 = vtanh.pop %v1586
    %v1595 = vtanh.pop %v1587
    %v1596 = vtanh.pop %v1588
    %v1597 = vtanh.pop %v1589
    %1606 = vrot.lane.b32.xlu0 %v1590, 64
    %v1607 = vpop.permute.xlu0 %1606
    %1608 = vrot.lane.b32.xlu0 %v1591, 64
    %v1609 = vpop.permute.xlu0 %1608
    %1610 = vrot.lane.b32.xlu0 %v1592, 64
    %v1611 = vpop.permute.xlu0 %1610
    %1612 = vrot.lane.b32.xlu0 %v1593, 64
    %v1613 = vpop.permute.xlu0 %1612
    %1614 = vrot.lane.b32.xlu0 %v1594, 64
    %v1615 = vpop.permute.xlu0 %1614
    %1616 = vrot.lane.b32.xlu0 %v1595, 64
    %v1617 = vpop.permute.xlu0 %1616
    %1618 = vrot.lane.b32.xlu0 %v1596, 64
    %v1619 = vpop.permute.xlu0 %1618
    %1620 = vrot.lane.b32.xlu0 %v1597, 64
    %v1621 = vpop.permute.xlu0 %1620
    %v1630 = vmul.f32 %v1455, %v1607
    %v1631 = vmul.f32 %v1457, %v1609
    %v1632 = vmul.f32 %v1459, %v1611
    %v1633 = vmul.f32 %v1461, %v1613
    %v1634 = vmul.f32 %v1463, %v1615
    %v1635 = vmul.f32 %v1465, %v1617
    %v1636 = vmul.f32 %v1467, %v1619
    %v1637 = vmul.f32 %v1469, %v1621
    %1646 = vrot.lane.b32.xlu0 %v1630, 32
    %v1647 = vpop.permute.xlu0 %1646
    %1648 = vrot.lane.b32.xlu0 %v1631, 32
    %v1649 = vpop.permute.xlu0 %1648
    %1650 = vrot.lane.b32.xlu0 %v1632, 32
    %v1651 = vpop.permute.xlu0 %1650
    %1652 = vrot.lane.b32.xlu0 %v1633, 32
    %v1653 = vpop.permute.xlu0 %1652
    %1654 = vrot.lane.b32.xlu0 %v1634, 32
    %v1655 = vpop.permute.xlu0 %1654
    %1656 = vrot.lane.b32.xlu0 %v1635, 32
    %v1657 = vpop.permute.xlu0 %1656
    %1658 = vrot.lane.b32.xlu0 %v1636, 32
    %v1659 = vpop.permute.xlu0 %1658
    %1660 = vrot.lane.b32.xlu0 %v1637, 32
    %v1661 = vpop.permute.xlu0 %1660
    %vm1670 = vcmask 257027
    %1671 = vst.msk [vmem:[#allocation4] sm:$0x8] %vm1670, %v1647
    %1672 = vst.msk [vmem:[#allocation4 + $0x8] sm:$0x8] %vm1670, %v1649
    %1673 = vst.msk [vmem:[#allocation4 + $0x10] sm:$0x8] %vm1670, %v1651
    %1674 = vst.msk [vmem:[#allocation4 + $0x18] sm:$0x8] %vm1670, %v1653
    %1675 = vst.msk [vmem:[#allocation4 + $0x20] sm:$0x8] %vm1670, %v1655
    %1676 = vst.msk [vmem:[#allocation4 + $0x28] sm:$0x8] %vm1670, %v1657
    %1677 = vst.msk [vmem:[#allocation4 + $0x30] sm:$0x8] %vm1670, %v1659
    %1678 = vst.msk [vmem:[#allocation4 + $0x38] sm:$0x8] %vm1670, %v1661
    %v1679 = vrot.slane %v1630, 3
    %v1680 = vrot.slane %v1631, 2
    %v1681 = vsel %vm566, %v1680, %v1679
    %v1682 = vrot.slane %v1632, 1
    %v1683 = vsel %vm569, %v1682, %v1681
    %v1684 = vsel %vm572, %v1633, %v1683
    %v1685 = vrot.slane %v1634, 7
    %v1686 = vsel %vm575, %v1685, %v1684
    %v1687 = vrot.slane %v1635, 6
    %v1688 = vsel %vm578, %v1687, %v1686
    %v1689 = vrot.slane %v1636, 5
    %v1690 = vsel %vm581, %v1689, %v1688
    %v1691 = vrot.slane %v1637, 4
    %v1692 = vsel %vm584, %v1691, %v1690
    %1693 = vrot.lane.b32.xlu0 %v1692, 32
    %v1694 = vpop.permute.xlu0 %1693
    %v1695 = vsel %vm67, %v1694, 0
    %1697 = vmatprep.subr.mxu0 0.0
    %1698 = vmatpush1.msra.mxu0 %v197
    %1699 = vmatprep.subr.mxu0 0.0
    %1700 = vmatpush1.msra.mxu0 %v198
    %1701 = vmatprep.subr.mxu0 0.0
    %1702 = vmatpush1.msra.mxu0 %v199
    %1703 = vmatprep.subr.mxu0 0.0
    %1704 = vmatpush1.msra.mxu0 %v200
    %1705 = vmatprep.subr.mxu0 0.0
    %1706 = vmatpush1.msra.mxu0 0.0
    %1707 = vmatprep.subr.mxu0 0.0
    %1708 = vmatpush1.msra.mxu0 0.0
    %1709 = vmatprep.subr.mxu0 0.0
    %1710 = vmatpush1.msra.mxu0 0.0
    %1711 = vmatprep.subr.mxu0 0.0
    %1712 = vmatpush1.msra.mxu0 0.0
    %1713 = vmatprep.subr.mxu0 0.0
    %1714 = vmatpush1.msra.mxu0 0.0
    %1715 = vmatprep.subr.mxu0 0.0
    %1716 = vmatpush1.msra.mxu0 0.0
    %1717 = vmatprep.subr.mxu0 0.0
    %1718 = vmatpush1.msra.mxu0 0.0
    %1719 = vmatprep.subr.mxu0 0.0
    %1720 = vmatpush1.msra.mxu0 0.0
    %1721 = vmatprep.subr.mxu0 0.0
    %1722 = vmatpush1.msra.mxu0 0.0
    %1723 = vmatprep.subr.mxu0 0.0
    %1724 = vmatpush1.msra.mxu0 0.0
    %1725 = vmatprep.subr.mxu0 0.0
    %1726 = vmatpush1.msra.mxu0 0.0
    %1727 = vmatprep.subr.mxu0 0.0
    %1728 = vmatpush1.msra.mxu0 0.0
    %1729 = vmatprep.subr.mxu0 0.0
    %1730 = vmatpush1.msra.mxu0 0.0
    %1731 = vmatprep.subr.mxu0 0.0
    %1732 = vmatpush1.msra.mxu0 0.0
    %1733 = vmatprep.subr.mxu0 0.0
    %1734 = vmatpush1.msra.mxu0 0.0
    %1735 = vmatprep.subr.mxu0 0.0
    %1736 = vmatpush1.msra.mxu0 0.0
    %1737 = vmatprep.subr.mxu0 0.0
    %1738 = vmatpush1.msra.mxu0 0.0
    %1739 = vmatprep.subr.mxu0 0.0
    %1740 = vmatpush1.msra.mxu0 0.0
    %1741 = vmatprep.subr.mxu0 0.0
    %1742 = vmatpush1.msra.mxu0 0.0
    %1743 = vmatprep.subr.mxu0 0.0
    %1744 = vmatpush1.msra.mxu0 0.0
    %1745 = vmatprep.subr.mxu0 0.0
    %1746 = vmatpush1.msra.mxu0 0.0
    %1747 = vmatprep.subr.mxu0 0.0
    %1748 = vmatpush1.msra.mxu0 0.0
    %1749 = vmatprep.subr.mxu0 0.0
    %1750 = vmatpush1.msra.mxu0 0.0
    %1751 = vmatprep.subr.mxu0 0.0
    %1752 = vmatpush1.msra.mxu0 0.0
    %1753 = vmatprep.subr.mxu0 0.0
    %1754 = vmatpush1.msra.mxu0 0.0
    %1755 = vmatprep.subr.mxu0 0.0
    %1756 = vmatpush1.msra.mxu0 0.0
    %1757 = vmatprep.subr.mxu0 0.0
    %1758 = vmatpush1.msra.mxu0 0.0
    %1759 = vmatprep.subr.mxu0 0.0
    %1760 = vmatpush1.msra.mxu0 0.0
    %1761 = vmatprep.mubr.f32.mxu0 0.0
    %1762 = vmatmul.mubr.f32.gmra.mrb[0].mxu0 %v1695
    %v1763 = vpop.f32.mrb[0].mxu0
    %v1764 = vadd.f32 0.0, %v1763
    %v1765 = vpop.f32.mrb[0].mxu0
    %1766 = vdwg.mxu0
    %v1768 = vrot.slane %v1764, 4
    %v1769 = vrot.slane %v1764, 5
    %v1770 = vrot.slane %v1764, 6
    %v1771 = vrot.slane %v1764, 7
    %v1772 = vrot.slane %v1764, 1
    %v1773 = vrot.slane %v1764, 2
    %v1774 = vrot.slane %v1764, 3
    %v1783 = vadd.f32 %v159, %v1768
    %v1784 = vadd.f32 %v164, %v1769
    %v1785 = vadd.f32 %v169, %v1770
    %v1786 = vadd.f32 %v174, %v1771
    %v1787 = vadd.f32 %v179, %v1764
    %v1788 = vadd.f32 %v184, %v1772
    %v1789 = vadd.f32 %v189, %v1773
    %v1790 = vadd.f32 %v194, %v1774
    %v1791 = vxor.u32 %v1783, 2147483648
    %v1792 = vxor.u32 %v1784, 2147483648
    %v1793 = vxor.u32 %v1785, 2147483648
    %v1794 = vxor.u32 %v1786, 2147483648
    %v1795 = vxor.u32 %v1787, 2147483648
    %v1796 = vxor.u32 %v1788, 2147483648
    %v1797 = vxor.u32 %v1789, 2147483648
    %v1798 = vxor.u32 %v1790, 2147483648
    %v1799 = vmul.f32 %v1791, 1.442695
    %v1800 = vpow.pop %v1799
    %v1801 = vmul.f32 %v1792, 1.442695
    %v1802 = vpow.pop %v1801
    %v1803 = vmul.f32 %v1793, 1.442695
    %v1804 = vpow.pop %v1803
    %v1805 = vmul.f32 %v1794, 1.442695
    %v1806 = vpow.pop %v1805
    %v1807 = vmul.f32 %v1795, 1.442695
    %v1808 = vpow.pop %v1807
    %v1809 = vmul.f32 %v1796, 1.442695
    %v1810 = vpow.pop %v1809
    %v1811 = vmul.f32 %v1797, 1.442695
    %v1812 = vpow.pop %v1811
    %v1813 = vmul.f32 %v1798, 1.442695
    %v1814 = vpow.pop %v1813
    %v1815 = vadd.f32 %v1800, 1.0
    %v1816 = vadd.f32 %v1802, 1.0
    %v1817 = vadd.f32 %v1804, 1.0
    %v1818 = vadd.f32 %v1806, 1.0
    %v1819 = vadd.f32 %v1808, 1.0
    %v1820 = vadd.f32 %v1810, 1.0
    %v1821 = vadd.f32 %v1812, 1.0
    %v1822 = vadd.f32 %v1814, 1.0
    %v1823 = vrcp.pop %v1815
    %v1824 = vmul.f32 1.0, %v1823
    %v1825 = vrcp.pop %v1816
    %v1826 = vmul.f32 1.0, %v1825
    %v1827 = vrcp.pop %v1817
    %v1828 = vmul.f32 1.0, %v1827
    %v1829 = vrcp.pop %v1818
    %v1830 = vmul.f32 1.0, %v1829
    %v1831 = vrcp.pop %v1819
    %v1832 = vmul.f32 1.0, %v1831
    %v1833 = vrcp.pop %v1820
    %v1834 = vmul.f32 1.0, %v1833
    %v1835 = vrcp.pop %v1821
    %v1836 = vmul.f32 1.0, %v1835
    %v1837 = vrcp.pop %v1822
    %v1838 = vmul.f32 1.0, %v1837
    %v1839 = vtanh.pop %v1783
    %v1840 = vtanh.pop %v1784
    %v1841 = vtanh.pop %v1785
    %v1842 = vtanh.pop %v1786
    %v1843 = vtanh.pop %v1787
    %v1844 = vtanh.pop %v1788
    %v1845 = vtanh.pop %v1789
    %v1846 = vtanh.pop %v1790
    %v1855 = vrot.slane %v1582, 7
    %v1856 = vrot.slane %v1583, 7
    %v1857 = vrot.slane %v1584, 7
    %v1858 = vrot.slane %v1585, 7
    %v1859 = vrot.slane %v1586, 7
    %v1860 = vrot.slane %v1587, 7
    %v1861 = vrot.slane %v1588, 7
    %v1862 = vrot.slane %v1589, 7
    %v1871 = vmul.f32 %v1824, %v1855
    %v1872 = vmul.f32 %v1826, %v1856
    %v1873 = vmul.f32 %v1828, %v1857
    %v1874 = vmul.f32 %v1830, %v1858
    %v1875 = vmul.f32 %v1832, %v1859
    %v1876 = vmul.f32 %v1834, %v1860
    %v1877 = vmul.f32 %v1836, %v1861
    %v1878 = vmul.f32 %v1838, %v1862
    %1887 = vrot.lane.b32.xlu0 %v1839, 64
    %v1888 = vpop.permute.xlu0 %1887
    %1889 = vrot.lane.b32.xlu0 %v1840, 64
    %v1890 = vpop.permute.xlu0 %1889
    %1891 = vrot.lane.b32.xlu0 %v1841, 64
    %v1892 = vpop.permute.xlu0 %1891
    %1893 = vrot.lane.b32.xlu0 %v1842, 64
    %v1894 = vpop.permute.xlu0 %1893
    %1895 = vrot.lane.b32.xlu0 %v1843, 64
    %v1896 = vpop.permute.xlu0 %1895
    %1897 = vrot.lane.b32.xlu0 %v1844, 64
    %v1898 = vpop.permute.xlu0 %1897
    %1899 = vrot.lane.b32.xlu0 %v1845, 64
    %v1900 = vpop.permute.xlu0 %1899
    %1901 = vrot.lane.b32.xlu0 %v1846, 64
    %v1902 = vpop.permute.xlu0 %1901
    %v1911 = vmul.f32 %v1824, %v1888
    %v1912 = vmul.f32 %v1826, %v1890
    %v1913 = vmul.f32 %v1828, %v1892
    %v1914 = vmul.f32 %v1830, %v1894
    %v1915 = vmul.f32 %v1832, %v1896
    %v1916 = vmul.f32 %v1834, %v1898
    %v1917 = vmul.f32 %v1836, %v1900
    %v1918 = vmul.f32 %v1838, %v1902
    %1927 = vrot.lane.b32.xlu0 %v1911, 32
    %v1928 = vpop.permute.xlu0 %1927
    %1929 = vrot.lane.b32.xlu0 %v1912, 32
    %v1930 = vpop.permute.xlu0 %1929
    %1931 = vrot.lane.b32.xlu0 %v1913, 32
    %v1932 = vpop.permute.xlu0 %1931
    %1933 = vrot.lane.b32.xlu0 %v1914, 32
    %v1934 = vpop.permute.xlu0 %1933
    %1935 = vrot.lane.b32.xlu0 %v1915, 32
    %v1936 = vpop.permute.xlu0 %1935
    %1937 = vrot.lane.b32.xlu0 %v1916, 32
    %v1938 = vpop.permute.xlu0 %1937
    %1939 = vrot.lane.b32.xlu0 %v1917, 32
    %v1940 = vpop.permute.xlu0 %1939
    %1941 = vrot.lane.b32.xlu0 %v1918, 32
    %v1942 = vpop.permute.xlu0 %1941
    %v1951 = vadd.f32 %v1871, %v1928
    %v1952 = vadd.f32 %v1872, %v1930
    %v1953 = vadd.f32 %v1873, %v1932
    %v1954 = vadd.f32 %v1874, %v1934
    %v1955 = vadd.f32 %v1875, %v1936
    %v1956 = vadd.f32 %v1876, %v1938
    %v1957 = vadd.f32 %v1877, %v1940
    %v1958 = vadd.f32 %v1878, %v1942
    %v1959 = vtanh.pop %v1951
    %v1960 = vtanh.pop %v1952
    %v1961 = vtanh.pop %v1953
    %v1962 = vtanh.pop %v1954
    %v1963 = vtanh.pop %v1955
    %v1964 = vtanh.pop %v1956
    %v1965 = vtanh.pop %v1957
    %v1966 = vtanh.pop %v1958
    %1975 = vrot.lane.b32.xlu0 %v1959, 64
    %v1976 = vpop.permute.xlu0 %1975
    %1977 = vrot.lane.b32.xlu0 %v1960, 64
    %v1978 = vpop.permute.xlu0 %1977
    %1979 = vrot.lane.b32.xlu0 %v1961, 64
    %v1980 = vpop.permute.xlu0 %1979
    %1981 = vrot.lane.b32.xlu0 %v1962, 64
    %v1982 = vpop.permute.xlu0 %1981
    %1983 = vrot.lane.b32.xlu0 %v1963, 64
    %v1984 = vpop.permute.xlu0 %1983
    %1985 = vrot.lane.b32.xlu0 %v1964, 64
    %v1986 = vpop.permute.xlu0 %1985
    %1987 = vrot.lane.b32.xlu0 %v1965, 64
    %v1988 = vpop.permute.xlu0 %1987
    %1989 = vrot.lane.b32.xlu0 %v1966, 64
    %v1990 = vpop.permute.xlu0 %1989
    %v1999 = vmul.f32 %v1824, %v1976
    %v2000 = vmul.f32 %v1826, %v1978
    %v2001 = vmul.f32 %v1828, %v1980
    %v2002 = vmul.f32 %v1830, %v1982
    %v2003 = vmul.f32 %v1832, %v1984
    %v2004 = vmul.f32 %v1834, %v1986
    %v2005 = vmul.f32 %v1836, %v1988
    %v2006 = vmul.f32 %v1838, %v1990
    %2015 = vrot.lane.b32.xlu0 %v1999, 32
    %v2016 = vpop.permute.xlu0 %2015
    %2017 = vrot.lane.b32.xlu0 %v2000, 32
    %v2018 = vpop.permute.xlu0 %2017
    %2019 = vrot.lane.b32.xlu0 %v2001, 32
    %v2020 = vpop.permute.xlu0 %2019
    %2021 = vrot.lane.b32.xlu0 %v2002, 32
    %v2022 = vpop.permute.xlu0 %2021
    %2023 = vrot.lane.b32.xlu0 %v2003, 32
    %v2024 = vpop.permute.xlu0 %2023
    %2025 = vrot.lane.b32.xlu0 %v2004, 32
    %v2026 = vpop.permute.xlu0 %2025
    %2027 = vrot.lane.b32.xlu0 %v2005, 32
    %v2028 = vpop.permute.xlu0 %2027
    %2029 = vrot.lane.b32.xlu0 %v2006, 32
    %v2030 = vpop.permute.xlu0 %2029
    %vm2039 = vcmask 258052
    %2040 = vst.msk [vmem:[#allocation4] sm:$0x10] %vm2039, %v2016
    %2041 = vst.msk [vmem:[#allocation4 + $0x8] sm:$0x10] %vm2039, %v2018
    %2042 = vst.msk [vmem:[#allocation4 + $0x10] sm:$0x10] %vm2039, %v2020
    %2043 = vst.msk [vmem:[#allocation4 + $0x18] sm:$0x10] %vm2039, %v2022
    %2044 = vst.msk [vmem:[#allocation4 + $0x20] sm:$0x10] %vm2039, %v2024
    %2045 = vst.msk [vmem:[#allocation4 + $0x28] sm:$0x10] %vm2039, %v2026
    %2046 = vst.msk [vmem:[#allocation4 + $0x30] sm:$0x10] %vm2039, %v2028
    %2047 = vst.msk [vmem:[#allocation4 + $0x38] sm:$0x10] %vm2039, %v2030
    %v2048 = vrot.slane %v1999, 4
    %v2049 = vrot.slane %v2000, 3
    %v2050 = vsel %vm566, %v2049, %v2048
    %v2051 = vrot.slane %v2001, 2
    %v2052 = vsel %vm569, %v2051, %v2050
    %v2053 = vrot.slane %v2002, 1
    %v2054 = vsel %vm572, %v2053, %v2052
    %v2055 = vsel %vm575, %v2003, %v2054
    %v2056 = vrot.slane %v2004, 7
    %v2057 = vsel %vm578, %v2056, %v2055
    %v2058 = vrot.slane %v2005, 6
    %v2059 = vsel %vm581, %v2058, %v2057
    %v2060 = vrot.slane %v2006, 5
    %v2061 = vsel %vm584, %v2060, %v2059
    %2062 = vrot.lane.b32.xlu0 %v2061, 32
    %v2063 = vpop.permute.xlu0 %2062
    %v2064 = vsel %vm67, %v2063, 0
    %2066 = vmatprep.subr.mxu0 0.0
    %2067 = vmatpush1.msra.mxu0 %v197
    %2068 = vmatprep.subr.mxu0 0.0
    %2069 = vmatpush1.msra.mxu0 %v198
    %2070 = vmatprep.subr.mxu0 0.0
    %2071 = vmatpush1.msra.mxu0 %v199
    %2072 = vmatprep.subr.mxu0 0.0
    %2073 = vmatpush1.msra.mxu0 %v200
    %2074 = vmatprep.subr.mxu0 0.0
    %2075 = vmatpush1.msra.mxu0 0.0
    %2076 = vmatprep.subr.mxu0 0.0
    %2077 = vmatpush1.msra.mxu0 0.0
    %2078 = vmatprep.subr.mxu0 0.0
    %2079 = vmatpush1.msra.mxu0 0.0
    %2080 = vmatprep.subr.mxu0 0.0
    %2081 = vmatpush1.msra.mxu0 0.0
    %2082 = vmatprep.subr.mxu0 0.0
    %2083 = vmatpush1.msra.mxu0 0.0
    %2084 = vmatprep.subr.mxu0 0.0
    %2085 = vmatpush1.msra.mxu0 0.0
    %2086 = vmatprep.subr.mxu0 0.0
    %2087 = vmatpush1.msra.mxu0 0.0
    %2088 = vmatprep.subr.mxu0 0.0
    %2089 = vmatpush1.msra.mxu0 0.0
    %2090 = vmatprep.subr.mxu0 0.0
    %2091 = vmatpush1.msra.mxu0 0.0
    %2092 = vmatprep.subr.mxu0 0.0
    %2093 = vmatpush1.msra.mxu0 0.0
    %2094 = vmatprep.subr.mxu0 0.0
    %2095 = vmatpush1.msra.mxu0 0.0
    %2096 = vmatprep.subr.mxu0 0.0
    %2097 = vmatpush1.msra.mxu0 0.0
    %2098 = vmatprep.subr.mxu0 0.0
    %2099 = vmatpush1.msra.mxu0 0.0
    %2100 = vmatprep.subr.mxu0 0.0
    %2101 = vmatpush1.msra.mxu0 0.0
    %2102 = vmatprep.subr.mxu0 0.0
    %2103 = vmatpush1.msra.mxu0 0.0
    %2104 = vmatprep.subr.mxu0 0.0
    %2105 = vmatpush1.msra.mxu0 0.0
    %2106 = vmatprep.subr.mxu0 0.0
    %2107 = vmatpush1.msra.mxu0 0.0
    %2108 = vmatprep.subr.mxu0 0.0
    %2109 = vmatpush1.msra.mxu0 0.0
    %2110 = vmatprep.subr.mxu0 0.0
    %2111 = vmatpush1.msra.mxu0 0.0
    %2112 = vmatprep.subr.mxu0 0.0
    %2113 = vmatpush1.msra.mxu0 0.0
    %2114 = vmatprep.subr.mxu0 0.0
    %2115 = vmatpush1.msra.mxu0 0.0
    %2116 = vmatprep.subr.mxu0 0.0
    %2117 = vmatpush1.msra.mxu0 0.0
    %2118 = vmatprep.subr.mxu0 0.0
    %2119 = vmatpush1.msra.mxu0 0.0
    %2120 = vmatprep.subr.mxu0 0.0
    %2121 = vmatpush1.msra.mxu0 0.0
    %2122 = vmatprep.subr.mxu0 0.0
    %2123 = vmatpush1.msra.mxu0 0.0
    %2124 = vmatprep.subr.mxu0 0.0
    %2125 = vmatpush1.msra.mxu0 0.0
    %2126 = vmatprep.subr.mxu0 0.0
    %2127 = vmatpush1.msra.mxu0 0.0
    %2128 = vmatprep.subr.mxu0 0.0
    %2129 = vmatpush1.msra.mxu0 0.0
    %2130 = vmatprep.mubr.f32.mxu0 0.0
    %2131 = vmatmul.mubr.f32.gmra.mrb[0].mxu0 %v2064
    %v2132 = vpop.f32.mrb[0].mxu0
    %v2133 = vadd.f32 0.0, %v2132
    %v2134 = vpop.f32.mrb[0].mxu0
    %2135 = vdwg.mxu0
    %v2137 = vrot.slane %v2133, 3
    %v2138 = vrot.slane %v2133, 4
    %v2139 = vrot.slane %v2133, 5
    %v2140 = vrot.slane %v2133, 6
    %v2141 = vrot.slane %v2133, 7
    %v2142 = vrot.slane %v2133, 1
    %v2143 = vrot.slane %v2133, 2
    %v2152 = vadd.f32 %v159, %v2137
    %v2153 = vadd.f32 %v164, %v2138
    %v2154 = vadd.f32 %v169, %v2139
    %v2155 = vadd.f32 %v174, %v2140
    %v2156 = vadd.f32 %v179, %v2141
    %v2157 = vadd.f32 %v184, %v2133
    %v2158 = vadd.f32 %v189, %v2142
    %v2159 = vadd.f32 %v194, %v2143
    %v2160 = vxor.u32 %v2152, 2147483648
    %v2161 = vxor.u32 %v2153, 2147483648
    %v2162 = vxor.u32 %v2154, 2147483648
    %v2163 = vxor.u32 %v2155, 2147483648
    %v2164 = vxor.u32 %v2156, 2147483648
    %v2165 = vxor.u32 %v2157, 2147483648
    %v2166 = vxor.u32 %v2158, 2147483648
    %v2167 = vxor.u32 %v2159, 2147483648
    %v2168 = vmul.f32 %v2160, 1.442695
    %v2169 = vpow.pop %v2168
    %v2170 = vmul.f32 %v2161, 1.442695
    %v2171 = vpow.pop %v2170
    %v2172 = vmul.f32 %v2162, 1.442695
    %v2173 = vpow.pop %v2172
    %v2174 = vmul.f32 %v2163, 1.442695
    %v2175 = vpow.pop %v2174
    %v2176 = vmul.f32 %v2164, 1.442695
    %v2177 = vpow.pop %v2176
    %v2178 = vmul.f32 %v2165, 1.442695
    %v2179 = vpow.pop %v2178
    %v2180 = vmul.f32 %v2166, 1.442695
    %v2181 = vpow.pop %v2180
    %v2182 = vmul.f32 %v2167, 1.442695
    %v2183 = vpow.pop %v2182
    %v2184 = vadd.f32 %v2169, 1.0
    %v2185 = vadd.f32 %v2171, 1.0
    %v2186 = vadd.f32 %v2173, 1.0
    %v2187 = vadd.f32 %v2175, 1.0
    %v2188 = vadd.f32 %v2177, 1.0
    %v2189 = vadd.f32 %v2179, 1.0
    %v2190 = vadd.f32 %v2181, 1.0
    %v2191 = vadd.f32 %v2183, 1.0
    %v2192 = vrcp.pop %v2184
    %v2193 = vmul.f32 1.0, %v2192
    %v2194 = vrcp.pop %v2185
    %v2195 = vmul.f32 1.0, %v2194
    %v2196 = vrcp.pop %v2186
    %v2197 = vmul.f32 1.0, %v2196
    %v2198 = vrcp.pop %v2187
    %v2199 = vmul.f32 1.0, %v2198
    %v2200 = vrcp.pop %v2188
    %v2201 = vmul.f32 1.0, %v2200
    %v2202 = vrcp.pop %v2189
    %v2203 = vmul.f32 1.0, %v2202
    %v2204 = vrcp.pop %v2190
    %v2205 = vmul.f32 1.0, %v2204
    %v2206 = vrcp.pop %v2191
    %v2207 = vmul.f32 1.0, %v2206
    %v2208 = vtanh.pop %v2152
    %v2209 = vtanh.pop %v2153
    %v2210 = vtanh.pop %v2154
    %v2211 = vtanh.pop %v2155
    %v2212 = vtanh.pop %v2156
    %v2213 = vtanh.pop %v2157
    %v2214 = vtanh.pop %v2158
    %v2215 = vtanh.pop %v2159
    %v2224 = vrot.slane %v1951, 7
    %v2225 = vrot.slane %v1952, 7
    %v2226 = vrot.slane %v1953, 7
    %v2227 = vrot.slane %v1954, 7
    %v2228 = vrot.slane %v1955, 7
    %v2229 = vrot.slane %v1956, 7
    %v2230 = vrot.slane %v1957, 7
    %v2231 = vrot.slane %v1958, 7
    %v2240 = vmul.f32 %v2193, %v2224
    %v2241 = vmul.f32 %v2195, %v2225
    %v2242 = vmul.f32 %v2197, %v2226
    %v2243 = vmul.f32 %v2199, %v2227
    %v2244 = vmul.f32 %v2201, %v2228
    %v2245 = vmul.f32 %v2203, %v2229
    %v2246 = vmul.f32 %v2205, %v2230
    %v2247 = vmul.f32 %v2207, %v2231
    %2256 = vrot.lane.b32.xlu0 %v2208, 64
    %v2257 = vpop.permute.xlu0 %2256
    %2258 = vrot.lane.b32.xlu0 %v2209, 64
    %v2259 = vpop.permute.xlu0 %2258
    %2260 = vrot.lane.b32.xlu0 %v2210, 64
    %v2261 = vpop.permute.xlu0 %2260
    %2262 = vrot.lane.b32.xlu0 %v2211, 64
    %v2263 = vpop.permute.xlu0 %2262
    %2264 = vrot.lane.b32.xlu0 %v2212, 64
    %v2265 = vpop.permute.xlu0 %2264
    %2266 = vrot.lane.b32.xlu0 %v2213, 64
    %v2267 = vpop.permute.xlu0 %2266
    %2268 = vrot.lane.b32.xlu0 %v2214, 64
    %v2269 = vpop.permute.xlu0 %2268
    %2270 = vrot.lane.b32.xlu0 %v2215, 64
    %v2271 = vpop.permute.xlu0 %2270
    %v2280 = vmul.f32 %v2193, %v2257
    %v2281 = vmul.f32 %v2195, %v2259
    %v2282 = vmul.f32 %v2197, %v2261
    %v2283 = vmul.f32 %v2199, %v2263
    %v2284 = vmul.f32 %v2201, %v2265
    %v2285 = vmul.f32 %v2203, %v2267
    %v2286 = vmul.f32 %v2205, %v2269
    %v2287 = vmul.f32 %v2207, %v2271
    %2296 = vrot.lane.b32.xlu0 %v2280, 32
    %v2297 = vpop.permute.xlu0 %2296
    %2298 = vrot.lane.b32.xlu0 %v2281, 32
    %v2299 = vpop.permute.xlu0 %2298
    %2300 = vrot.lane.b32.xlu0 %v2282, 32
    %v2301 = vpop.permute.xlu0 %2300
    %2302 = vrot.lane.b32.xlu0 %v2283, 32
    %v2303 = vpop.permute.xlu0 %2302
    %2304 = vrot.lane.b32.xlu0 %v2284, 32
    %v2305 = vpop.permute.xlu0 %2304
    %2306 = vrot.lane.b32.xlu0 %v2285, 32
    %v2307 = vpop.permute.xlu0 %2306
    %2308 = vrot.lane.b32.xlu0 %v2286, 32
    %v2309 = vpop.permute.xlu0 %2308
    %2310 = vrot.lane.b32.xlu0 %v2287, 32
    %v2311 = vpop.permute.xlu0 %2310
    %v2320 = vadd.f32 %v2240, %v2297
    %v2321 = vadd.f32 %v2241, %v2299
    %v2322 = vadd.f32 %v2242, %v2301
    %v2323 = vadd.f32 %v2243, %v2303
    %v2324 = vadd.f32 %v2244, %v2305
    %v2325 = vadd.f32 %v2245, %v2307
    %v2326 = vadd.f32 %v2246, %v2309
    %v2327 = vadd.f32 %v2247, %v2311
    %v2328 = vtanh.pop %v2320
    %v2329 = vtanh.pop %v2321
    %v2330 = vtanh.pop %v2322
    %v2331 = vtanh.pop %v2323
    %v2332 = vtanh.pop %v2324
    %v2333 = vtanh.pop %v2325
    %v2334 = vtanh.pop %v2326
    %v2335 = vtanh.pop %v2327
    %2344 = vrot.lane.b32.xlu0 %v2328, 64
    %v2345 = vpop.permute.xlu0 %2344
    %2346 = vrot.lane.b32.xlu0 %v2329, 64
    %v2347 = vpop.permute.xlu0 %2346
    %2348 = vrot.lane.b32.xlu0 %v2330, 64
    %v2349 = vpop.permute.xlu0 %2348
    %2350 = vrot.lane.b32.xlu0 %v2331, 64
    %v2351 = vpop.permute.xlu0 %2350
    %2352 = vrot.lane.b32.xlu0 %v2332, 64
    %v2353 = vpop.permute.xlu0 %2352
    %2354 = vrot.lane.b32.xlu0 %v2333, 64
    %v2355 = vpop.permute.xlu0 %2354
    %2356 = vrot.lane.b32.xlu0 %v2334, 64
    %v2357 = vpop.permute.xlu0 %2356
    %2358 = vrot.lane.b32.xlu0 %v2335, 64
    %v2359 = vpop.permute.xlu0 %2358
    %v2368 = vmul.f32 %v2193, %v2345
    %v2369 = vmul.f32 %v2195, %v2347
    %v2370 = vmul.f32 %v2197, %v2349
    %v2371 = vmul.f32 %v2199, %v2351
    %v2372 = vmul.f32 %v2201, %v2353
    %v2373 = vmul.f32 %v2203, %v2355
    %v2374 = vmul.f32 %v2205, %v2357
    %v2375 = vmul.f32 %v2207, %v2359
    %2384 = vrot.lane.b32.xlu0 %v2368, 32
    %v2385 = vpop.permute.xlu0 %2384
    %2386 = vrot.lane.b32.xlu0 %v2369, 32
    %v2387 = vpop.permute.xlu0 %2386
    %2388 = vrot.lane.b32.xlu0 %v2370, 32
    %v2389 = vpop.permute.xlu0 %2388
    %2390 = vrot.lane.b32.xlu0 %v2371, 32
    %v2391 = vpop.permute.xlu0 %2390
    %2392 = vrot.lane.b32.xlu0 %v2372, 32
    %v2393 = vpop.permute.xlu0 %2392
    %2394 = vrot.lane.b32.xlu0 %v2373, 32
    %v2395 = vpop.permute.xlu0 %2394
    %2396 = vrot.lane.b32.xlu0 %v2374, 32
    %v2397 = vpop.permute.xlu0 %2396
    %2398 = vrot.lane.b32.xlu0 %v2375, 32
    %v2399 = vpop.permute.xlu0 %2398
    %vm2408 = vcmask 259077
    %2409 = vst.msk [vmem:[#allocation4] sm:$0x20] %vm2408, %v2385
    %2410 = vst.msk [vmem:[#allocation4 + $0x8] sm:$0x20] %vm2408, %v2387
    %2411 = vst.msk [vmem:[#allocation4 + $0x10] sm:$0x20] %vm2408, %v2389
    %2412 = vst.msk [vmem:[#allocation4 + $0x18] sm:$0x20] %vm2408, %v2391
    %2413 = vst.msk [vmem:[#allocation4 + $0x20] sm:$0x20] %vm2408, %v2393
    %2414 = vst.msk [vmem:[#allocation4 + $0x28] sm:$0x20] %vm2408, %v2395
    %2415 = vst.msk [vmem:[#allocation4 + $0x30] sm:$0x20] %vm2408, %v2397
    %2416 = vst.msk [vmem:[#allocation4 + $0x38] sm:$0x20] %vm2408, %v2399
    %v2417 = vrot.slane %v2368, 5
    %v2418 = vrot.slane %v2369, 4
    %v2419 = vsel %vm566, %v2418, %v2417
    %v2420 = vrot.slane %v2370, 3
    %v2421 = vsel %vm569, %v2420, %v2419
    %v2422 = vrot.slane %v2371, 2
    %v2423 = vsel %vm572, %v2422, %v2421
    %v2424 = vrot.slane %v2372, 1
    %v2425 = vsel %vm575, %v2424, %v2423
    %v2426 = vsel %vm578, %v2373, %v2425
    %v2427 = vrot.slane %v2374, 7
    %v2428 = vsel %vm581, %v2427, %v2426
    %v2429 = vrot.slane %v2375, 6
    %v2430 = vsel %vm584, %v2429, %v2428
    %2431 = vrot.lane.b32.xlu0 %v2430, 32
    %v2432 = vpop.permute.xlu0 %2431
    %v2433 = vsel %vm67, %v2432, 0
    %2435 = vmatprep.subr.mxu0 0.0
    %2436 = vmatpush1.msra.mxu0 %v197
    %2437 = vmatprep.subr.mxu0 0.0
    %2438 = vmatpush1.msra.mxu0 %v198
    %2439 = vmatprep.subr.mxu0 0.0
    %2440 = vmatpush1.msra.mxu0 %v199
    %2441 = vmatprep.subr.mxu0 0.0
    %2442 = vmatpush1.msra.mxu0 %v200
    %2443 = vmatprep.subr.mxu0 0.0
    %2444 = vmatpush1.msra.mxu0 0.0
    %2445 = vmatprep.subr.mxu0 0.0
    %2446 = vmatpush1.msra.mxu0 0.0
    %2447 = vmatprep.subr.mxu0 0.0
    %2448 = vmatpush1.msra.mxu0 0.0
    %2449 = vmatprep.subr.mxu0 0.0
    %2450 = vmatpush1.msra.mxu0 0.0
    %2451 = vmatprep.subr.mxu0 0.0
    %2452 = vmatpush1.msra.mxu0 0.0
    %2453 = vmatprep.subr.mxu0 0.0
    %2454 = vmatpush1.msra.mxu0 0.0
    %2455 = vmatprep.subr.mxu0 0.0
    %2456 = vmatpush1.msra.mxu0 0.0
    %2457 = vmatprep.subr.mxu0 0.0
    %2458 = vmatpush1.msra.mxu0 0.0
    %2459 = vmatprep.subr.mxu0 0.0
    %2460 = vmatpush1.msra.mxu0 0.0
    %2461 = vmatprep.subr.mxu0 0.0
    %2462 = vmatpush1.msra.mxu0 0.0
    %2463 = vmatprep.subr.mxu0 0.0
    %2464 = vmatpush1.msra.mxu0 0.0
    %2465 = vmatprep.subr.mxu0 0.0
    %2466 = vmatpush1.msra.mxu0 0.0
    %2467 = vmatprep.subr.mxu0 0.0
    %2468 = vmatpush1.msra.mxu0 0.0
    %2469 = vmatprep.subr.mxu0 0.0
    %2470 = vmatpush1.msra.mxu0 0.0
    %2471 = vmatprep.subr.mxu0 0.0
    %2472 = vmatpush1.msra.mxu0 0.0
    %2473 = vmatprep.subr.mxu0 0.0
    %2474 = vmatpush1.msra.mxu0 0.0
    %2475 = vmatprep.subr.mxu0 0.0
    %2476 = vmatpush1.msra.mxu0 0.0
    %2477 = vmatprep.subr.mxu0 0.0
    %2478 = vmatpush1.msra.mxu0 0.0
    %2479 = vmatprep.subr.mxu0 0.0
    %2480 = vmatpush1.msra.mxu0 0.0
    %2481 = vmatprep.subr.mxu0 0.0
    %2482 = vmatpush1.msra.mxu0 0.0
    %2483 = vmatprep.subr.mxu0 0.0
    %2484 = vmatpush1.msra.mxu0 0.0
    %2485 = vmatprep.subr.mxu0 0.0
    %2486 = vmatpush1.msra.mxu0 0.0
    %2487 = vmatprep.subr.mxu0 0.0
    %2488 = vmatpush1.msra.mxu0 0.0
    %2489 = vmatprep.subr.mxu0 0.0
    %2490 = vmatpush1.msra.mxu0 0.0
    %2491 = vmatprep.subr.mxu0 0.0
    %2492 = vmatpush1.msra.mxu0 0.0
    %2493 = vmatprep.subr.mxu0 0.0
    %2494 = vmatpush1.msra.mxu0 0.0
    %2495 = vmatprep.subr.mxu0 0.0
    %2496 = vmatpush1.msra.mxu0 0.0
    %2497 = vmatprep.subr.mxu0 0.0
    %2498 = vmatpush1.msra.mxu0 0.0
    %2499 = vmatprep.mubr.f32.mxu0 0.0
    %2500 = vmatmul.mubr.f32.gmra.mrb[0].mxu0 %v2433
    %v2501 = vpop.f32.mrb[0].mxu0
    %v2502 = vadd.f32 0.0, %v2501
    %v2503 = vpop.f32.mrb[0].mxu0
    %2504 = vdwg.mxu0
    %v2506 = vrot.slane %v2502, 2
    %v2507 = vrot.slane %v2502, 3
    %v2508 = vrot.slane %v2502, 4
    %v2509 = vrot.slane %v2502, 5
    %v2510 = vrot.slane %v2502, 6
    %v2511 = vrot.slane %v2502, 7
    %v2512 = vrot.slane %v2502, 1
    %v2521 = vadd.f32 %v159, %v2506
    %v2522 = vadd.f32 %v164, %v2507
    %v2523 = vadd.f32 %v169, %v2508
    %v2524 = vadd.f32 %v174, %v2509
    %v2525 = vadd.f32 %v179, %v2510
    %v2526 = vadd.f32 %v184, %v2511
    %v2527 = vadd.f32 %v189, %v2502
    %v2528 = vadd.f32 %v194, %v2512
    %v2529 = vxor.u32 %v2521, 2147483648
    %v2530 = vxor.u32 %v2522, 2147483648
    %v2531 = vxor.u32 %v2523, 2147483648
    %v2532 = vxor.u32 %v2524, 2147483648
    %v2533 = vxor.u32 %v2525, 2147483648
    %v2534 = vxor.u32 %v2526, 2147483648
    %v2535 = vxor.u32 %v2527, 2147483648
    %v2536 = vxor.u32 %v2528, 2147483648
    %v2537 = vmul.f32 %v2529, 1.442695
    %v2538 = vpow.pop %v2537
    %v2539 = vmul.f32 %v2530, 1.442695
    %v2540 = vpow.pop %v2539
    %v2541 = vmul.f32 %v2531, 1.442695
    %v2542 = vpow.pop %v2541
    %v2543 = vmul.f32 %v2532, 1.442695
    %v2544 = vpow.pop %v2543
    %v2545 = vmul.f32 %v2533, 1.442695
    %v2546 = vpow.pop %v2545
    %v2547 = vmul.f32 %v2534, 1.442695
    %v2548 = vpow.pop %v2547
    %v2549 = vmul.f32 %v2535, 1.442695
    %v2550 = vpow.pop %v2549
    %v2551 = vmul.f32 %v2536, 1.442695
    %v2552 = vpow.pop %v2551
    %v2553 = vadd.f32 %v2538, 1.0
    %v2554 = vadd.f32 %v2540, 1.0
    %v2555 = vadd.f32 %v2542, 1.0
    %v2556 = vadd.f32 %v2544, 1.0
    %v2557 = vadd.f32 %v2546, 1.0
    %v2558 = vadd.f32 %v2548, 1.0
    %v2559 = vadd.f32 %v2550, 1.0
    %v2560 = vadd.f32 %v2552, 1.0
    %v2561 = vrcp.pop %v2553
    %v2562 = vmul.f32 1.0, %v2561
    %v2563 = vrcp.pop %v2554
    %v2564 = vmul.f32 1.0, %v2563
    %v2565 = vrcp.pop %v2555
    %v2566 = vmul.f32 1.0, %v2565
    %v2567 = vrcp.pop %v2556
    %v2568 = vmul.f32 1.0, %v2567
    %v2569 = vrcp.pop %v2557
    %v2570 = vmul.f32 1.0, %v2569
    %v2571 = vrcp.pop %v2558
    %v2572 = vmul.f32 1.0, %v2571
    %v2573 = vrcp.pop %v2559
    %v2574 = vmul.f32 1.0, %v2573
    %v2575 = vrcp.pop %v2560
    %v2576 = vmul.f32 1.0, %v2575
    %v2577 = vtanh.pop %v2521
    %v2578 = vtanh.pop %v2522
    %v2579 = vtanh.pop %v2523
    %v2580 = vtanh.pop %v2524
    %v2581 = vtanh.pop %v2525
    %v2582 = vtanh.pop %v2526
    %v2583 = vtanh.pop %v2527
    %v2584 = vtanh.pop %v2528
    %v2593 = vrot.slane %v2320, 7
    %v2594 = vrot.slane %v2321, 7
    %v2595 = vrot.slane %v2322, 7
    %v2596 = vrot.slane %v2323, 7
    %v2597 = vrot.slane %v2324, 7
    %v2598 = vrot.slane %v2325, 7
    %v2599 = vrot.slane %v2326, 7
    %v2600 = vrot.slane %v2327, 7
    %v2609 = vmul.f32 %v2562, %v2593
    %v2610 = vmul.f32 %v2564, %v2594
    %v2611 = vmul.f32 %v2566, %v2595
    %v2612 = vmul.f32 %v2568, %v2596
    %v2613 = vmul.f32 %v2570, %v2597
    %v2614 = vmul.f32 %v2572, %v2598
    %v2615 = vmul.f32 %v2574, %v2599
    %v2616 = vmul.f32 %v2576, %v2600
    %2625 = vrot.lane.b32.xlu0 %v2577, 64
    %v2626 = vpop.permute.xlu0 %2625
    %2627 = vrot.lane.b32.xlu0 %v2578, 64
    %v2628 = vpop.permute.xlu0 %2627
    %2629 = vrot.lane.b32.xlu0 %v2579, 64
    %v2630 = vpop.permute.xlu0 %2629
    %2631 = vrot.lane.b32.xlu0 %v2580, 64
    %v2632 = vpop.permute.xlu0 %2631
    %2633 = vrot.lane.b32.xlu0 %v2581, 64
    %v2634 = vpop.permute.xlu0 %2633
    %2635 = vrot.lane.b32.xlu0 %v2582, 64
    %v2636 = vpop.permute.xlu0 %2635
    %2637 = vrot.lane.b32.xlu0 %v2583, 64
    %v2638 = vpop.permute.xlu0 %2637
    %2639 = vrot.lane.b32.xlu0 %v2584, 64
    %v2640 = vpop.permute.xlu0 %2639
    %v2649 = vmul.f32 %v2562, %v2626
    %v2650 = vmul.f32 %v2564, %v2628
    %v2651 = vmul.f32 %v2566, %v2630
    %v2652 = vmul.f32 %v2568, %v2632
    %v2653 = vmul.f32 %v2570, %v2634
    %v2654 = vmul.f32 %v2572, %v2636
    %v2655 = vmul.f32 %v2574, %v2638
    %v2656 = vmul.f32 %v2576, %v2640
    %2665 = vrot.lane.b32.xlu0 %v2649, 32
    %v2666 = vpop.permute.xlu0 %2665
    %2667 = vrot.lane.b32.xlu0 %v2650, 32
    %v2668 = vpop.permute.xlu0 %2667
    %2669 = vrot.lane.b32.xlu0 %v2651, 32
    %v2670 = vpop.permute.xlu0 %2669
    %2671 = vrot.lane.b32.xlu0 %v2652, 32
    %v2672 = vpop.permute.xlu0 %2671
    %2673 = vrot.lane.b32.xlu0 %v2653, 32
    %v2674 = vpop.permute.xlu0 %2673
    %2675 = vrot.lane.b32.xlu0 %v2654, 32
    %v2676 = vpop.permute.xlu0 %2675
    %2677 = vrot.lane.b32.xlu0 %v2655, 32
    %v2678 = vpop.permute.xlu0 %2677
    %2679 = vrot.lane.b32.xlu0 %v2656, 32
    %v2680 = vpop.permute.xlu0 %2679
    %v2689 = vadd.f32 %v2609, %v2666
    %v2690 = vadd.f32 %v2610, %v2668
    %v2691 = vadd.f32 %v2611, %v2670
    %v2692 = vadd.f32 %v2612, %v2672
    %v2693 = vadd.f32 %v2613, %v2674
    %v2694 = vadd.f32 %v2614, %v2676
    %v2695 = vadd.f32 %v2615, %v2678
    %v2696 = vadd.f32 %v2616, %v2680
    %v2697 = vtanh.pop %v2689
    %v2698 = vtanh.pop %v2690
    %v2699 = vtanh.pop %v2691
    %v2700 = vtanh.pop %v2692
    %v2701 = vtanh.pop %v2693
    %v2702 = vtanh.pop %v2694
    %v2703 = vtanh.pop %v2695
    %v2704 = vtanh.pop %v2696
    %2713 = vrot.lane.b32.xlu0 %v2697, 64
    %v2714 = vpop.permute.xlu0 %2713
    %2715 = vrot.lane.b32.xlu0 %v2698, 64
    %v2716 = vpop.permute.xlu0 %2715
    %2717 = vrot.lane.b32.xlu0 %v2699, 64
    %v2718 = vpop.permute.xlu0 %2717
    %2719 = vrot.lane.b32.xlu0 %v2700, 64
    %v2720 = vpop.permute.xlu0 %2719
    %2721 = vrot.lane.b32.xlu0 %v2701, 64
    %v2722 = vpop.permute.xlu0 %2721
    %2723 = vrot.lane.b32.xlu0 %v2702, 64
    %v2724 = vpop.permute.xlu0 %2723
    %2725 = vrot.lane.b32.xlu0 %v2703, 64
    %v2726 = vpop.permute.xlu0 %2725
    %2727 = vrot.lane.b32.xlu0 %v2704, 64
    %v2728 = vpop.permute.xlu0 %2727
    %v2737 = vmul.f32 %v2562, %v2714
    %v2738 = vmul.f32 %v2564, %v2716
    %v2739 = vmul.f32 %v2566, %v2718
    %v2740 = vmul.f32 %v2568, %v2720
    %v2741 = vmul.f32 %v2570, %v2722
    %v2742 = vmul.f32 %v2572, %v2724
    %v2743 = vmul.f32 %v2574, %v2726
    %v2744 = vmul.f32 %v2576, %v2728
    %2753 = vrot.lane.b32.xlu0 %v2737, 32
    %v2754 = vpop.permute.xlu0 %2753
    %2755 = vrot.lane.b32.xlu0 %v2738, 32
    %v2756 = vpop.permute.xlu0 %2755
    %2757 = vrot.lane.b32.xlu0 %v2739, 32
    %v2758 = vpop.permute.xlu0 %2757
    %2759 = vrot.lane.b32.xlu0 %v2740, 32
    %v2760 = vpop.permute.xlu0 %2759
    %2761 = vrot.lane.b32.xlu0 %v2741, 32
    %v2762 = vpop.permute.xlu0 %2761
    %2763 = vrot.lane.b32.xlu0 %v2742, 32
    %v2764 = vpop.permute.xlu0 %2763
    %2765 = vrot.lane.b32.xlu0 %v2743, 32
    %v2766 = vpop.permute.xlu0 %2765
    %2767 = vrot.lane.b32.xlu0 %v2744, 32
    %v2768 = vpop.permute.xlu0 %2767
    %vm2777 = vcmask 260102
    %2778 = vst.msk [vmem:[#allocation4] sm:$0x40] %vm2777, %v2754
    %2779 = vst.msk [vmem:[#allocation4 + $0x8] sm:$0x40] %vm2777, %v2756
    %2780 = vst.msk [vmem:[#allocation4 + $0x10] sm:$0x40] %vm2777, %v2758
    %2781 = vst.msk [vmem:[#allocation4 + $0x18] sm:$0x40] %vm2777, %v2760
    %2782 = vst.msk [vmem:[#allocation4 + $0x20] sm:$0x40] %vm2777, %v2762
    %2783 = vst.msk [vmem:[#allocation4 + $0x28] sm:$0x40] %vm2777, %v2764
    %2784 = vst.msk [vmem:[#allocation4 + $0x30] sm:$0x40] %vm2777, %v2766
    %2785 = vst.msk [vmem:[#allocation4 + $0x38] sm:$0x40] %vm2777, %v2768
    %v2786 = vrot.slane %v2737, 6
    %v2787 = vrot.slane %v2738, 5
    %v2788 = vsel %vm566, %v2787, %v2786
    %v2789 = vrot.slane %v2739, 4
    %v2790 = vsel %vm569, %v2789, %v2788
    %v2791 = vrot.slane %v2740, 3
    %v2792 = vsel %vm572, %v2791, %v2790
    %v2793 = vrot.slane %v2741, 2
    %v2794 = vsel %vm575, %v2793, %v2792
    %v2795 = vrot.slane %v2742, 1
    %v2796 = vsel %vm578, %v2795, %v2794
    %v2797 = vsel %vm581, %v2743, %v2796
    %v2798 = vrot.slane %v2744, 7
    %v2799 = vsel %vm584, %v2798, %v2797
    %2800 = vrot.lane.b32.xlu0 %v2799, 32
    %v2801 = vpop.permute.xlu0 %2800
    %v2802 = vsel %vm67, %v2801, 0
    %2804 = vmatprep.subr.mxu0 0.0
    %2805 = vmatpush1.msra.mxu0 %v197
    %2806 = vmatprep.subr.mxu0 0.0
    %2807 = vmatpush1.msra.mxu0 %v198
    %2808 = vmatprep.subr.mxu0 0.0
    %2809 = vmatpush1.msra.mxu0 %v199
    %2810 = vmatprep.subr.mxu0 0.0
    %2811 = vmatpush1.msra.mxu0 %v200
    %2812 = vmatprep.subr.mxu0 0.0
    %2813 = vmatpush1.msra.mxu0 0.0
    %2814 = vmatprep.subr.mxu0 0.0
    %2815 = vmatpush1.msra.mxu0 0.0
    %2816 = vmatprep.subr.mxu0 0.0
    %2817 = vmatpush1.msra.mxu0 0.0
    %2818 = vmatprep.subr.mxu0 0.0
    %2819 = vmatpush1.msra.mxu0 0.0
    %2820 = vmatprep.subr.mxu0 0.0
    %2821 = vmatpush1.msra.mxu0 0.0
    %2822 = vmatprep.subr.mxu0 0.0
    %2823 = vmatpush1.msra.mxu0 0.0
    %2824 = vmatprep.subr.mxu0 0.0
    %2825 = vmatpush1.msra.mxu0 0.0
    %2826 = vmatprep.subr.mxu0 0.0
    %2827 = vmatpush1.msra.mxu0 0.0
    %2828 = vmatprep.subr.mxu0 0.0
    %2829 = vmatpush1.msra.mxu0 0.0
    %2830 = vmatprep.subr.mxu0 0.0
    %2831 = vmatpush1.msra.mxu0 0.0
    %2832 = vmatprep.subr.mxu0 0.0
    %2833 = vmatpush1.msra.mxu0 0.0
    %2834 = vmatprep.subr.mxu0 0.0
    %2835 = vmatpush1.msra.mxu0 0.0
    %2836 = vmatprep.subr.mxu0 0.0
    %2837 = vmatpush1.msra.mxu0 0.0
    %2838 = vmatprep.subr.mxu0 0.0
    %2839 = vmatpush1.msra.mxu0 0.0
    %2840 = vmatprep.subr.mxu0 0.0
    %2841 = vmatpush1.msra.mxu0 0.0
    %2842 = vmatprep.subr.mxu0 0.0
    %2843 = vmatpush1.msra.mxu0 0.0
    %2844 = vmatprep.subr.mxu0 0.0
    %2845 = vmatpush1.msra.mxu0 0.0
    %2846 = vmatprep.subr.mxu0 0.0
    %2847 = vmatpush1.msra.mxu0 0.0
    %2848 = vmatprep.subr.mxu0 0.0
    %2849 = vmatpush1.msra.mxu0 0.0
    %2850 = vmatprep.subr.mxu0 0.0
    %2851 = vmatpush1.msra.mxu0 0.0
    %2852 = vmatprep.subr.mxu0 0.0
    %2853 = vmatpush1.msra.mxu0 0.0
    %2854 = vmatprep.subr.mxu0 0.0
    %2855 = vmatpush1.msra.mxu0 0.0
    %2856 = vmatprep.subr.mxu0 0.0
    %2857 = vmatpush1.msra.mxu0 0.0
    %2858 = vmatprep.subr.mxu0 0.0
    %2859 = vmatpush1.msra.mxu0 0.0
    %2860 = vmatprep.subr.mxu0 0.0
    %2861 = vmatpush1.msra.mxu0 0.0
    %2862 = vmatprep.subr.mxu0 0.0
    %2863 = vmatpush1.msra.mxu0 0.0
    %2864 = vmatprep.subr.mxu0 0.0
    %2865 = vmatpush1.msra.mxu0 0.0
    %2866 = vmatprep.subr.mxu0 0.0
    %2867 = vmatpush1.msra.mxu0 0.0
    %2868 = vmatprep.mubr.f32.mxu0 0.0
    %2869 = vmatmul.mubr.f32.gmra.mrb[0].mxu0 %v2802
    %v2870 = vpop.f32.mrb[0].mxu0
    %v2871 = vadd.f32 0.0, %v2870
    %v2872 = vpop.f32.mrb[0].mxu0
    %2873 = vdwg.mxu0
    %v2875 = vrot.slane %v2871, 1
    %v2876 = vrot.slane %v2871, 2
    %v2877 = vrot.slane %v2871, 3
    %v2878 = vrot.slane %v2871, 4
    %v2879 = vrot.slane %v2871, 5
    %v2880 = vrot.slane %v2871, 6
    %v2881 = vrot.slane %v2871, 7
    %v2890 = vadd.f32 %v159, %v2875
    %v2891 = vadd.f32 %v164, %v2876
    %v2892 = vadd.f32 %v169, %v2877
    %v2893 = vadd.f32 %v174, %v2878
    %v2894 = vadd.f32 %v179, %v2879
    %v2895 = vadd.f32 %v184, %v2880
    %v2896 = vadd.f32 %v189, %v2881
    %v2897 = vadd.f32 %v194, %v2871
    %v2898 = vxor.u32 %v2890, 2147483648
    %v2899 = vxor.u32 %v2891, 2147483648
    %v2900 = vxor.u32 %v2892, 2147483648
    %v2901 = vxor.u32 %v2893, 2147483648
    %v2902 = vxor.u32 %v2894, 2147483648
    %v2903 = vxor.u32 %v2895, 2147483648
    %v2904 = vxor.u32 %v2896, 2147483648
    %v2905 = vxor.u32 %v2897, 2147483648
    %v2906 = vmul.f32 %v2898, 1.442695
    %v2907 = vpow.pop %v2906
    %v2908 = vmul.f32 %v2899, 1.442695
    %v2909 = vpow.pop %v2908
    %v2910 = vmul.f32 %v2900, 1.442695
    %v2911 = vpow.pop %v2910
    %v2912 = vmul.f32 %v2901, 1.442695
    %v2913 = vpow.pop %v2912
    %v2914 = vmul.f32 %v2902, 1.442695
    %v2915 = vpow.pop %v2914
    %v2916 = vmul.f32 %v2903, 1.442695
    %v2917 = vpow.pop %v2916
    %v2918 = vmul.f32 %v2904, 1.442695
    %v2919 = vpow.pop %v2918
    %v2920 = vmul.f32 %v2905, 1.442695
    %v2921 = vpow.pop %v2920
    %v2922 = vadd.f32 %v2907, 1.0
    %v2923 = vadd.f32 %v2909, 1.0
    %v2924 = vadd.f32 %v2911, 1.0
    %v2925 = vadd.f32 %v2913, 1.0
    %v2926 = vadd.f32 %v2915, 1.0
    %v2927 = vadd.f32 %v2917, 1.0
    %v2928 = vadd.f32 %v2919, 1.0
    %v2929 = vadd.f32 %v2921, 1.0
    %v2930 = vrcp.pop %v2922
    %v2931 = vmul.f32 1.0, %v2930
    %v2932 = vrcp.pop %v2923
    %v2933 = vmul.f32 1.0, %v2932
    %v2934 = vrcp.pop %v2924
    %v2935 = vmul.f32 1.0, %v2934
    %v2936 = vrcp.pop %v2925
    %v2937 = vmul.f32 1.0, %v2936
    %v2938 = vrcp.pop %v2926
    %v2939 = vmul.f32 1.0, %v2938
    %v2940 = vrcp.pop %v2927
    %v2941 = vmul.f32 1.0, %v2940
    %v2942 = vrcp.pop %v2928
    %v2943 = vmul.f32 1.0, %v2942
    %v2944 = vrcp.pop %v2929
    %v2945 = vmul.f32 1.0, %v2944
    %v2946 = vtanh.pop %v2890
    %v2947 = vtanh.pop %v2891
    %v2948 = vtanh.pop %v2892
    %v2949 = vtanh.pop %v2893
    %v2950 = vtanh.pop %v2894
    %v2951 = vtanh.pop %v2895
    %v2952 = vtanh.pop %v2896
    %v2953 = vtanh.pop %v2897
    %v2962 = vrot.slane %v2689, 7
    %v2963 = vrot.slane %v2690, 7
    %v2964 = vrot.slane %v2691, 7
    %v2965 = vrot.slane %v2692, 7
    %v2966 = vrot.slane %v2693, 7
    %v2967 = vrot.slane %v2694, 7
    %v2968 = vrot.slane %v2695, 7
    %v2969 = vrot.slane %v2696, 7
    %v2978 = vmul.f32 %v2931, %v2962
    %v2979 = vmul.f32 %v2933, %v2963
    %v2980 = vmul.f32 %v2935, %v2964
    %v2981 = vmul.f32 %v2937, %v2965
    %v2982 = vmul.f32 %v2939, %v2966
    %v2983 = vmul.f32 %v2941, %v2967
    %v2984 = vmul.f32 %v2943, %v2968
    %v2985 = vmul.f32 %v2945, %v2969
    %2994 = vrot.lane.b32.xlu0 %v2946, 64
    %v2995 = vpop.permute.xlu0 %2994
    %2996 = vrot.lane.b32.xlu0 %v2947, 64
    %v2997 = vpop.permute.xlu0 %2996
    %2998 = vrot.lane.b32.xlu0 %v2948, 64
    %v2999 = vpop.permute.xlu0 %2998
    %3000 = vrot.lane.b32.xlu0 %v2949, 64
    %v3001 = vpop.permute.xlu0 %3000
    %3002 = vrot.lane.b32.xlu0 %v2950, 64
    %v3003 = vpop.permute.xlu0 %3002
    %3004 = vrot.lane.b32.xlu0 %v2951, 64
    %v3005 = vpop.permute.xlu0 %3004
    %3006 = vrot.lane.b32.xlu0 %v2952, 64
    %v3007 = vpop.permute.xlu0 %3006
    %3008 = vrot.lane.b32.xlu0 %v2953, 64
    %v3009 = vpop.permute.xlu0 %3008
    %v3018 = vmul.f32 %v2931, %v2995
    %v3019 = vmul.f32 %v2933, %v2997
    %v3020 = vmul.f32 %v2935, %v2999
    %v3021 = vmul.f32 %v2937, %v3001
    %v3022 = vmul.f32 %v2939, %v3003
    %v3023 = vmul.f32 %v2941, %v3005
    %v3024 = vmul.f32 %v2943, %v3007
    %v3025 = vmul.f32 %v2945, %v3009
    %3034 = vrot.lane.b32.xlu0 %v3018, 32
    %v3035 = vpop.permute.xlu0 %3034
    %3036 = vrot.lane.b32.xlu0 %v3019, 32
    %v3037 = vpop.permute.xlu0 %3036
    %3038 = vrot.lane.b32.xlu0 %v3020, 32
    %v3039 = vpop.permute.xlu0 %3038
    %3040 = vrot.lane.b32.xlu0 %v3021, 32
    %v3041 = vpop.permute.xlu0 %3040
    %3042 = vrot.lane.b32.xlu0 %v3022, 32
    %v3043 = vpop.permute.xlu0 %3042
    %3044 = vrot.lane.b32.xlu0 %v3023, 32
    %v3045 = vpop.permute.xlu0 %3044
    %3046 = vrot.lane.b32.xlu0 %v3024, 32
    %v3047 = vpop.permute.xlu0 %3046
    %3048 = vrot.lane.b32.xlu0 %v3025, 32
    %v3049 = vpop.permute.xlu0 %3048
    %v3058 = vadd.f32 %v2978, %v3035
    %v3059 = vadd.f32 %v2979, %v3037
    %v3060 = vadd.f32 %v2980, %v3039
    %v3061 = vadd.f32 %v2981, %v3041
    %v3062 = vadd.f32 %v2982, %v3043
    %v3063 = vadd.f32 %v2983, %v3045
    %v3064 = vadd.f32 %v2984, %v3047
    %v3065 = vadd.f32 %v2985, %v3049
    %v3066 = vtanh.pop %v3058
    %v3067 = vtanh.pop %v3059
    %v3068 = vtanh.pop %v3060
    %v3069 = vtanh.pop %v3061
    %v3070 = vtanh.pop %v3062
    %v3071 = vtanh.pop %v3063
    %v3072 = vtanh.pop %v3064
    %v3073 = vtanh.pop %v3065
    %3082 = vrot.lane.b32.xlu0 %v3066, 64
    %v3083 = vpop.permute.xlu0 %3082
    %3084 = vrot.lane.b32.xlu0 %v3067, 64
    %v3085 = vpop.permute.xlu0 %3084
    %3086 = vrot.lane.b32.xlu0 %v3068, 64
    %v3087 = vpop.permute.xlu0 %3086
    %3088 = vrot.lane.b32.xlu0 %v3069, 64
    %v3089 = vpop.permute.xlu0 %3088
    %3090 = vrot.lane.b32.xlu0 %v3070, 64
    %v3091 = vpop.permute.xlu0 %3090
    %3092 = vrot.lane.b32.xlu0 %v3071, 64
    %v3093 = vpop.permute.xlu0 %3092
    %3094 = vrot.lane.b32.xlu0 %v3072, 64
    %v3095 = vpop.permute.xlu0 %3094
    %3096 = vrot.lane.b32.xlu0 %v3073, 64
    %v3097 = vpop.permute.xlu0 %3096
    %v3106 = vmul.f32 %v2931, %v3083
    %v3107 = vmul.f32 %v2933, %v3085
    %v3108 = vmul.f32 %v2935, %v3087
    %v3109 = vmul.f32 %v2937, %v3089
    %v3110 = vmul.f32 %v2939, %v3091
    %v3111 = vmul.f32 %v2941, %v3093
    %v3112 = vmul.f32 %v2943, %v3095
    %v3113 = vmul.f32 %v2945, %v3097
    %3122 = vrot.lane.b32.xlu0 %v3106, 32
    %v3123 = vpop.permute.xlu0 %3122
    %3124 = vrot.lane.b32.xlu0 %v3107, 32
    %v3125 = vpop.permute.xlu0 %3124
    %3126 = vrot.lane.b32.xlu0 %v3108, 32
    %v3127 = vpop.permute.xlu0 %3126
    %3128 = vrot.lane.b32.xlu0 %v3109, 32
    %v3129 = vpop.permute.xlu0 %3128
    %3130 = vrot.lane.b32.xlu0 %v3110, 32
    %v3131 = vpop.permute.xlu0 %3130
    %3132 = vrot.lane.b32.xlu0 %v3111, 32
    %v3133 = vpop.permute.xlu0 %3132
    %3134 = vrot.lane.b32.xlu0 %v3112, 32
    %v3135 = vpop.permute.xlu0 %3134
    %3136 = vrot.lane.b32.xlu0 %v3113, 32
    %v3137 = vpop.permute.xlu0 %3136
    %vm3146 = vcmask 261127
    %3147 = vst.msk [vmem:[#allocation4] sm:$0x80] %vm3146, %v3123
    %3148 = vst.msk [vmem:[#allocation4 + $0x8] sm:$0x80] %vm3146, %v3125
    %3149 = vst.msk [vmem:[#allocation4 + $0x10] sm:$0x80] %vm3146, %v3127
    %3150 = vst.msk [vmem:[#allocation4 + $0x18] sm:$0x80] %vm3146, %v3129
    %3151 = vst.msk [vmem:[#allocation4 + $0x20] sm:$0x80] %vm3146, %v3131
    %3152 = vst.msk [vmem:[#allocation4 + $0x28] sm:$0x80] %vm3146, %v3133
    %3153 = vst.msk [vmem:[#allocation4 + $0x30] sm:$0x80] %vm3146, %v3135
    %3154 = vst.msk [vmem:[#allocation4 + $0x38] sm:$0x80] %vm3146, %v3137
    %v3155 = vrot.slane %v3107, 7
    %v3156 = vrot.slane %v3108, 6
    %v3157 = vsel %vm566, %v3156, %v3155
    %v3158 = vrot.slane %v3109, 5
    %v3159 = vsel %vm569, %v3158, %v3157
    %v3160 = vrot.slane %v3110, 4
    %v3161 = vsel %vm572, %v3160, %v3159
    %v3162 = vrot.slane %v3111, 3
    %v3163 = vsel %vm575, %v3162, %v3161
    %v3164 = vrot.slane %v3112, 2
    %v3165 = vsel %vm578, %v3164, %v3163
    %v3166 = vrot.slane %v3113, 1
    %v3167 = vsel %vm581, %v3166, %v3165
    %3168 = vrot.lane.b32.xlu0 %v3167, 32
    %v3169 = vpop.permute.xlu0 %3168
    %3171 = vst.msk [vmem:[#allocation2 - $0x7] sm:$0x80] %vm3146, %v3123
    %vm3172 = vcmask 260096
    %3173 = vst.msk [vmem:[#allocation2 + $0x1] sm:$0x7f] %vm3172, %v3169
    %v3182 = vrot.slane %v3059, 7
    %v3183 = vrot.slane %v3060, 6
    %v3184 = vsel %vm566, %v3183, %v3182
    %v3185 = vrot.slane %v3061, 5
    %v3186 = vsel %vm569, %v3185, %v3184
    %v3187 = vrot.slane %v3062, 4
    %v3188 = vsel %vm572, %v3187, %v3186
    %v3189 = vrot.slane %v3063, 3
    %v3190 = vsel %vm575, %v3189, %v3188
    %v3191 = vrot.slane %v3064, 2
    %v3192 = vsel %vm578, %v3191, %v3190
    %v3193 = vrot.slane %v3065, 1
    %v3194 = vsel %vm581, %v3193, %v3192
    %3195 = vrot.lane.b32.xlu0 %v3058, 96
    %v3196 = vpop.permute.xlu0 %3195
    %3197 = vrot.lane.b32.xlu0 %v3194, 96
    %v3198 = vpop.permute.xlu0 %3197
    %3201 = vst.msk [vmem:[#allocation3 - $0x7] sm:$0x80] %vm3146, %v3196
    %3202 = vst.msk [vmem:[#allocation3 + $0x1] sm:$0x7f] %vm3172, %v3198
    %s3203 = smul.u32 0, 8
    %v3204 = vlaneseq
    %v3205 = vshrl.u32 %v3204, 7
    %v3206 = vstv %s3203
    %v3207 = vadd.s32 %v3205, %v3206
    %v3208 = vld [vmem:[%s1] sm:$0xff]
    %v3209 = vcombine.high %v3208, %v3208
    %v3211 = vunpack.c.l.s4 1966171168
    %v3212 = vunpack.c.0.s8 %v3211
    %v3213 = vlaneseq
    %v3214 = vshrl.u32 %v3213, 7
    %v3215 = vsub.s32 %v3212, %v3214
    %v3216 = vrot.slane %v3208, %v3215
    %v3218 = vunpack.c.l.s4 1966171168
    %v3219 = vunpack.c.0.s8 %v3218
    %v3220 = vlaneseq
    %v3221 = vshrl.u32 %v3220, 7
    %v3222 = vsub.s32 %v3219, %v3221
    %v3223 = vrot.slane %v3209, %v3222
    %v3224 = vcombine.high %v3216, %v3216
    %v3225 = vcombine.high %v3223, %v3223
    %v3227 = vunpack.c.l.s4 1966171168
    %v3228 = vunpack.c.0.s8 %v3227
    %v3229 = vlaneseq
    %v3230 = vshrl.u32 %v3229, 7
    %v3231 = vsub.s32 %v3228, %v3230
    %v3232 = vrot.slane %v3216, %v3231
    %v3234 = vunpack.c.l.s4 1966171168
    %v3235 = vunpack.c.0.s8 %v3234
    %v3236 = vlaneseq
    %v3237 = vshrl.u32 %v3236, 7
    %v3238 = vsub.s32 %v3235, %v3237
    %v3239 = vrot.slane %v3223, %v3238
    %v3241 = vunpack.c.l.s4 1966171168
    %v3242 = vunpack.c.0.s8 %v3241
    %v3243 = vlaneseq
    %v3244 = vshrl.u32 %v3243, 7
    %v3245 = vsub.s32 %v3242, %v3244
    %v3246 = vrot.slane %v3224, %v3245
    %v3248 = vunpack.c.l.s4 1966171168
    %v3249 = vunpack.c.0.s8 %v3248
    %v3250 = vlaneseq
    %v3251 = vshrl.u32 %v3250, 7
    %v3252 = vsub.s32 %v3249, %v3251
    %v3253 = vrot.slane %v3225, %v3252
    %v3254 = vcombine.high %v3232, %v3232
    %v3255 = vcombine.high %v3239, %v3239
    %v3256 = vcombine.high %v3246, %v3246
    %v3257 = vcombine.high %v3253, %v3253
    %v3258 = vlaneseq
    %v3259 = vshrl.u32 %v3258, 7
    %v3260 = vsub.s32 0, %v3259
    %v3261 = vrot.slane %v3232, %v3260
    %v3262 = vlaneseq
    %v3263 = vshrl.u32 %v3262, 7
    %v3264 = vsub.s32 0, %v3263
    %v3265 = vrot.slane %v3246, %v3264
    %v3266 = vlaneseq
    %v3267 = vshrl.u32 %v3266, 7
    %v3268 = vsub.s32 0, %v3267
    %v3269 = vrot.slane %v3254, %v3268
    %v3270 = vlaneseq
    %v3271 = vshrl.u32 %v3270, 7
    %v3272 = vsub.s32 0, %v3271
    %v3273 = vrot.slane %v3256, %v3272
    %v3274 = vlaneseq
    %v3275 = vshrl.u32 %v3274, 7
    %v3276 = vsub.s32 0, %v3275
    %v3277 = vrot.slane %v3239, %v3276
    %v3278 = vlaneseq
    %v3279 = vshrl.u32 %v3278, 7
    %v3280 = vsub.s32 0, %v3279
    %v3281 = vrot.slane %v3253, %v3280
    %v3282 = vlaneseq
    %v3283 = vshrl.u32 %v3282, 7
    %v3284 = vsub.s32 0, %v3283
    %v3285 = vrot.slane %v3255, %v3284
    %v3286 = vlaneseq
    %v3287 = vshrl.u32 %v3286, 7
    %v3288 = vsub.s32 0, %v3287
    %v3289 = vrot.slane %v3257, %v3288
    %3290 = vset.pattern.permute.xlu0 0
    %3291 = vperm.xlu0 %3290, %v3261
    %v3292 = vpop.permute.xlu0 %3291
    %3293 = vset.pattern.permute.xlu0 0
    %3294 = vperm.xlu0 %3293, %v3265
    %v3295 = vpop.permute.xlu0 %3294
    %3296 = vset.pattern.permute.xlu0 0
    %3297 = vperm.xlu0 %3296, %v3269
    %v3298 = vpop.permute.xlu0 %3297
    %3299 = vset.pattern.permute.xlu0 0
    %3300 = vperm.xlu0 %3299, %v3273
    %v3301 = vpop.permute.xlu0 %3300
    %3302 = vset.pattern.permute.xlu0 0
    %3303 = vperm.xlu0 %3302, %v3277
    %v3304 = vpop.permute.xlu0 %3303
    %3305 = vset.pattern.permute.xlu0 0
    %3306 = vperm.xlu0 %3305, %v3281
    %v3307 = vpop.permute.xlu0 %3306
    %3308 = vset.pattern.permute.xlu0 0
    %3309 = vperm.xlu0 %3308, %v3285
    %v3310 = vpop.permute.xlu0 %3309
    %3311 = vset.pattern.permute.xlu0 0
    %3312 = vperm.xlu0 %3311, %v3289
    %v3313 = vpop.permute.xlu0 %3312
    %vm3314 = vcmp.lt.s32.totalorder %v3207, %v3292
    %vm3315 = vcmp.lt.s32.totalorder %v3207, %v3295
    %vm3316 = vcmp.lt.s32.totalorder %v3207, %v3298
    %vm3317 = vcmp.lt.s32.totalorder %v3207, %v3301
    %vm3318 = vcmp.lt.s32.totalorder %v3207, %v3304
    %vm3319 = vcmp.lt.s32.totalorder %v3207, %v3307
    %vm3320 = vcmp.lt.s32.totalorder %v3207, %v3310
    %vm3321 = vcmp.lt.s32.totalorder %v3207, %v3313
    %v3322 = vld [vmem:[#allocation4] sm:$0xff]
    %v3323 = vld [vmem:[#allocation4 + $0x8] sm:$0xff]
    %v3324 = vld [vmem:[#allocation4 + $0x10] sm:$0xff]
    %v3325 = vld [vmem:[#allocation4 + $0x18] sm:$0xff]
    %v3326 = vld [vmem:[#allocation4 + $0x20] sm:$0xff]
    %v3327 = vld [vmem:[#allocation4 + $0x28] sm:$0xff]
    %v3328 = vld [vmem:[#allocation4 + $0x30] sm:$0xff]
    %v3329 = vld [vmem:[#allocation4 + $0x38] sm:$0xff]
    %v3330 = vsel %vm3314, %v3322, 0.0
    %v3331 = vsel %vm3315, %v3323, 0.0
    %v3332 = vsel %vm3316, %v3324, 0.0
    %v3333 = vsel %vm3317, %v3325, 0.0
    %v3334 = vsel %vm3318, %v3326, 0.0
    %v3335 = vsel %vm3319, %v3327, 0.0
    %v3336 = vsel %vm3320, %v3328, 0.0
    %v3337 = vsel %vm3321, %v3329, 0.0
    %v3338 = vld [vmem:[%s5] sm:$0xff]
    %v3339 = vld [vmem:[%s5 + $0x8] sm:$0xff]
    %v3340 = vld [vmem:[%s5 + $0x10] sm:$0xff]
    %v3341 = vld [vmem:[%s5 + $0x18] sm:$0xff]
    %v3342 = vld [vmem:[%s6] sm:$0x1]
    %v3344 = vlaneseq
    %v3345 = vshrl.u32 %v3344, 7
    %v3346 = vsub.s32 0, %v3345
    %v3347 = vrot.slane %v3342, %v3346
    %v3350 = vsel %vm67, %v3330, 0
    %v3353 = vsel %vm67, %v3331, 0
    %v3356 = vsel %vm67, %v3332, 0
    %v3359 = vsel %vm67, %v3333, 0
    %v3362 = vsel %vm67, %v3334, 0
    %v3365 = vsel %vm67, %v3335, 0
    %v3368 = vsel %vm67, %v3336, 0
    %v3371 = vsel %vm67, %v3337, 0
    %3373 = vmatprep.subr.mxu0 0.0
    %3374 = vmatpush1.msra.mxu0 %v3338
    %3375 = vmatprep.subr.mxu0 0.0
    %3376 = vmatpush1.msra.mxu0 %v3339
    %3377 = vmatprep.subr.mxu0 0.0
    %3378 = vmatpush1.msra.mxu0 %v3340
    %3379 = vmatprep.subr.mxu0 0.0
    %3380 = vmatpush1.msra.mxu0 %v3341
    %3381 = vmatprep.subr.mxu0 0.0
    %3382 = vmatpush1.msra.mxu0 0.0
    %3383 = vmatprep.subr.mxu0 0.0
    %3384 = vmatpush1.msra.mxu0 0.0
    %3385 = vmatprep.subr.mxu0 0.0
    %3386 = vmatpush1.msra.mxu0 0.0
    %3387 = vmatprep.subr.mxu0 0.0
    %3388 = vmatpush1.msra.mxu0 0.0
    %3389 = vmatprep.subr.mxu0 0.0
    %3390 = vmatpush1.msra.mxu0 0.0
    %3391 = vmatprep.subr.mxu0 0.0
    %3392 = vmatpush1.msra.mxu0 0.0
    %3393 = vmatprep.subr.mxu0 0.0
    %3394 = vmatpush1.msra.mxu0 0.0
    %3395 = vmatprep.subr.mxu0 0.0
    %3396 = vmatpush1.msra.mxu0 0.0
    %3397 = vmatprep.subr.mxu0 0.0
    %3398 = vmatpush1.msra.mxu0 0.0
    %3399 = vmatprep.subr.mxu0 0.0
    %3400 = vmatpush1.msra.mxu0 0.0
    %3401 = vmatprep.subr.mxu0 0.0
    %3402 = vmatpush1.msra.mxu0 0.0
    %3403 = vmatprep.subr.mxu0 0.0
    %3404 = vmatpush1.msra.mxu0 0.0
    %3405 = vmatprep.subr.mxu0 0.0
    %3406 = vmatpush1.msra.mxu0 0.0
    %3407 = vmatprep.subr.mxu0 0.0
    %3408 = vmatpush1.msra.mxu0 0.0
    %3409 = vmatprep.subr.mxu0 0.0
    %3410 = vmatpush1.msra.mxu0 0.0
    %3411 = vmatprep.subr.mxu0 0.0
    %3412 = vmatpush1.msra.mxu0 0.0
    %3413 = vmatprep.subr.mxu0 0.0
    %3414 = vmatpush1.msra.mxu0 0.0
    %3415 = vmatprep.subr.mxu0 0.0
    %3416 = vmatpush1.msra.mxu0 0.0
    %3417 = vmatprep.subr.mxu0 0.0
    %3418 = vmatpush1.msra.mxu0 0.0
    %3419 = vmatprep.subr.mxu0 0.0
    %3420 = vmatpush1.msra.mxu0 0.0
    %3421 = vmatprep.subr.mxu0 0.0
    %3422 = vmatpush1.msra.mxu0 0.0
    %3423 = vmatprep.subr.mxu0 0.0
    %3424 = vmatpush1.msra.mxu0 0.0
    %3425 = vmatprep.subr.mxu0 0.0
    %3426 = vmatpush1.msra.mxu0 0.0
    %3427 = vmatprep.subr.mxu0 0.0
    %3428 = vmatpush1.msra.mxu0 0.0
    %3429 = vmatprep.subr.mxu0 0.0
    %3430 = vmatpush1.msra.mxu0 0.0
    %3431 = vmatprep.subr.mxu0 0.0
    %3432 = vmatpush1.msra.mxu0 0.0
    %3433 = vmatprep.subr.mxu0 0.0
    %3434 = vmatpush1.msra.mxu0 0.0
    %3435 = vmatprep.subr.mxu0 0.0
    %3436 = vmatpush1.msra.mxu0 0.0
    %3437 = vmatprep.mubr.f32.mxu0 0.0
    %3438 = vmatmul.mubr.f32.gmra.mrb[0].mxu0 %v3350
    %v3439 = vpop.f32.mrb[0].mxu0
    %v3440 = vadd.f32 %v3347, %v3439
    %v3441 = vpop.f32.mrb[0].mxu0
    %3442 = vmatprep.mubr.f32.mxu0 0.0
    %3443 = vmatmul.mubr.f32.gmra.mrb[0].mxu0 %v3353
    %v3444 = vpop.f32.mrb[0].mxu0
    %v3445 = vadd.f32 %v3347, %v3444
    %v3446 = vpop.f32.mrb[0].mxu0
    %3447 = vmatprep.mubr.f32.mxu0 0.0
    %3448 = vmatmul.mubr.f32.gmra.mrb[0].mxu0 %v3356
    %v3449 = vpop.f32.mrb[0].mxu0
    %v3450 = vadd.f32 %v3347, %v3449
    %v3451 = vpop.f32.mrb[0].mxu0
    %3452 = vmatprep.mubr.f32.mxu0 0.0
    %3453 = vmatmul.mubr.f32.gmra.mrb[0].mxu0 %v3359
    %v3454 = vpop.f32.mrb[0].mxu0
    %v3455 = vadd.f32 %v3347, %v3454
    %v3456 = vpop.f32.mrb[0].mxu0
    %3457 = vmatprep.mubr.f32.mxu0 0.0
    %3458 = vmatmul.mubr.f32.gmra.mrb[0].mxu0 %v3362
    %v3459 = vpop.f32.mrb[0].mxu0
    %v3460 = vadd.f32 %v3347, %v3459
    %v3461 = vpop.f32.mrb[0].mxu0
    %3462 = vmatprep.mubr.f32.mxu0 0.0
    %3463 = vmatmul.mubr.f32.gmra.mrb[0].mxu0 %v3365
    %v3464 = vpop.f32.mrb[0].mxu0
    %v3465 = vadd.f32 %v3347, %v3464
    %v3466 = vpop.f32.mrb[0].mxu0
    %3467 = vmatprep.mubr.f32.mxu0 0.0
    %3468 = vmatmul.mubr.f32.gmra.mrb[0].mxu0 %v3368
    %v3469 = vpop.f32.mrb[0].mxu0
    %v3470 = vadd.f32 %v3347, %v3469
    %v3471 = vpop.f32.mrb[0].mxu0
    %3472 = vmatprep.mubr.f32.mxu0 0.0
    %3473 = vmatmul.mubr.f32.gmra.mrb[0].mxu0 %v3371
    %v3474 = vpop.f32.mrb[0].mxu0
    %v3475 = vadd.f32 %v3347, %v3474
    %v3476 = vpop.f32.mrb[0].mxu0
    %3477 = vdwg.mxu0
    %vm3478 = vcmask 130048
    %v3479 = vsel %vm3478, %v3440, -inf
    %3480 = vmax.xlane.f32.xlu0 %v3479
    %v3481 = vpop.xlane.xlu0 %3480
    %v3482 = vsel %vm3478, %v3445, -inf
    %3483 = vmax.xlane.f32.xlu0 %v3482
    %v3484 = vpop.xlane.xlu0 %3483
    %v3485 = vsel %vm3478, %v3450, -inf
    %3486 = vmax.xlane.f32.xlu0 %v3485
    %v3487 = vpop.xlane.xlu0 %3486
    %v3488 = vsel %vm3478, %v3455, -inf
    %3489 = vmax.xlane.f32.xlu0 %v3488
    %v3490 = vpop.xlane.xlu0 %3489
    %v3491 = vsel %vm3478, %v3460, -inf
    %3492 = vmax.xlane.f32.xlu0 %v3491
    %v3493 = vpop.xlane.xlu0 %3492
    %v3494 = vsel %vm3478, %v3465, -inf
    %3495 = vmax.xlane.f32.xlu0 %v3494
    %v3496 = vpop.xlane.xlu0 %3495
    %v3497 = vsel %vm3478, %v3470, -inf
    %3498 = vmax.xlane.f32.xlu0 %v3497
    %v3499 = vpop.xlane.xlu0 %3498
    %v3500 = vsel %vm3478, %v3475, -inf
    %3501 = vmax.xlane.f32.xlu0 %v3500
    %v3502 = vpop.xlane.xlu0 %3501
    %v3503 = vsub.f32 %v3440, %v3481
    %v3504 = vsub.f32 %v3445, %v3484
    %v3505 = vsub.f32 %v3450, %v3487
    %v3506 = vsub.f32 %v3455, %v3490
    %v3507 = vsub.f32 %v3460, %v3493
    %v3508 = vsub.f32 %v3465, %v3496
    %v3509 = vsub.f32 %v3470, %v3499
    %v3510 = vsub.f32 %v3475, %v3502
    %v3511 = vmul.f32 %v3503, 1.442695
    %v3512 = vpow.pop %v3511
    %v3513 = vmul.f32 %v3504, 1.442695
    %v3514 = vpow.pop %v3513
    %v3515 = vmul.f32 %v3505, 1.442695
    %v3516 = vpow.pop %v3515
    %v3517 = vmul.f32 %v3506, 1.442695
    %v3518 = vpow.pop %v3517
    %v3519 = vmul.f32 %v3507, 1.442695
    %v3520 = vpow.pop %v3519
    %v3521 = vmul.f32 %v3508, 1.442695
    %v3522 = vpow.pop %v3521
    %v3523 = vmul.f32 %v3509, 1.442695
    %v3524 = vpow.pop %v3523
    %v3525 = vmul.f32 %v3510, 1.442695
    %v3526 = vpow.pop %v3525
    %v3527 = vsel %vm3478, %v3512, 0.0
    %3528 = vadd.xlane.f32.xlu0 %v3527
    %v3529 = vpop.xlane.xlu0 %3528
    %v3530 = vsel %vm3478, %v3514, 0.0
    %3531 = vadd.xlane.f32.xlu0 %v3530
    %v3532 = vpop.xlane.xlu0 %3531
    %v3533 = vsel %vm3478, %v3516, 0.0
    %3534 = vadd.xlane.f32.xlu0 %v3533
    %v3535 = vpop.xlane.xlu0 %3534
    %v3536 = vsel %vm3478, %v3518, 0.0
    %3537 = vadd.xlane.f32.xlu0 %v3536
    %v3538 = vpop.xlane.xlu0 %3537
    %v3539 = vsel %vm3478, %v3520, 0.0
    %3540 = vadd.xlane.f32.xlu0 %v3539
    %v3541 = vpop.xlane.xlu0 %3540
    %v3542 = vsel %vm3478, %v3522, 0.0
    %3543 = vadd.xlane.f32.xlu0 %v3542
    %v3544 = vpop.xlane.xlu0 %3543
    %v3545 = vsel %vm3478, %v3524, 0.0
    %3546 = vadd.xlane.f32.xlu0 %v3545
    %v3547 = vpop.xlane.xlu0 %3546
    %v3548 = vsel %vm3478, %v3526, 0.0
    %3549 = vadd.xlane.f32.xlu0 %v3548
    %v3550 = vpop.xlane.xlu0 %3549
    %v3551 = vlog2.pop %v3529
    %v3552 = vmul.f32 %v3551, 0.6931472
    %v3553 = vlog2.pop %v3532
    %v3554 = vmul.f32 %v3553, 0.6931472
    %v3555 = vlog2.pop %v3535
    %v3556 = vmul.f32 %v3555, 0.6931472
    %v3557 = vlog2.pop %v3538
    %v3558 = vmul.f32 %v3557, 0.6931472
    %v3559 = vlog2.pop %v3541
    %v3560 = vmul.f32 %v3559, 0.6931472
    %v3561 = vlog2.pop %v3544
    %v3562 = vmul.f32 %v3561, 0.6931472
    %v3563 = vlog2.pop %v3547
    %v3564 = vmul.f32 %v3563, 0.6931472
    %v3565 = vlog2.pop %v3550
    %v3566 = vmul.f32 %v3565, 0.6931472
    %v3567 = vsub.f32 %v3503, %v3552
    %v3568 = vsub.f32 %v3504, %v3554
    %v3569 = vsub.f32 %v3505, %v3556
    %v3570 = vsub.f32 %v3506, %v3558
    %v3571 = vsub.f32 %v3507, %v3560
    %v3572 = vsub.f32 %v3508, %v3562
    %v3573 = vsub.f32 %v3509, %v3564
    %v3574 = vsub.f32 %v3510, %v3566
    %3575 = vst.msk [vmem:[#allocation8] sm:$0xff] %vm3478, %v3567
    %3576 = vst.msk [vmem:[#allocation8 + $0x8] sm:$0xff] %vm3478, %v3568
    %3577 = vst.msk [vmem:[#allocation8 + $0x10] sm:$0xff] %vm3478, %v3569
    %3578 = vst.msk [vmem:[#allocation8 + $0x18] sm:$0xff] %vm3478, %v3570
    %3579 = vst.msk [vmem:[#allocation8 + $0x20] sm:$0xff] %vm3478, %v3571
    %3580 = vst.msk [vmem:[#allocation8 + $0x28] sm:$0xff] %vm3478, %v3572
    %3581 = vst.msk [vmem:[#allocation8 + $0x30] sm:$0xff] %vm3478, %v3573
    %3582 = vst.msk [vmem:[#allocation8 + $0x38] sm:$0xff] %vm3478, %v3574
    // Predicated region
    $region38: #{tpu_custom_call.1} parent=1 // pred_check
      _
    $region39: #{tpu_custom_call.1} parent=1 // pred_check_branch
      %3584 = sbr.rel (0) target = $region41
    $region40: #{tpu_custom_call.1} parent=1 // pred_region
      %s3586 = ssub.s32 1024, 1024
      %3587 = vsyncadd [#allocation7], %s3586
      %s3588 = sshll.u32 [#allocation8], 4
      %s3589 = int_to_ptr.vmem [resolvable:$true] %s3588
      %3594 = dma.vmem_to_hbm [thread:$0]  %s3589, 1024, %s7, [#allocation7], 128, 128, 8
    $region41: #{tpu_custom_call.1} parent=1 // pred_fallthru
      _
    // Predicated region
    $region42: #{tpu_custom_call.1} parent=1 // pred_check
      _
    $region43: #{tpu_custom_call.1} parent=1 // pred_check_branch
      %3596 = sbr.rel (0) target = $region45
    $region44: #{tpu_custom_call.1} parent=1 // pred_region
      %3597 = dma.done [#allocation7], 1024
    $region45: #{tpu_custom_call.1} parent=1 // pred_fallthru
      _
    %3598 = vsyncpa [#allocation6], 1
    %3599 = vsyncpa [#allocation7], 1

</llo_original>
